<compile_context>
chip_gen: v6e
topology: v6e:2x2x1
jax: 0.10.0
libtpu: 0.0.40
codegen_flags: <defaults>
</compile_context>

<pallas_src>
import math

import jax
import jax.numpy as jnp
from jax import lax
from jax.experimental import pallas as pl
from jax.experimental.pallas import tpu as pltpu

INPUT_SIZE = 4
HIDDEN = 48
N_ACTIONS = 2
Z_HIGH = 0.005
Z_LOW = 1.0

HPAD = 128                    # lane-aligned hidden width (one vreg lane span)
OUT_PAD = 128                 # lane-dense packed output width
PI_OFF = 0                    # columns [0:2)   -> pre_softmax_policy
VAL_OFF = N_ACTIONS           # column  [2:3)   -> value
V_OFF = N_ACTIONS + 1         # columns [3:51)  -> new v_t


def a2c_rollout_kernel(px_ref,     # (T, B, 2*HPAD)  x-side pre-activations (resident)
                       wk_ref,     # (HPAD, 2*HPAD)  [W^T | K^T], lane-aligned (resident)
                       head_ref,   # (HPAD, OUT_PAD) [pi_w^T | v_w^T | I | 0] (resident)
                       headb_ref,  # (1, OUT_PAD)    [pi_b | v_b | 0]         (resident)
                       vinit_ref,  # (B, HPAD)       padded initial hidden state
                       out_ref):   # (T, B, OUT_PAD) packed [pi | val | v_new | 0]
    T = out_ref.shape[0]
    wk = wk_ref[...]
    head = head_ref[...]
    headb = headb_ref[...]

    def step(t, v):
        # r_t = sigmoid(v_t); padded lanes contribute nothing (zero weight rows).
        r = jax.nn.sigmoid(v)                                           # (B, HPAD)
        # hx = [ W r + P x + b_v  |  K r + P_z x + b_z ]  (B, 2*HPAD), x-side from px.
        hx = jnp.dot(r, wk, preferred_element_type=jnp.float32) + px_ref[t]
        wv = hx[:, :HPAD]                                   # lane-aligned free slice
        z = (Z_HIGH - Z_LOW) * jax.nn.sigmoid(hx[:, HPAD:]) + Z_LOW
        v_new = (1.0 - z) * v + wv                                      # (B, HPAD)
        # One matmul + one unmasked 128-lane store: [pi | value | v_new | 0].
        out_ref[t] = (jnp.dot(v_new, head, preferred_element_type=jnp.float32)
                      + headb).astype(out_ref.dtype)
        return v_new

    lax.fori_loop(0, T, step, vinit_ref[...], unroll=True)


@jax.jit
def a2c_rollout(x_seq, v0, params):
    """Run T steps of the A2C forward (CB_GRU + pi/v heads) in one pallas_call.

    x_seq : (T, B, D) float32
    v0    : (B, H)    float32 initial hidden state
    returns (pi, value, v_seq): (T,B,n_actions), (T,B,1), (T,B,H)
    """
    T, B, D = x_seq.shape
    H = HIDDEN

    # ---- host-side packing (traced once per jit) ----------------------------
    # Input mask: zero rows >= H//2 of P (as in the PyTorch module).
    keep = (jnp.arange(H) < (H // 2)).astype(jnp.float32)[:, None]
    P_masked = params["P"] * keep

    # WK slab: W^T in lanes [0:H], K^T in lanes [HPAD:HPAD+H]; padded rows/cols 0.
    wk = jnp.zeros((HPAD, 2 * HPAD), jnp.float32)
    wk = wk.at[:H, :H].set(params["W"].T)
    wk = wk.at[:H, HPAD:HPAD + H].set(params["K"].T)

    # x-side contribution hoisted out of the recurrence (computed by XLA once):
    #   px[t] = x_t @ [P_masked^T | P_z^T] + [b_v | b_z]   (lane-aligned halves)
    ppz = jnp.zeros((D, 2 * HPAD), jnp.float32)
    ppz = ppz.at[:, :H].set(P_masked.T)
    ppz = ppz.at[:, HPAD:HPAD + H].set(params["P_z"].T)
    bvz = jnp.zeros((2 * HPAD,), jnp.float32)
    bvz = bvz.at[:H].set(params["b_v"])
    bvz = bvz.at[HPAD:HPAD + H].set(params["b_z"])
    px = jnp.einsum("tbd,dh->tbh", x_seq, ppz) + bvz                 # (T, B, 2*HPAD)

    # HEAD slab: pi_w^T, v_w^T and an identity block so one matmul produces the
    # packed lane-dense output [pi | value | v_new | 0].
    head = jnp.zeros((HPAD, OUT_PAD), jnp.float32)
    head = head.at[:H, PI_OFF:PI_OFF + N_ACTIONS].set(params["pi_w"].T)
    head = head.at[:H, VAL_OFF:VAL_OFF + 1].set(params["v_w"].T)
    head = head.at[:H, V_OFF:V_OFF + H].set(jnp.eye(H, dtype=jnp.float32))
    headb = jnp.zeros((1, OUT_PAD), jnp.float32)
    headb = headb.at[0, PI_OFF:PI_OFF + N_ACTIONS].set(params["pi_b"])
    headb = headb.at[0, VAL_OFF].set(params["v_b"][0])

    v0_pad = jnp.zeros((B, HPAD), jnp.float32).at[:, :H].set(v0)

    const2 = lambda i: (0, 0)
    const3 = lambda i: (0, 0, 0)

    out = pl.pallas_call(
        a2c_rollout_kernel,
        out_shape=jax.ShapeDtypeStruct((T, B, OUT_PAD), jnp.float32),
        grid_spec=pltpu.PrefetchScalarGridSpec(
            num_scalar_prefetch=0,
            grid=(1,),                                   # whole rollout in one step
            in_specs=[
                pl.BlockSpec((T, B, 2 * HPAD), const3),  # px (resident)
                pl.BlockSpec((HPAD, 2 * HPAD), const2),  # WK (resident)
                pl.BlockSpec((HPAD, OUT_PAD), const2),   # HEAD (resident)
                pl.BlockSpec((1, OUT_PAD), const2),      # head bias (resident)
                pl.BlockSpec((B, HPAD), const2),         # v0 padded (resident)
            ],
            out_specs=pl.BlockSpec((T, B, OUT_PAD), const3),
        ),
        compiler_params=pltpu.CompilerParams(
            dimension_semantics=("arbitrary",)),
    )(px, wk, head, headb, v0_pad)

    pi = out[:, :, PI_OFF:PI_OFF + N_ACTIONS]
    val = out[:, :, VAL_OFF:VAL_OFF + 1]
    v_seq = out[:, :, V_OFF:V_OFF + H]
    return pi, val, v_seq


def a2c_reference(x_seq, v0, params):
    """Pure-JAX reference mirroring the PyTorch column-vector math, rowwise."""
    H = HIDDEN
    mask = jnp.ones_like(params["P"]).at[H // 2:, :].set(0.0)
    P = params["P"] * mask

    def step(v, x):
        r = jax.nn.sigmoid(v)                                    # (B, H)
        z = (Z_HIGH - Z_LOW) * jax.nn.sigmoid(
            r @ params["K"].T + x @ params["P_z"].T + params["b_z"]) + Z_LOW
        v_new = (1.0 - z) * v + r @ params["W"].T + x @ P.T + params["b_v"]
        pi = v_new @ params["pi_w"].T + params["pi_b"]
        val = v_new @ params["v_w"].T + params["v_b"]
        return v_new, (pi, val, v_new)

    _, (pis, vals, vs) = jax.lax.scan(step, v0, x_seq)
    return pis, vals, vs


def init_params(key):
    bound = 1.0 / math.sqrt(HIDDEN)
    keys = jax.random.split(key, 10)

    def u(k, shape, b):
        return jax.random.uniform(k, shape, jnp.float32, minval=-b, maxval=b)

    return {
        # CB_GRU params, uniform(-1/sqrt(H), 1/sqrt(H)) as in the module __init__
        "W":   u(keys[0], (HIDDEN, HIDDEN), bound),
        "P":   u(keys[1], (HIDDEN, INPUT_SIZE), bound),
        "b_v": u(keys[2], (HIDDEN,), bound),
        "b_z": u(keys[3], (HIDDEN,), bound),
        "K":   u(keys[4], (HIDDEN, HIDDEN), bound),
        "P_z": u(keys[5], (HIDDEN, INPUT_SIZE), bound),
        # Linear heads
        "pi_w": u(keys[6], (N_ACTIONS, HIDDEN), bound),
        "pi_b": u(keys[7], (N_ACTIONS,), bound),
        "v_w":  u(keys[8], (1, HIDDEN), bound),
        "v_b":  u(keys[9], (1,), bound),
    }


if __name__ == "__main__":
    key = jax.random.PRNGKey(0)
    params = init_params(key)

    # Rollout of T steps for B batched environments. Each x row follows the
    # module's form_x layout: [reward, onehot(a==0), onehot(a==1), timestep].
    T, B = 16, 8
    kr, ka = jax.random.split(jax.random.fold_in(key, 1))
    rewards = jax.random.bernoulli(kr, 0.5, (T, B)).astype(jnp.float32)
    actions = jax.random.bernoulli(ka, 0.5, (T, B)).astype(jnp.float32)
    tsteps = jnp.broadcast_to(jnp.arange(1, T + 1, dtype=jnp.float32)[:, None], (T, B))
    x_seq = jnp.stack([rewards, 1.0 - actions, actions, tsteps], axis=-1)   # (T, B, 4)
    # first step matches the module's initial x = [[0, 1, 0, 1]]
    x_seq = x_seq.at[0].set(jnp.array([0.0, 1.0, 0.0, 1.0], dtype=jnp.float32))
    v0 = jnp.zeros((B, HIDDEN), dtype=jnp.float32)

    pi, val, v_seq = jax.block_until_ready(a2c_rollout(x_seq, v0, params))

    pi_ref, val_ref, v_ref = a2c_reference(x_seq, v0, params)
    assert jnp.allclose(pi, pi_ref, rtol=1e-4, atol=1e-5)
    assert jnp.allclose(val, val_ref, rtol=1e-4, atol=1e-5)
    assert jnp.allclose(v_seq, v_ref, rtol=1e-4, atol=1e-5)

    print("KERNEL_OK")
</pallas_src>

<mosaic_0001>
module attributes {stable_mosaic.version = 11 : i64} {
  func.func @a2c_rollout_kernel(%arg0: i32, %arg1: memref<16x8x256xf32, #tpu.memory_space<vmem>>, %arg2: memref<128x256xf32, #tpu.memory_space<vmem>>, %arg3: memref<128x128xf32, #tpu.memory_space<vmem>>, %arg4: memref<1x128xf32, #tpu.memory_space<vmem>>, %arg5: memref<8x128xf32, #tpu.memory_space<vmem>>, %arg6: memref<16x8x128xf32, #tpu.memory_space<vmem>>) attributes {dimension_semantics = [#tpu.dimension_semantics<arbitrary>], iteration_bounds = array<i64: 1>, scalar_prefetch = 0 : i64, scratch_operands = 0 : i64, tpu.core_type = #tpu.core_type<tc>, window_params = [{pipeline_mode = #tpu.pipeline_mode<synchronous>, transform_indices = @transform_0, window_bounds = array<i64: 16, 8, 256>}, {pipeline_mode = #tpu.pipeline_mode<synchronous>, transform_indices = @transform_1, window_bounds = array<i64: 128, 256>}, {pipeline_mode = #tpu.pipeline_mode<synchronous>, transform_indices = @transform_2, window_bounds = array<i64: 128, 128>}, {pipeline_mode = #tpu.pipeline_mode<synchronous>, transform_indices = @transform_3, window_bounds = array<i64: 1, 128>}, {pipeline_mode = #tpu.pipeline_mode<synchronous>, transform_indices = @transform_4, window_bounds = array<i64: 8, 128>}, {pipeline_mode = #tpu.pipeline_mode<synchronous>, transform_indices = @transform_5, window_bounds = array<i64: 16, 8, 128>}]} {
    %c0 = arith.constant 0 : index
    %c0_0 = arith.constant 0 : index
    %0 = vector.load %arg2[%c0, %c0_0] : memref<128x256xf32, #tpu.memory_space<vmem>>, vector<128x256xf32>
    %c0_1 = arith.constant 0 : index
    %c0_2 = arith.constant 0 : index
    %1 = vector.load %arg3[%c0_1, %c0_2] : memref<128x128xf32, #tpu.memory_space<vmem>>, vector<128x128xf32>
    %c0_3 = arith.constant 0 : index
    %c0_4 = arith.constant 0 : index
    %2 = vector.load %arg4[%c0_3, %c0_4] : memref<1x128xf32, #tpu.memory_space<vmem>>, vector<1x128xf32>
    %c0_5 = arith.constant 0 : index
    %c0_6 = arith.constant 0 : index
    %3 = vector.load %arg5[%c0_5, %c0_6] : memref<8x128xf32, #tpu.memory_space<vmem>>, vector<8x128xf32>
    %c0_i32 = arith.constant 0 : i32
    %4 = arith.negf %3 : vector<8x128xf32>
    %5 = math.exp %4 : vector<8x128xf32>
    %cst = arith.constant 1.000000e+00 : f32
    %6 = vector.broadcast %cst : f32 to vector<8x128xf32>
    %7 = arith.addf %6, %5 : vector<8x128xf32>
    %8 = arith.divf %6, %7 : vector<8x128xf32>
    %cst_7 = arith.constant dense<0.000000e+00> : vector<8x256xf32>
    %9 = tpu.matmul %8, %0, %cst_7 {dimension_numbers = #tpu.dot_dimension_numbers<[1], [0], [0], [1], [0, 0, 1, 1], [], []>} : vector<8x128xf32>, vector<128x256xf32>, vector<8x256xf32> -> vector<8x256xf32>
    %10 = arith.index_cast %c0_i32 : i32 to index
    %c0_8 = arith.constant 0 : index
    %c0_9 = arith.constant 0 : index
    %11 = vector.load %arg1[%10, %c0_8, %c0_9] : memref<16x8x256xf32, #tpu.memory_space<vmem>>, vector<1x8x256xf32>
    %12 = vector.shape_cast %11 : vector<1x8x256xf32> to vector<8x256xf32>
    %13 = arith.addf %9, %12 : vector<8x256xf32>
    %14 = vector.extract_strided_slice %13 {offsets = [0, 0], sizes = [8, 128], strides = [1, 1]} : vector<8x256xf32> to vector<8x128xf32>
    %15 = vector.extract_strided_slice %13 {offsets = [0, 128], sizes = [8, 128], strides = [1, 1]} : vector<8x256xf32> to vector<8x128xf32>
    %16 = arith.negf %15 : vector<8x128xf32>
    %17 = math.exp %16 : vector<8x128xf32>
    %cst_10 = arith.constant 1.000000e+00 : f32
    %18 = vector.broadcast %cst_10 : f32 to vector<8x128xf32>
    %19 = arith.addf %18, %17 : vector<8x128xf32>
    %20 = arith.divf %18, %19 : vector<8x128xf32>
    %cst_11 = arith.constant -9.950000e-01 : f32
    %21 = vector.broadcast %cst_11 : f32 to vector<8x128xf32>
    %22 = arith.mulf %21, %20 : vector<8x128xf32>
    %cst_12 = arith.constant 1.000000e+00 : f32
    %23 = vector.broadcast %cst_12 : f32 to vector<8x128xf32>
    %24 = arith.addf %22, %23 : vector<8x128xf32>
    %cst_13 = arith.constant 1.000000e+00 : f32
    %25 = vector.broadcast %cst_13 : f32 to vector<8x128xf32>
    %26 = arith.subf %25, %24 : vector<8x128xf32>
    %27 = arith.mulf %26, %3 : vector<8x128xf32>
    %28 = arith.addf %27, %14 : vector<8x128xf32>
    %cst_14 = arith.constant dense<0.000000e+00> : vector<8x128xf32>
    %29 = tpu.matmul %28, %1, %cst_14 {dimension_numbers = #tpu.dot_dimension_numbers<[1], [0], [0], [1], [0, 0, 1, 1], [], []>} : vector<8x128xf32>, vector<128x128xf32>, vector<8x128xf32> -> vector<8x128xf32>
    %30 = vector.broadcast %2 : vector<1x128xf32> to vector<8x128xf32>
    %31 = arith.addf %29, %30 : vector<8x128xf32>
    %32 = arith.index_cast %c0_i32 : i32 to index
    %c0_15 = arith.constant 0 : index
    %c0_16 = arith.constant 0 : index
    %33 = vector.load %arg6[%32, %c0_15, %c0_16] : memref<16x8x128xf32, #tpu.memory_space<vmem>>, vector<1x8x128xf32>
    %34 = vector.shape_cast %33 : vector<1x8x128xf32> to vector<8x128xf32>
    %35 = vector.shape_cast %31 : vector<8x128xf32> to vector<1x8x128xf32>
    tpu.vector_store %arg6[%32, %c0_15, %c0_16], %35 {strides = array<i32>} : memref<16x8x128xf32, #tpu.memory_space<vmem>>, vector<1x8x128xf32>,
    %c1_i32 = arith.constant 1 : i32
    %36 = arith.negf %28 : vector<8x128xf32>
    %37 = math.exp %36 : vector<8x128xf32>
    %cst_17 = arith.constant 1.000000e+00 : f32
    %38 = vector.broadcast %cst_17 : f32 to vector<8x128xf32>
    %39 = arith.addf %38, %37 : vector<8x128xf32>
    %40 = arith.divf %38, %39 : vector<8x128xf32>
    %cst_18 = arith.constant dense<0.000000e+00> : vector<8x256xf32>
    %41 = tpu.matmul %40, %0, %cst_18 {dimension_numbers = #tpu.dot_dimension_numbers<[1], [0], [0], [1], [0, 0, 1, 1], [], []>} : vector<8x128xf32>, vector<128x256xf32>, vector<8x256xf32> -> vector<8x256xf32>
    %42 = arith.index_cast %c1_i32 : i32 to index
    %c0_19 = arith.constant 0 : index
    %c0_20 = arith.constant 0 : index
    %43 = vector.load %arg1[%42, %c0_19, %c0_20] : memref<16x8x256xf32, #tpu.memory_space<vmem>>, vector<1x8x256xf32>
    %44 = vector.shape_cast %43 : vector<1x8x256xf32> to vector<8x256xf32>
    %45 = arith.addf %41, %44 : vector<8x256xf32>
    %46 = vector.extract_strided_slice %45 {offsets = [0, 0], sizes = [8, 128], strides = [1, 1]} : vector<8x256xf32> to vector<8x128xf32>
    %47 = vector.extract_strided_slice %45 {offsets = [0, 128], sizes = [8, 128], strides = [1, 1]} : vector<8x256xf32> to vector<8x128xf32>
    %48 = arith.negf %47 : vector<8x128xf32>
    %49 = math.exp %48 : vector<8x128xf32>
    %cst_21 = arith.constant 1.000000e+00 : f32
    %50 = vector.broadcast %cst_21 : f32 to vector<8x128xf32>
    %51 = arith.addf %50, %49 : vector<8x128xf32>
    %52 = arith.divf %50, %51 : vector<8x128xf32>
    %cst_22 = arith.constant -9.950000e-01 : f32
    %53 = vector.broadcast %cst_22 : f32 to vector<8x128xf32>
    %54 = arith.mulf %53, %52 : vector<8x128xf32>
    %cst_23 = arith.constant 1.000000e+00 : f32
    %55 = vector.broadcast %cst_23 : f32 to vector<8x128xf32>
    %56 = arith.addf %54, %55 : vector<8x128xf32>
    %cst_24 = arith.constant 1.000000e+00 : f32
    %57 = vector.broadcast %cst_24 : f32 to vector<8x128xf32>
    %58 = arith.subf %57, %56 : vector<8x128xf32>
    %59 = arith.mulf %58, %28 : vector<8x128xf32>
    %60 = arith.addf %59, %46 : vector<8x128xf32>
    %cst_25 = arith.constant dense<0.000000e+00> : vector<8x128xf32>
    %61 = tpu.matmul %60, %1, %cst_25 {dimension_numbers = #tpu.dot_dimension_numbers<[1], [0], [0], [1], [0, 0, 1, 1], [], []>} : vector<8x128xf32>, vector<128x128xf32>, vector<8x128xf32> -> vector<8x128xf32>
    %62 = vector.broadcast %2 : vector<1x128xf32> to vector<8x128xf32>
    %63 = arith.addf %61, %62 : vector<8x128xf32>
    %64 = arith.index_cast %c1_i32 : i32 to index
    %c0_26 = arith.constant 0 : index
    %c0_27 = arith.constant 0 : index
    %65 = vector.load %arg6[%64, %c0_26, %c0_27] : memref<16x8x128xf32, #tpu.memory_space<vmem>>, vector<1x8x128xf32>
    %66 = vector.shape_cast %65 : vector<1x8x128xf32> to vector<8x128xf32>
    %67 = vector.shape_cast %63 : vector<8x128xf32> to vector<1x8x128xf32>
    tpu.vector_store %arg6[%64, %c0_26, %c0_27], %67 {strides = array<i32>} : memref<16x8x128xf32, #tpu.memory_space<vmem>>, vector<1x8x128xf32>,
    %c2_i32 = arith.constant 2 : i32
    %68 = arith.negf %60 : vector<8x128xf32>
    %69 = math.exp %68 : vector<8x128xf32>
    %cst_28 = arith.constant 1.000000e+00 : f32
    %70 = vector.broadcast %cst_28 : f32 to vector<8x128xf32>
    %71 = arith.addf %70, %69 : vector<8x128xf32>
    %72 = arith.divf %70, %71 : vector<8x128xf32>
    %cst_29 = arith.constant dense<0.000000e+00> : vector<8x256xf32>
    %73 = tpu.matmul %72, %0, %cst_29 {dimension_numbers = #tpu.dot_dimension_numbers<[1], [0], [0], [1], [0, 0, 1, 1], [], []>} : vector<8x128xf32>, vector<128x256xf32>, vector<8x256xf32> -> vector<8x256xf32>
    %74 = arith.index_cast %c2_i32 : i32 to index
    %c0_30 = arith.constant 0 : index
    %c0_31 = arith.constant 0 : index
    %75 = vector.load %arg1[%74, %c0_30, %c0_31] : memref<16x8x256xf32, #tpu.memory_space<vmem>>, vector<1x8x256xf32>
    %76 = vector.shape_cast %75 : vector<1x8x256xf32> to vector<8x256xf32>
    %77 = arith.addf %73, %76 : vector<8x256xf32>
    %78 = vector.extract_strided_slice %77 {offsets = [0, 0], sizes = [8, 128], strides = [1, 1]} : vector<8x256xf32> to vector<8x128xf32>
    %79 = vector.extract_strided_slice %77 {offsets = [0, 128], sizes = [8, 128], strides = [1, 1]} : vector<8x256xf32> to vector<8x128xf32>
    %80 = arith.negf %79 : vector<8x128xf32>
    %81 = math.exp %80 : vector<8x128xf32>
    %cst_32 = arith.constant 1.000000e+00 : f32
    %82 = vector.broadcast %cst_32 : f32 to vector<8x128xf32>
    %83 = arith.addf %82, %81 : vector<8x128xf32>
    %84 = arith.divf %82, %83 : vector<8x128xf32>
    %cst_33 = arith.constant -9.950000e-01 : f32
    %85 = vector.broadcast %cst_33 : f32 to vector<8x128xf32>
    %86 = arith.mulf %85, %84 : vector<8x128xf32>
    %cst_34 = arith.constant 1.000000e+00 : f32
    %87 = vector.broadcast %cst_34 : f32 to vector<8x128xf32>
    %88 = arith.addf %86, %87 : vector<8x128xf32>
    %cst_35 = arith.constant 1.000000e+00 : f32
    %89 = vector.broadcast %cst_35 : f32 to vector<8x128xf32>
    %90 = arith.subf %89, %88 : vector<8x128xf32>
    %91 = arith.mulf %90, %60 : vector<8x128xf32>
    %92 = arith.addf %91, %78 : vector<8x128xf32>
    %cst_36 = arith.constant dense<0.000000e+00> : vector<8x128xf32>
    %93 = tpu.matmul %92, %1, %cst_36 {dimension_numbers = #tpu.dot_dimension_numbers<[1], [0], [0], [1], [0, 0, 1, 1], [], []>} : vector<8x128xf32>, vector<128x128xf32>, vector<8x128xf32> -> vector<8x128xf32>
    %94 = vector.broadcast %2 : vector<1x128xf32> to vector<8x128xf32>
    %95 = arith.addf %93, %94 : vector<8x128xf32>
    %96 = arith.index_cast %c2_i32 : i32 to index
    %c0_37 = arith.constant 0 : index
    %c0_38 = arith.constant 0 : index
    %97 = vector.load %arg6[%96, %c0_37, %c0_38] : memref<16x8x128xf32, #tpu.memory_space<vmem>>, vector<1x8x128xf32>
    %98 = vector.shape_cast %97 : vector<1x8x128xf32> to vector<8x128xf32>
    %99 = vector.shape_cast %95 : vector<8x128xf32> to vector<1x8x128xf32>
    tpu.vector_store %arg6[%96, %c0_37, %c0_38], %99 {strides = array<i32>} : memref<16x8x128xf32, #tpu.memory_space<vmem>>, vector<1x8x128xf32>,
    %c3_i32 = arith.constant 3 : i32
    %100 = arith.negf %92 : vector<8x128xf32>
    %101 = math.exp %100 : vector<8x128xf32>
    %cst_39 = arith.constant 1.000000e+00 : f32
    %102 = vector.broadcast %cst_39 : f32 to vector<8x128xf32>
    %103 = arith.addf %102, %101 : vector<8x128xf32>
    %104 = arith.divf %102, %103 : vector<8x128xf32>
    %cst_40 = arith.constant dense<0.000000e+00> : vector<8x256xf32>
    %105 = tpu.matmul %104, %0, %cst_40 {dimension_numbers = #tpu.dot_dimension_numbers<[1], [0], [0], [1], [0, 0, 1, 1], [], []>} : vector<8x128xf32>, vector<128x256xf32>, vector<8x256xf32> -> vector<8x256xf32>
    %106 = arith.index_cast %c3_i32 : i32 to index
    %c0_41 = arith.constant 0 : index
    %c0_42 = arith.constant 0 : index
    %107 = vector.load %arg1[%106, %c0_41, %c0_42] : memref<16x8x256xf32, #tpu.memory_space<vmem>>, vector<1x8x256xf32>
    %108 = vector.shape_cast %107 : vector<1x8x256xf32> to vector<8x256xf32>
    %109 = arith.addf %105, %108 : vector<8x256xf32>
    %110 = vector.extract_strided_slice %109 {offsets = [0, 0], sizes = [8, 128], strides = [1, 1]} : vector<8x256xf32> to vector<8x128xf32>
    %111 = vector.extract_strided_slice %109 {offsets = [0, 128], sizes = [8, 128], strides = [1, 1]} : vector<8x256xf32> to vector<8x128xf32>
    %112 = arith.negf %111 : vector<8x128xf32>
    %113 = math.exp %112 : vector<8x128xf32>
    %cst_43 = arith.constant 1.000000e+00 : f32
    %114 = vector.broadcast %cst_43 : f32 to vector<8x128xf32>
    %115 = arith.addf %114, %113 : vector<8x128xf32>
    %116 = arith.divf %114, %115 : vector<8x128xf32>
    %cst_44 = arith.constant -9.950000e-01 : f32
    %117 = vector.broadcast %cst_44 : f32 to vector<8x128xf32>
    %118 = arith.mulf %117, %116 : vector<8x128xf32>
    %cst_45 = arith.constant 1.000000e+00 : f32
    %119 = vector.broadcast %cst_45 : f32 to vector<8x128xf32>
    %120 = arith.addf %118, %119 : vector<8x128xf32>
    %cst_46 = arith.constant 1.000000e+00 : f32
    %121 = vector.broadcast %cst_46 : f32 to vector<8x128xf32>
    %122 = arith.subf %121, %120 : vector<8x128xf32>
    %123 = arith.mulf %122, %92 : vector<8x128xf32>
    %124 = arith.addf %123, %110 : vector<8x128xf32>
    %cst_47 = arith.constant dense<0.000000e+00> : vector<8x128xf32>
    %125 = tpu.matmul %124, %1, %cst_47 {dimension_numbers = #tpu.dot_dimension_numbers<[1], [0], [0], [1], [0, 0, 1, 1], [], []>} : vector<8x128xf32>, vector<128x128xf32>, vector<8x128xf32> -> vector<8x128xf32>
    %126 = vector.broadcast %2 : vector<1x128xf32> to vector<8x128xf32>
    %127 = arith.addf %125, %126 : vector<8x128xf32>
    %128 = arith.index_cast %c3_i32 : i32 to index
    %c0_48 = arith.constant 0 : index
    %c0_49 = arith.constant 0 : index
    %129 = vector.load %arg6[%128, %c0_48, %c0_49] : memref<16x8x128xf32, #tpu.memory_space<vmem>>, vector<1x8x128xf32>
    %130 = vector.shape_cast %129 : vector<1x8x128xf32> to vector<8x128xf32>
    %131 = vector.shape_cast %127 : vector<8x128xf32> to vector<1x8x128xf32>
    tpu.vector_store %arg6[%128, %c0_48, %c0_49], %131 {strides = array<i32>} : memref<16x8x128xf32, #tpu.memory_space<vmem>>, vector<1x8x128xf32>,
    %c4_i32 = arith.constant 4 : i32
    %132 = arith.negf %124 : vector<8x128xf32>
    %133 = math.exp %132 : vector<8x128xf32>
    %cst_50 = arith.constant 1.000000e+00 : f32
    %134 = vector.broadcast %cst_50 : f32 to vector<8x128xf32>
    %135 = arith.addf %134, %133 : vector<8x128xf32>
    %136 = arith.divf %134, %135 : vector<8x128xf32>
    %cst_51 = arith.constant dense<0.000000e+00> : vector<8x256xf32>
    %137 = tpu.matmul %136, %0, %cst_51 {dimension_numbers = #tpu.dot_dimension_numbers<[1], [0], [0], [1], [0, 0, 1, 1], [], []>} : vector<8x128xf32>, vector<128x256xf32>, vector<8x256xf32> -> vector<8x256xf32>
    %138 = arith.index_cast %c4_i32 : i32 to index
    %c0_52 = arith.constant 0 : index
    %c0_53 = arith.constant 0 : index
    %139 = vector.load %arg1[%138, %c0_52, %c0_53] : memref<16x8x256xf32, #tpu.memory_space<vmem>>, vector<1x8x256xf32>
    %140 = vector.shape_cast %139 : vector<1x8x256xf32> to vector<8x256xf32>
    %141 = arith.addf %137, %140 : vector<8x256xf32>
    %142 = vector.extract_strided_slice %141 {offsets = [0, 0], sizes = [8, 128], strides = [1, 1]} : vector<8x256xf32> to vector<8x128xf32>
    %143 = vector.extract_strided_slice %141 {offsets = [0, 128], sizes = [8, 128], strides = [1, 1]} : vector<8x256xf32> to vector<8x128xf32>
    %144 = arith.negf %143 : vector<8x128xf32>
    %145 = math.exp %144 : vector<8x128xf32>
    %cst_54 = arith.constant 1.000000e+00 : f32
    %146 = vector.broadcast %cst_54 : f32 to vector<8x128xf32>
    %147 = arith.addf %146, %145 : vector<8x128xf32>
    %148 = arith.divf %146, %147 : vector<8x128xf32>
    %cst_55 = arith.constant -9.950000e-01 : f32
    %149 = vector.broadcast %cst_55 : f32 to vector<8x128xf32>
    %150 = arith.mulf %149, %148 : vector<8x128xf32>
    %cst_56 = arith.constant 1.000000e+00 : f32
    %151 = vector.broadcast %cst_56 : f32 to vector<8x128xf32>
    %152 = arith.addf %150, %151 : vector<8x128xf32>
    %cst_57 = arith.constant 1.000000e+00 : f32
    %153 = vector.broadcast %cst_57 : f32 to vector<8x128xf32>
    %154 = arith.subf %153, %152 : vector<8x128xf32>
    %155 = arith.mulf %154, %124 : vector<8x128xf32>
    %156 = arith.addf %155, %142 : vector<8x128xf32>
    %cst_58 = arith.constant dense<0.000000e+00> : vector<8x128xf32>
    %157 = tpu.matmul %156, %1, %cst_58 {dimension_numbers = #tpu.dot_dimension_numbers<[1], [0], [0], [1], [0, 0, 1, 1], [], []>} : vector<8x128xf32>, vector<128x128xf32>, vector<8x128xf32> -> vector<8x128xf32>
    %158 = vector.broadcast %2 : vector<1x128xf32> to vector<8x128xf32>
    %159 = arith.addf %157, %158 : vector<8x128xf32>
    %160 = arith.index_cast %c4_i32 : i32 to index
    %c0_59 = arith.constant 0 : index
    %c0_60 = arith.constant 0 : index
    %161 = vector.load %arg6[%160, %c0_59, %c0_60] : memref<16x8x128xf32, #tpu.memory_space<vmem>>, vector<1x8x128xf32>
    %162 = vector.shape_cast %161 : vector<1x8x128xf32> to vector<8x128xf32>
    %163 = vector.shape_cast %159 : vector<8x128xf32> to vector<1x8x128xf32>
    tpu.vector_store %arg6[%160, %c0_59, %c0_60], %163 {strides = array<i32>} : memref<16x8x128xf32, #tpu.memory_space<vmem>>, vector<1x8x128xf32>,
    %c5_i32 = arith.constant 5 : i32
    %164 = arith.negf %156 : vector<8x128xf32>
    %165 = math.exp %164 : vector<8x128xf32>
    %cst_61 = arith.constant 1.000000e+00 : f32
    %166 = vector.broadcast %cst_61 : f32 to vector<8x128xf32>
    %167 = arith.addf %166, %165 : vector<8x128xf32>
    %168 = arith.divf %166, %167 : vector<8x128xf32>
    %cst_62 = arith.constant dense<0.000000e+00> : vector<8x256xf32>
    %169 = tpu.matmul %168, %0, %cst_62 {dimension_numbers = #tpu.dot_dimension_numbers<[1], [0], [0], [1], [0, 0, 1, 1], [], []>} : vector<8x128xf32>, vector<128x256xf32>, vector<8x256xf32> -> vector<8x256xf32>
    %170 = arith.index_cast %c5_i32 : i32 to index
    %c0_63 = arith.constant 0 : index
    %c0_64 = arith.constant 0 : index
    %171 = vector.load %arg1[%170, %c0_63, %c0_64] : memref<16x8x256xf32, #tpu.memory_space<vmem>>, vector<1x8x256xf32>
    %172 = vector.shape_cast %171 : vector<1x8x256xf32> to vector<8x256xf32>
    %173 = arith.addf %169, %172 : vector<8x256xf32>
    %174 = vector.extract_strided_slice %173 {offsets = [0, 0], sizes = [8, 128], strides = [1, 1]} : vector<8x256xf32> to vector<8x128xf32>
    %175 = vector.extract_strided_slice %173 {offsets = [0, 128], sizes = [8, 128], strides = [1, 1]} : vector<8x256xf32> to vector<8x128xf32>
    %176 = arith.negf %175 : vector<8x128xf32>
    %177 = math.exp %176 : vector<8x128xf32>
    %cst_65 = arith.constant 1.000000e+00 : f32
    %178 = vector.broadcast %cst_65 : f32 to vector<8x128xf32>
    %179 = arith.addf %178, %177 : vector<8x128xf32>
    %180 = arith.divf %178, %179 : vector<8x128xf32>
    %cst_66 = arith.constant -9.950000e-01 : f32
    %181 = vector.broadcast %cst_66 : f32 to vector<8x128xf32>
    %182 = arith.mulf %181, %180 : vector<8x128xf32>
    %cst_67 = arith.constant 1.000000e+00 : f32
    %183 = vector.broadcast %cst_67 : f32 to vector<8x128xf32>
    %184 = arith.addf %182, %183 : vector<8x128xf32>
    %cst_68 = arith.constant 1.000000e+00 : f32
    %185 = vector.broadcast %cst_68 : f32 to vector<8x128xf32>
    %186 = arith.subf %185, %184 : vector<8x128xf32>
    %187 = arith.mulf %186, %156 : vector<8x128xf32>
    %188 = arith.addf %187, %174 : vector<8x128xf32>
    %cst_69 = arith.constant dense<0.000000e+00> : vector<8x128xf32>
    %189 = tpu.matmul %188, %1, %cst_69 {dimension_numbers = #tpu.dot_dimension_numbers<[1], [0], [0], [1], [0, 0, 1, 1], [], []>} : vector<8x128xf32>, vector<128x128xf32>, vector<8x128xf32> -> vector<8x128xf32>
    %190 = vector.broadcast %2 : vector<1x128xf32> to vector<8x128xf32>
    %191 = arith.addf %189, %190 : vector<8x128xf32>
    %192 = arith.index_cast %c5_i32 : i32 to index
    %c0_70 = arith.constant 0 : index
    %c0_71 = arith.constant 0 : index
    %193 = vector.load %arg6[%192, %c0_70, %c0_71] : memref<16x8x128xf32, #tpu.memory_space<vmem>>, vector<1x8x128xf32>
    %194 = vector.shape_cast %193 : vector<1x8x128xf32> to vector<8x128xf32>
    %195 = vector.shape_cast %191 : vector<8x128xf32> to vector<1x8x128xf32>
    tpu.vector_store %arg6[%192, %c0_70, %c0_71], %195 {strides = array<i32>} : memref<16x8x128xf32, #tpu.memory_space<vmem>>, vector<1x8x128xf32>,
    %c6_i32 = arith.constant 6 : i32
    %196 = arith.negf %188 : vector<8x128xf32>
    %197 = math.exp %196 : vector<8x128xf32>
    %cst_72 = arith.constant 1.000000e+00 : f32
    %198 = vector.broadcast %cst_72 : f32 to vector<8x128xf32>
    %199 = arith.addf %198, %197 : vector<8x128xf32>
    %200 = arith.divf %198, %199 : vector<8x128xf32>
    %cst_73 = arith.constant dense<0.000000e+00> : vector<8x256xf32>
    %201 = tpu.matmul %200, %0, %cst_73 {dimension_numbers = #tpu.dot_dimension_numbers<[1], [0], [0], [1], [0, 0, 1, 1], [], []>} : vector<8x128xf32>, vector<128x256xf32>, vector<8x256xf32> -> vector<8x256xf32>
    %202 = arith.index_cast %c6_i32 : i32 to index
    %c0_74 = arith.constant 0 : index
    %c0_75 = arith.constant 0 : index
    %203 = vector.load %arg1[%202, %c0_74, %c0_75] : memref<16x8x256xf32, #tpu.memory_space<vmem>>, vector<1x8x256xf32>
    %204 = vector.shape_cast %203 : vector<1x8x256xf32> to vector<8x256xf32>
    %205 = arith.addf %201, %204 : vector<8x256xf32>
    %206 = vector.extract_strided_slice %205 {offsets = [0, 0], sizes = [8, 128], strides = [1, 1]} : vector<8x256xf32> to vector<8x128xf32>
    %207 = vector.extract_strided_slice %205 {offsets = [0, 128], sizes = [8, 128], strides = [1, 1]} : vector<8x256xf32> to vector<8x128xf32>
    %208 = arith.negf %207 : vector<8x128xf32>
    %209 = math.exp %208 : vector<8x128xf32>
    %cst_76 = arith.constant 1.000000e+00 : f32
    %210 = vector.broadcast %cst_76 : f32 to vector<8x128xf32>
    %211 = arith.addf %210, %209 : vector<8x128xf32>
    %212 = arith.divf %210, %211 : vector<8x128xf32>
    %cst_77 = arith.constant -9.950000e-01 : f32
    %213 = vector.broadcast %cst_77 : f32 to vector<8x128xf32>
    %214 = arith.mulf %213, %212 : vector<8x128xf32>
    %cst_78 = arith.constant 1.000000e+00 : f32
    %215 = vector.broadcast %cst_78 : f32 to vector<8x128xf32>
    %216 = arith.addf %214, %215 : vector<8x128xf32>
    %cst_79 = arith.constant 1.000000e+00 : f32
    %217 = vector.broadcast %cst_79 : f32 to vector<8x128xf32>
    %218 = arith.subf %217, %216 : vector<8x128xf32>
    %219 = arith.mulf %218, %188 : vector<8x128xf32>
    %220 = arith.addf %219, %206 : vector<8x128xf32>
    %cst_80 = arith.constant dense<0.000000e+00> : vector<8x128xf32>
    %221 = tpu.matmul %220, %1, %cst_80 {dimension_numbers = #tpu.dot_dimension_numbers<[1], [0], [0], [1], [0, 0, 1, 1], [], []>} : vector<8x128xf32>, vector<128x128xf32>, vector<8x128xf32> -> vector<8x128xf32>
    %222 = vector.broadcast %2 : vector<1x128xf32> to vector<8x128xf32>
    %223 = arith.addf %221, %222 : vector<8x128xf32>
    %224 = arith.index_cast %c6_i32 : i32 to index
    %c0_81 = arith.constant 0 : index
    %c0_82 = arith.constant 0 : index
    %225 = vector.load %arg6[%224, %c0_81, %c0_82] : memref<16x8x128xf32, #tpu.memory_space<vmem>>, vector<1x8x128xf32>
    %226 = vector.shape_cast %225 : vector<1x8x128xf32> to vector<8x128xf32>
    %227 = vector.shape_cast %223 : vector<8x128xf32> to vector<1x8x128xf32>
    tpu.vector_store %arg6[%224, %c0_81, %c0_82], %227 {strides = array<i32>} : memref<16x8x128xf32, #tpu.memory_space<vmem>>, vector<1x8x128xf32>,
    %c7_i32 = arith.constant 7 : i32
    %228 = arith.negf %220 : vector<8x128xf32>
    %229 = math.exp %228 : vector<8x128xf32>
    %cst_83 = arith.constant 1.000000e+00 : f32
    %230 = vector.broadcast %cst_83 : f32 to vector<8x128xf32>
    %231 = arith.addf %230, %229 : vector<8x128xf32>
    %232 = arith.divf %230, %231 : vector<8x128xf32>
    %cst_84 = arith.constant dense<0.000000e+00> : vector<8x256xf32>
    %233 = tpu.matmul %232, %0, %cst_84 {dimension_numbers = #tpu.dot_dimension_numbers<[1], [0], [0], [1], [0, 0, 1, 1], [], []>} : vector<8x128xf32>, vector<128x256xf32>, vector<8x256xf32> -> vector<8x256xf32>
    %234 = arith.index_cast %c7_i32 : i32 to index
    %c0_85 = arith.constant 0 : index
    %c0_86 = arith.constant 0 : index
    %235 = vector.load %arg1[%234, %c0_85, %c0_86] : memref<16x8x256xf32, #tpu.memory_space<vmem>>, vector<1x8x256xf32>
    %236 = vector.shape_cast %235 : vector<1x8x256xf32> to vector<8x256xf32>
    %237 = arith.addf %233, %236 : vector<8x256xf32>
    %238 = vector.extract_strided_slice %237 {offsets = [0, 0], sizes = [8, 128], strides = [1, 1]} : vector<8x256xf32> to vector<8x128xf32>
    %239 = vector.extract_strided_slice %237 {offsets = [0, 128], sizes = [8, 128], strides = [1, 1]} : vector<8x256xf32> to vector<8x128xf32>
    %240 = arith.negf %239 : vector<8x128xf32>
    %241 = math.exp %240 : vector<8x128xf32>
    %cst_87 = arith.constant 1.000000e+00 : f32
    %242 = vector.broadcast %cst_87 : f32 to vector<8x128xf32>
    %243 = arith.addf %242, %241 : vector<8x128xf32>
    %244 = arith.divf %242, %243 : vector<8x128xf32>
    %cst_88 = arith.constant -9.950000e-01 : f32
    %245 = vector.broadcast %cst_88 : f32 to vector<8x128xf32>
    %246 = arith.mulf %245, %244 : vector<8x128xf32>
    %cst_89 = arith.constant 1.000000e+00 : f32
    %247 = vector.broadcast %cst_89 : f32 to vector<8x128xf32>
    %248 = arith.addf %246, %247 : vector<8x128xf32>
    %cst_90 = arith.constant 1.000000e+00 : f32
    %249 = vector.broadcast %cst_90 : f32 to vector<8x128xf32>
    %250 = arith.subf %249, %248 : vector<8x128xf32>
    %251 = arith.mulf %250, %220 : vector<8x128xf32>
    %252 = arith.addf %251, %238 : vector<8x128xf32>
    %cst_91 = arith.constant dense<0.000000e+00> : vector<8x128xf32>
    %253 = tpu.matmul %252, %1, %cst_91 {dimension_numbers = #tpu.dot_dimension_numbers<[1], [0], [0], [1], [0, 0, 1, 1], [], []>} : vector<8x128xf32>, vector<128x128xf32>, vector<8x128xf32> -> vector<8x128xf32>
    %254 = vector.broadcast %2 : vector<1x128xf32> to vector<8x128xf32>
    %255 = arith.addf %253, %254 : vector<8x128xf32>
    %256 = arith.index_cast %c7_i32 : i32 to index
    %c0_92 = arith.constant 0 : index
    %c0_93 = arith.constant 0 : index
    %257 = vector.load %arg6[%256, %c0_92, %c0_93] : memref<16x8x128xf32, #tpu.memory_space<vmem>>, vector<1x8x128xf32>
    %258 = vector.shape_cast %257 : vector<1x8x128xf32> to vector<8x128xf32>
    %259 = vector.shape_cast %255 : vector<8x128xf32> to vector<1x8x128xf32>
    tpu.vector_store %arg6[%256, %c0_92, %c0_93], %259 {strides = array<i32>} : memref<16x8x128xf32, #tpu.memory_space<vmem>>, vector<1x8x128xf32>,
    %c8_i32 = arith.constant 8 : i32
    %260 = arith.negf %252 : vector<8x128xf32>
    %261 = math.exp %260 : vector<8x128xf32>
    %cst_94 = arith.constant 1.000000e+00 : f32
    %262 = vector.broadcast %cst_94 : f32 to vector<8x128xf32>
    %263 = arith.addf %262, %261 : vector<8x128xf32>
    %264 = arith.divf %262, %263 : vector<8x128xf32>
    %cst_95 = arith.constant dense<0.000000e+00> : vector<8x256xf32>
    %265 = tpu.matmul %264, %0, %cst_95 {dimension_numbers = #tpu.dot_dimension_numbers<[1], [0], [0], [1], [0, 0, 1, 1], [], []>} : vector<8x128xf32>, vector<128x256xf32>, vector<8x256xf32> -> vector<8x256xf32>
    %266 = arith.index_cast %c8_i32 : i32 to index
    %c0_96 = arith.constant 0 : index
    %c0_97 = arith.constant 0 : index
    %267 = vector.load %arg1[%266, %c0_96, %c0_97] : memref<16x8x256xf32, #tpu.memory_space<vmem>>, vector<1x8x256xf32>
    %268 = vector.shape_cast %267 : vector<1x8x256xf32> to vector<8x256xf32>
    %269 = arith.addf %265, %268 : vector<8x256xf32>
    %270 = vector.extract_strided_slice %269 {offsets = [0, 0], sizes = [8, 128], strides = [1, 1]} : vector<8x256xf32> to vector<8x128xf32>
    %271 = vector.extract_strided_slice %269 {offsets = [0, 128], sizes = [8, 128], strides = [1, 1]} : vector<8x256xf32> to vector<8x128xf32>
    %272 = arith.negf %271 : vector<8x128xf32>
    %273 = math.exp %272 : vector<8x128xf32>
    %cst_98 = arith.constant 1.000000e+00 : f32
    %274 = vector.broadcast %cst_98 : f32 to vector<8x128xf32>
    %275 = arith.addf %274, %273 : vector<8x128xf32>
    %276 = arith.divf %274, %275 : vector<8x128xf32>
    %cst_99 = arith.constant -9.950000e-01 : f32
    %277 = vector.broadcast %cst_99 : f32 to vector<8x128xf32>
    %278 = arith.mulf %277, %276 : vector<8x128xf32>
    %cst_100 = arith.constant 1.000000e+00 : f32
    %279 = vector.broadcast %cst_100 : f32 to vector<8x128xf32>
    %280 = arith.addf %278, %279 : vector<8x128xf32>
    %cst_101 = arith.constant 1.000000e+00 : f32
    %281 = vector.broadcast %cst_101 : f32 to vector<8x128xf32>
    %282 = arith.subf %281, %280 : vector<8x128xf32>
    %283 = arith.mulf %282, %252 : vector<8x128xf32>
    %284 = arith.addf %283, %270 : vector<8x128xf32>
    %cst_102 = arith.constant dense<0.000000e+00> : vector<8x128xf32>
    %285 = tpu.matmul %284, %1, %cst_102 {dimension_numbers = #tpu.dot_dimension_numbers<[1], [0], [0], [1], [0, 0, 1, 1], [], []>} : vector<8x128xf32>, vector<128x128xf32>, vector<8x128xf32> -> vector<8x128xf32>
    %286 = vector.broadcast %2 : vector<1x128xf32> to vector<8x128xf32>
    %287 = arith.addf %285, %286 : vector<8x128xf32>
    %288 = arith.index_cast %c8_i32 : i32 to index
    %c0_103 = arith.constant 0 : index
    %c0_104 = arith.constant 0 : index
    %289 = vector.load %arg6[%288, %c0_103, %c0_104] : memref<16x8x128xf32, #tpu.memory_space<vmem>>, vector<1x8x128xf32>
    %290 = vector.shape_cast %289 : vector<1x8x128xf32> to vector<8x128xf32>
    %291 = vector.shape_cast %287 : vector<8x128xf32> to vector<1x8x128xf32>
    tpu.vector_store %arg6[%288, %c0_103, %c0_104], %291 {strides = array<i32>} : memref<16x8x128xf32, #tpu.memory_space<vmem>>, vector<1x8x128xf32>,
    %c9_i32 = arith.constant 9 : i32
    %292 = arith.negf %284 : vector<8x128xf32>
    %293 = math.exp %292 : vector<8x128xf32>
    %cst_105 = arith.constant 1.000000e+00 : f32
    %294 = vector.broadcast %cst_105 : f32 to vector<8x128xf32>
    %295 = arith.addf %294, %293 : vector<8x128xf32>
    %296 = arith.divf %294, %295 : vector<8x128xf32>
    %cst_106 = arith.constant dense<0.000000e+00> : vector<8x256xf32>
    %297 = tpu.matmul %296, %0, %cst_106 {dimension_numbers = #tpu.dot_dimension_numbers<[1], [0], [0], [1], [0, 0, 1, 1], [], []>} : vector<8x128xf32>, vector<128x256xf32>, vector<8x256xf32> -> vector<8x256xf32>
    %298 = arith.index_cast %c9_i32 : i32 to index
    %c0_107 = arith.constant 0 : index
    %c0_108 = arith.constant 0 : index
    %299 = vector.load %arg1[%298, %c0_107, %c0_108] : memref<16x8x256xf32, #tpu.memory_space<vmem>>, vector<1x8x256xf32>
    %300 = vector.shape_cast %299 : vector<1x8x256xf32> to vector<8x256xf32>
    %301 = arith.addf %297, %300 : vector<8x256xf32>
    %302 = vector.extract_strided_slice %301 {offsets = [0, 0], sizes = [8, 128], strides = [1, 1]} : vector<8x256xf32> to vector<8x128xf32>
    %303 = vector.extract_strided_slice %301 {offsets = [0, 128], sizes = [8, 128], strides = [1, 1]} : vector<8x256xf32> to vector<8x128xf32>
    %304 = arith.negf %303 : vector<8x128xf32>
    %305 = math.exp %304 : vector<8x128xf32>
    %cst_109 = arith.constant 1.000000e+00 : f32
    %306 = vector.broadcast %cst_109 : f32 to vector<8x128xf32>
    %307 = arith.addf %306, %305 : vector<8x128xf32>
    %308 = arith.divf %306, %307 : vector<8x128xf32>
    %cst_110 = arith.constant -9.950000e-01 : f32
    %309 = vector.broadcast %cst_110 : f32 to vector<8x128xf32>
    %310 = arith.mulf %309, %308 : vector<8x128xf32>
    %cst_111 = arith.constant 1.000000e+00 : f32
    %311 = vector.broadcast %cst_111 : f32 to vector<8x128xf32>
    %312 = arith.addf %310, %311 : vector<8x128xf32>
    %cst_112 = arith.constant 1.000000e+00 : f32
    %313 = vector.broadcast %cst_112 : f32 to vector<8x128xf32>
    %314 = arith.subf %313, %312 : vector<8x128xf32>
    %315 = arith.mulf %314, %284 : vector<8x128xf32>
    %316 = arith.addf %315, %302 : vector<8x128xf32>
    %cst_113 = arith.constant dense<0.000000e+00> : vector<8x128xf32>
    %317 = tpu.matmul %316, %1, %cst_113 {dimension_numbers = #tpu.dot_dimension_numbers<[1], [0], [0], [1], [0, 0, 1, 1], [], []>} : vector<8x128xf32>, vector<128x128xf32>, vector<8x128xf32> -> vector<8x128xf32>
    %318 = vector.broadcast %2 : vector<1x128xf32> to vector<8x128xf32>
    %319 = arith.addf %317, %318 : vector<8x128xf32>
    %320 = arith.index_cast %c9_i32 : i32 to index
    %c0_114 = arith.constant 0 : index
    %c0_115 = arith.constant 0 : index
    %321 = vector.load %arg6[%320, %c0_114, %c0_115] : memref<16x8x128xf32, #tpu.memory_space<vmem>>, vector<1x8x128xf32>
    %322 = vector.shape_cast %321 : vector<1x8x128xf32> to vector<8x128xf32>
    %323 = vector.shape_cast %319 : vector<8x128xf32> to vector<1x8x128xf32>
    tpu.vector_store %arg6[%320, %c0_114, %c0_115], %323 {strides = array<i32>} : memref<16x8x128xf32, #tpu.memory_space<vmem>>, vector<1x8x128xf32>,
    %c10_i32 = arith.constant 10 : i32
    %324 = arith.negf %316 : vector<8x128xf32>
    %325 = math.exp %324 : vector<8x128xf32>
    %cst_116 = arith.constant 1.000000e+00 : f32
    %326 = vector.broadcast %cst_116 : f32 to vector<8x128xf32>
    %327 = arith.addf %326, %325 : vector<8x128xf32>
    %328 = arith.divf %326, %327 : vector<8x128xf32>
    %cst_117 = arith.constant dense<0.000000e+00> : vector<8x256xf32>
    %329 = tpu.matmul %328, %0, %cst_117 {dimension_numbers = #tpu.dot_dimension_numbers<[1], [0], [0], [1], [0, 0, 1, 1], [], []>} : vector<8x128xf32>, vector<128x256xf32>, vector<8x256xf32> -> vector<8x256xf32>
    %330 = arith.index_cast %c10_i32 : i32 to index
    %c0_118 = arith.constant 0 : index
    %c0_119 = arith.constant 0 : index
    %331 = vector.load %arg1[%330, %c0_118, %c0_119] : memref<16x8x256xf32, #tpu.memory_space<vmem>>, vector<1x8x256xf32>
    %332 = vector.shape_cast %331 : vector<1x8x256xf32> to vector<8x256xf32>
    %333 = arith.addf %329, %332 : vector<8x256xf32>
    %334 = vector.extract_strided_slice %333 {offsets = [0, 0], sizes = [8, 128], strides = [1, 1]} : vector<8x256xf32> to vector<8x128xf32>
    %335 = vector.extract_strided_slice %333 {offsets = [0, 128], sizes = [8, 128], strides = [1, 1]} : vector<8x256xf32> to vector<8x128xf32>
    %336 = arith.negf %335 : vector<8x128xf32>
    %337 = math.exp %336 : vector<8x128xf32>
    %cst_120 = arith.constant 1.000000e+00 : f32
    %338 = vector.broadcast %cst_120 : f32 to vector<8x128xf32>
    %339 = arith.addf %338, %337 : vector<8x128xf32>
    %340 = arith.divf %338, %339 : vector<8x128xf32>
    %cst_121 = arith.constant -9.950000e-01 : f32
    %341 = vector.broadcast %cst_121 : f32 to vector<8x128xf32>
    %342 = arith.mulf %341, %340 : vector<8x128xf32>
    %cst_122 = arith.constant 1.000000e+00 : f32
    %343 = vector.broadcast %cst_122 : f32 to vector<8x128xf32>
    %344 = arith.addf %342, %343 : vector<8x128xf32>
    %cst_123 = arith.constant 1.000000e+00 : f32
    %345 = vector.broadcast %cst_123 : f32 to vector<8x128xf32>
    %346 = arith.subf %345, %344 : vector<8x128xf32>
    %347 = arith.mulf %346, %316 : vector<8x128xf32>
    %348 = arith.addf %347, %334 : vector<8x128xf32>
    %cst_124 = arith.constant dense<0.000000e+00> : vector<8x128xf32>
    %349 = tpu.matmul %348, %1, %cst_124 {dimension_numbers = #tpu.dot_dimension_numbers<[1], [0], [0], [1], [0, 0, 1, 1], [], []>} : vector<8x128xf32>, vector<128x128xf32>, vector<8x128xf32> -> vector<8x128xf32>
    %350 = vector.broadcast %2 : vector<1x128xf32> to vector<8x128xf32>
    %351 = arith.addf %349, %350 : vector<8x128xf32>
    %352 = arith.index_cast %c10_i32 : i32 to index
    %c0_125 = arith.constant 0 : index
    %c0_126 = arith.constant 0 : index
    %353 = vector.load %arg6[%352, %c0_125, %c0_126] : memref<16x8x128xf32, #tpu.memory_space<vmem>>, vector<1x8x128xf32>
    %354 = vector.shape_cast %353 : vector<1x8x128xf32> to vector<8x128xf32>
    %355 = vector.shape_cast %351 : vector<8x128xf32> to vector<1x8x128xf32>
    tpu.vector_store %arg6[%352, %c0_125, %c0_126], %355 {strides = array<i32>} : memref<16x8x128xf32, #tpu.memory_space<vmem>>, vector<1x8x128xf32>,
    %c11_i32 = arith.constant 11 : i32
    %356 = arith.negf %348 : vector<8x128xf32>
    %357 = math.exp %356 : vector<8x128xf32>
    %cst_127 = arith.constant 1.000000e+00 : f32
    %358 = vector.broadcast %cst_127 : f32 to vector<8x128xf32>
    %359 = arith.addf %358, %357 : vector<8x128xf32>
    %360 = arith.divf %358, %359 : vector<8x128xf32>
    %cst_128 = arith.constant dense<0.000000e+00> : vector<8x256xf32>
    %361 = tpu.matmul %360, %0, %cst_128 {dimension_numbers = #tpu.dot_dimension_numbers<[1], [0], [0], [1], [0, 0, 1, 1], [], []>} : vector<8x128xf32>, vector<128x256xf32>, vector<8x256xf32> -> vector<8x256xf32>
    %362 = arith.index_cast %c11_i32 : i32 to index
    %c0_129 = arith.constant 0 : index
    %c0_130 = arith.constant 0 : index
    %363 = vector.load %arg1[%362, %c0_129, %c0_130] : memref<16x8x256xf32, #tpu.memory_space<vmem>>, vector<1x8x256xf32>
    %364 = vector.shape_cast %363 : vector<1x8x256xf32> to vector<8x256xf32>
    %365 = arith.addf %361, %364 : vector<8x256xf32>
    %366 = vector.extract_strided_slice %365 {offsets = [0, 0], sizes = [8, 128], strides = [1, 1]} : vector<8x256xf32> to vector<8x128xf32>
    %367 = vector.extract_strided_slice %365 {offsets = [0, 128], sizes = [8, 128], strides = [1, 1]} : vector<8x256xf32> to vector<8x128xf32>
    %368 = arith.negf %367 : vector<8x128xf32>
    %369 = math.exp %368 : vector<8x128xf32>
    %cst_131 = arith.constant 1.000000e+00 : f32
    %370 = vector.broadcast %cst_131 : f32 to vector<8x128xf32>
    %371 = arith.addf %370, %369 : vector<8x128xf32>
    %372 = arith.divf %370, %371 : vector<8x128xf32>
    %cst_132 = arith.constant -9.950000e-01 : f32
    %373 = vector.broadcast %cst_132 : f32 to vector<8x128xf32>
    %374 = arith.mulf %373, %372 : vector<8x128xf32>
    %cst_133 = arith.constant 1.000000e+00 : f32
    %375 = vector.broadcast %cst_133 : f32 to vector<8x128xf32>
    %376 = arith.addf %374, %375 : vector<8x128xf32>
    %cst_134 = arith.constant 1.000000e+00 : f32
    %377 = vector.broadcast %cst_134 : f32 to vector<8x128xf32>
    %378 = arith.subf %377, %376 : vector<8x128xf32>
    %379 = arith.mulf %378, %348 : vector<8x128xf32>
    %380 = arith.addf %379, %366 : vector<8x128xf32>
    %cst_135 = arith.constant dense<0.000000e+00> : vector<8x128xf32>
    %381 = tpu.matmul %380, %1, %cst_135 {dimension_numbers = #tpu.dot_dimension_numbers<[1], [0], [0], [1], [0, 0, 1, 1], [], []>} : vector<8x128xf32>, vector<128x128xf32>, vector<8x128xf32> -> vector<8x128xf32>
    %382 = vector.broadcast %2 : vector<1x128xf32> to vector<8x128xf32>
    %383 = arith.addf %381, %382 : vector<8x128xf32>
    %384 = arith.index_cast %c11_i32 : i32 to index
    %c0_136 = arith.constant 0 : index
    %c0_137 = arith.constant 0 : index
    %385 = vector.load %arg6[%384, %c0_136, %c0_137] : memref<16x8x128xf32, #tpu.memory_space<vmem>>, vector<1x8x128xf32>
    %386 = vector.shape_cast %385 : vector<1x8x128xf32> to vector<8x128xf32>
    %387 = vector.shape_cast %383 : vector<8x128xf32> to vector<1x8x128xf32>
    tpu.vector_store %arg6[%384, %c0_136, %c0_137], %387 {strides = array<i32>} : memref<16x8x128xf32, #tpu.memory_space<vmem>>, vector<1x8x128xf32>,
    %c12_i32 = arith.constant 12 : i32
    %388 = arith.negf %380 : vector<8x128xf32>
    %389 = math.exp %388 : vector<8x128xf32>
    %cst_138 = arith.constant 1.000000e+00 : f32
    %390 = vector.broadcast %cst_138 : f32 to vector<8x128xf32>
    %391 = arith.addf %390, %389 : vector<8x128xf32>
    %392 = arith.divf %390, %391 : vector<8x128xf32>
    %cst_139 = arith.constant dense<0.000000e+00> : vector<8x256xf32>
    %393 = tpu.matmul %392, %0, %cst_139 {dimension_numbers = #tpu.dot_dimension_numbers<[1], [0], [0], [1], [0, 0, 1, 1], [], []>} : vector<8x128xf32>, vector<128x256xf32>, vector<8x256xf32> -> vector<8x256xf32>
    %394 = arith.index_cast %c12_i32 : i32 to index
    %c0_140 = arith.constant 0 : index
    %c0_141 = arith.constant 0 : index
    %395 = vector.load %arg1[%394, %c0_140, %c0_141] : memref<16x8x256xf32, #tpu.memory_space<vmem>>, vector<1x8x256xf32>
    %396 = vector.shape_cast %395 : vector<1x8x256xf32> to vector<8x256xf32>
    %397 = arith.addf %393, %396 : vector<8x256xf32>
    %398 = vector.extract_strided_slice %397 {offsets = [0, 0], sizes = [8, 128], strides = [1, 1]} : vector<8x256xf32> to vector<8x128xf32>
    %399 = vector.extract_strided_slice %397 {offsets = [0, 128], sizes = [8, 128], strides = [1, 1]} : vector<8x256xf32> to vector<8x128xf32>
    %400 = arith.negf %399 : vector<8x128xf32>
    %401 = math.exp %400 : vector<8x128xf32>
    %cst_142 = arith.constant 1.000000e+00 : f32
    %402 = vector.broadcast %cst_142 : f32 to vector<8x128xf32>
    %403 = arith.addf %402, %401 : vector<8x128xf32>
    %404 = arith.divf %402, %403 : vector<8x128xf32>
    %cst_143 = arith.constant -9.950000e-01 : f32
    %405 = vector.broadcast %cst_143 : f32 to vector<8x128xf32>
    %406 = arith.mulf %405, %404 : vector<8x128xf32>
    %cst_144 = arith.constant 1.000000e+00 : f32
    %407 = vector.broadcast %cst_144 : f32 to vector<8x128xf32>
    %408 = arith.addf %406, %407 : vector<8x128xf32>
    %cst_145 = arith.constant 1.000000e+00 : f32
    %409 = vector.broadcast %cst_145 : f32 to vector<8x128xf32>
    %410 = arith.subf %409, %408 : vector<8x128xf32>
    %411 = arith.mulf %410, %380 : vector<8x128xf32>
    %412 = arith.addf %411, %398 : vector<8x128xf32>
    %cst_146 = arith.constant dense<0.000000e+00> : vector<8x128xf32>
    %413 = tpu.matmul %412, %1, %cst_146 {dimension_numbers = #tpu.dot_dimension_numbers<[1], [0], [0], [1], [0, 0, 1, 1], [], []>} : vector<8x128xf32>, vector<128x128xf32>, vector<8x128xf32> -> vector<8x128xf32>
    %414 = vector.broadcast %2 : vector<1x128xf32> to vector<8x128xf32>
    %415 = arith.addf %413, %414 : vector<8x128xf32>
    %416 = arith.index_cast %c12_i32 : i32 to index
    %c0_147 = arith.constant 0 : index
    %c0_148 = arith.constant 0 : index
    %417 = vector.load %arg6[%416, %c0_147, %c0_148] : memref<16x8x128xf32, #tpu.memory_space<vmem>>, vector<1x8x128xf32>
    %418 = vector.shape_cast %417 : vector<1x8x128xf32> to vector<8x128xf32>
    %419 = vector.shape_cast %415 : vector<8x128xf32> to vector<1x8x128xf32>
    tpu.vector_store %arg6[%416, %c0_147, %c0_148], %419 {strides = array<i32>} : memref<16x8x128xf32, #tpu.memory_space<vmem>>, vector<1x8x128xf32>,
    %c13_i32 = arith.constant 13 : i32
    %420 = arith.negf %412 : vector<8x128xf32>
    %421 = math.exp %420 : vector<8x128xf32>
    %cst_149 = arith.constant 1.000000e+00 : f32
    %422 = vector.broadcast %cst_149 : f32 to vector<8x128xf32>
    %423 = arith.addf %422, %421 : vector<8x128xf32>
    %424 = arith.divf %422, %423 : vector<8x128xf32>
    %cst_150 = arith.constant dense<0.000000e+00> : vector<8x256xf32>
    %425 = tpu.matmul %424, %0, %cst_150 {dimension_numbers = #tpu.dot_dimension_numbers<[1], [0], [0], [1], [0, 0, 1, 1], [], []>} : vector<8x128xf32>, vector<128x256xf32>, vector<8x256xf32> -> vector<8x256xf32>
    %426 = arith.index_cast %c13_i32 : i32 to index
    %c0_151 = arith.constant 0 : index
    %c0_152 = arith.constant 0 : index
    %427 = vector.load %arg1[%426, %c0_151, %c0_152] : memref<16x8x256xf32, #tpu.memory_space<vmem>>, vector<1x8x256xf32>
    %428 = vector.shape_cast %427 : vector<1x8x256xf32> to vector<8x256xf32>
    %429 = arith.addf %425, %428 : vector<8x256xf32>
    %430 = vector.extract_strided_slice %429 {offsets = [0, 0], sizes = [8, 128], strides = [1, 1]} : vector<8x256xf32> to vector<8x128xf32>
    %431 = vector.extract_strided_slice %429 {offsets = [0, 128], sizes = [8, 128], strides = [1, 1]} : vector<8x256xf32> to vector<8x128xf32>
    %432 = arith.negf %431 : vector<8x128xf32>
    %433 = math.exp %432 : vector<8x128xf32>
    %cst_153 = arith.constant 1.000000e+00 : f32
    %434 = vector.broadcast %cst_153 : f32 to vector<8x128xf32>
    %435 = arith.addf %434, %433 : vector<8x128xf32>
    %436 = arith.divf %434, %435 : vector<8x128xf32>
    %cst_154 = arith.constant -9.950000e-01 : f32
    %437 = vector.broadcast %cst_154 : f32 to vector<8x128xf32>
    %438 = arith.mulf %437, %436 : vector<8x128xf32>
    %cst_155 = arith.constant 1.000000e+00 : f32
    %439 = vector.broadcast %cst_155 : f32 to vector<8x128xf32>
    %440 = arith.addf %438, %439 : vector<8x128xf32>
    %cst_156 = arith.constant 1.000000e+00 : f32
    %441 = vector.broadcast %cst_156 : f32 to vector<8x128xf32>
    %442 = arith.subf %441, %440 : vector<8x128xf32>
    %443 = arith.mulf %442, %412 : vector<8x128xf32>
    %444 = arith.addf %443, %430 : vector<8x128xf32>
    %cst_157 = arith.constant dense<0.000000e+00> : vector<8x128xf32>
    %445 = tpu.matmul %444, %1, %cst_157 {dimension_numbers = #tpu.dot_dimension_numbers<[1], [0], [0], [1], [0, 0, 1, 1], [], []>} : vector<8x128xf32>, vector<128x128xf32>, vector<8x128xf32> -> vector<8x128xf32>
    %446 = vector.broadcast %2 : vector<1x128xf32> to vector<8x128xf32>
    %447 = arith.addf %445, %446 : vector<8x128xf32>
    %448 = arith.index_cast %c13_i32 : i32 to index
    %c0_158 = arith.constant 0 : index
    %c0_159 = arith.constant 0 : index
    %449 = vector.load %arg6[%448, %c0_158, %c0_159] : memref<16x8x128xf32, #tpu.memory_space<vmem>>, vector<1x8x128xf32>
    %450 = vector.shape_cast %449 : vector<1x8x128xf32> to vector<8x128xf32>
    %451 = vector.shape_cast %447 : vector<8x128xf32> to vector<1x8x128xf32>
    tpu.vector_store %arg6[%448, %c0_158, %c0_159], %451 {strides = array<i32>} : memref<16x8x128xf32, #tpu.memory_space<vmem>>, vector<1x8x128xf32>,
    %c14_i32 = arith.constant 14 : i32
    %452 = arith.negf %444 : vector<8x128xf32>
    %453 = math.exp %452 : vector<8x128xf32>
    %cst_160 = arith.constant 1.000000e+00 : f32
    %454 = vector.broadcast %cst_160 : f32 to vector<8x128xf32>
    %455 = arith.addf %454, %453 : vector<8x128xf32>
    %456 = arith.divf %454, %455 : vector<8x128xf32>
    %cst_161 = arith.constant dense<0.000000e+00> : vector<8x256xf32>
    %457 = tpu.matmul %456, %0, %cst_161 {dimension_numbers = #tpu.dot_dimension_numbers<[1], [0], [0], [1], [0, 0, 1, 1], [], []>} : vector<8x128xf32>, vector<128x256xf32>, vector<8x256xf32> -> vector<8x256xf32>
    %458 = arith.index_cast %c14_i32 : i32 to index
    %c0_162 = arith.constant 0 : index
    %c0_163 = arith.constant 0 : index
    %459 = vector.load %arg1[%458, %c0_162, %c0_163] : memref<16x8x256xf32, #tpu.memory_space<vmem>>, vector<1x8x256xf32>
    %460 = vector.shape_cast %459 : vector<1x8x256xf32> to vector<8x256xf32>
    %461 = arith.addf %457, %460 : vector<8x256xf32>
    %462 = vector.extract_strided_slice %461 {offsets = [0, 0], sizes = [8, 128], strides = [1, 1]} : vector<8x256xf32> to vector<8x128xf32>
    %463 = vector.extract_strided_slice %461 {offsets = [0, 128], sizes = [8, 128], strides = [1, 1]} : vector<8x256xf32> to vector<8x128xf32>
    %464 = arith.negf %463 : vector<8x128xf32>
    %465 = math.exp %464 : vector<8x128xf32>
    %cst_164 = arith.constant 1.000000e+00 : f32
    %466 = vector.broadcast %cst_164 : f32 to vector<8x128xf32>
    %467 = arith.addf %466, %465 : vector<8x128xf32>
    %468 = arith.divf %466, %467 : vector<8x128xf32>
    %cst_165 = arith.constant -9.950000e-01 : f32
    %469 = vector.broadcast %cst_165 : f32 to vector<8x128xf32>
    %470 = arith.mulf %469, %468 : vector<8x128xf32>
    %cst_166 = arith.constant 1.000000e+00 : f32
    %471 = vector.broadcast %cst_166 : f32 to vector<8x128xf32>
    %472 = arith.addf %470, %471 : vector<8x128xf32>
    %cst_167 = arith.constant 1.000000e+00 : f32
    %473 = vector.broadcast %cst_167 : f32 to vector<8x128xf32>
    %474 = arith.subf %473, %472 : vector<8x128xf32>
    %475 = arith.mulf %474, %444 : vector<8x128xf32>
    %476 = arith.addf %475, %462 : vector<8x128xf32>
    %cst_168 = arith.constant dense<0.000000e+00> : vector<8x128xf32>
    %477 = tpu.matmul %476, %1, %cst_168 {dimension_numbers = #tpu.dot_dimension_numbers<[1], [0], [0], [1], [0, 0, 1, 1], [], []>} : vector<8x128xf32>, vector<128x128xf32>, vector<8x128xf32> -> vector<8x128xf32>
    %478 = vector.broadcast %2 : vector<1x128xf32> to vector<8x128xf32>
    %479 = arith.addf %477, %478 : vector<8x128xf32>
    %480 = arith.index_cast %c14_i32 : i32 to index
    %c0_169 = arith.constant 0 : index
    %c0_170 = arith.constant 0 : index
    %481 = vector.load %arg6[%480, %c0_169, %c0_170] : memref<16x8x128xf32, #tpu.memory_space<vmem>>, vector<1x8x128xf32>
    %482 = vector.shape_cast %481 : vector<1x8x128xf32> to vector<8x128xf32>
    %483 = vector.shape_cast %479 : vector<8x128xf32> to vector<1x8x128xf32>
    tpu.vector_store %arg6[%480, %c0_169, %c0_170], %483 {strides = array<i32>} : memref<16x8x128xf32, #tpu.memory_space<vmem>>, vector<1x8x128xf32>,
    %c15_i32 = arith.constant 15 : i32
    %484 = arith.negf %476 : vector<8x128xf32>
    %485 = math.exp %484 : vector<8x128xf32>
    %cst_171 = arith.constant 1.000000e+00 : f32
    %486 = vector.broadcast %cst_171 : f32 to vector<8x128xf32>
    %487 = arith.addf %486, %485 : vector<8x128xf32>
    %488 = arith.divf %486, %487 : vector<8x128xf32>
    %cst_172 = arith.constant dense<0.000000e+00> : vector<8x256xf32>
    %489 = tpu.matmul %488, %0, %cst_172 {dimension_numbers = #tpu.dot_dimension_numbers<[1], [0], [0], [1], [0, 0, 1, 1], [], []>} : vector<8x128xf32>, vector<128x256xf32>, vector<8x256xf32> -> vector<8x256xf32>
    %490 = arith.index_cast %c15_i32 : i32 to index
    %c0_173 = arith.constant 0 : index
    %c0_174 = arith.constant 0 : index
    %491 = vector.load %arg1[%490, %c0_173, %c0_174] : memref<16x8x256xf32, #tpu.memory_space<vmem>>, vector<1x8x256xf32>
    %492 = vector.shape_cast %491 : vector<1x8x256xf32> to vector<8x256xf32>
    %493 = arith.addf %489, %492 : vector<8x256xf32>
    %494 = vector.extract_strided_slice %493 {offsets = [0, 0], sizes = [8, 128], strides = [1, 1]} : vector<8x256xf32> to vector<8x128xf32>
    %495 = vector.extract_strided_slice %493 {offsets = [0, 128], sizes = [8, 128], strides = [1, 1]} : vector<8x256xf32> to vector<8x128xf32>
    %496 = arith.negf %495 : vector<8x128xf32>
    %497 = math.exp %496 : vector<8x128xf32>
    %cst_175 = arith.constant 1.000000e+00 : f32
    %498 = vector.broadcast %cst_175 : f32 to vector<8x128xf32>
    %499 = arith.addf %498, %497 : vector<8x128xf32>
    %500 = arith.divf %498, %499 : vector<8x128xf32>
    %cst_176 = arith.constant -9.950000e-01 : f32
    %501 = vector.broadcast %cst_176 : f32 to vector<8x128xf32>
    %502 = arith.mulf %501, %500 : vector<8x128xf32>
    %cst_177 = arith.constant 1.000000e+00 : f32
    %503 = vector.broadcast %cst_177 : f32 to vector<8x128xf32>
    %504 = arith.addf %502, %503 : vector<8x128xf32>
    %cst_178 = arith.constant 1.000000e+00 : f32
    %505 = vector.broadcast %cst_178 : f32 to vector<8x128xf32>
    %506 = arith.subf %505, %504 : vector<8x128xf32>
    %507 = arith.mulf %506, %476 : vector<8x128xf32>
    %508 = arith.addf %507, %494 : vector<8x128xf32>
    %cst_179 = arith.constant dense<0.000000e+00> : vector<8x128xf32>
    %509 = tpu.matmul %508, %1, %cst_179 {dimension_numbers = #tpu.dot_dimension_numbers<[1], [0], [0], [1], [0, 0, 1, 1], [], []>} : vector<8x128xf32>, vector<128x128xf32>, vector<8x128xf32> -> vector<8x128xf32>
    %510 = vector.broadcast %2 : vector<1x128xf32> to vector<8x128xf32>
    %511 = arith.addf %509, %510 : vector<8x128xf32>
    %512 = arith.index_cast %c15_i32 : i32 to index
    %c0_180 = arith.constant 0 : index
    %c0_181 = arith.constant 0 : index
    %513 = vector.load %arg6[%512, %c0_180, %c0_181] : memref<16x8x128xf32, #tpu.memory_space<vmem>>, vector<1x8x128xf32>
    %514 = vector.shape_cast %513 : vector<1x8x128xf32> to vector<8x128xf32>
    %515 = vector.shape_cast %511 : vector<8x128xf32> to vector<1x8x128xf32>
    tpu.vector_store %arg6[%512, %c0_180, %c0_181], %515 {strides = array<i32>} : memref<16x8x128xf32, #tpu.memory_space<vmem>>, vector<1x8x128xf32>,
    %c16_i32 = arith.constant 16 : i32
    return
  }
  func.func @transform_0(%arg0: i32) -> (i32, i32, i32) {
    %c0_i32 = arith.constant 0 : i32
    %c0_i32_0 = arith.constant 0 : i32
    %c0_i32_1 = arith.constant 0 : i32
    %c0_i32_2 = arith.constant 0 : i32
    return %c0_i32, %c0_i32_0, %c0_i32_1 : i32, i32, i32
  }
  func.func @transform_1(%arg0: i32) -> (i32, i32) {
    %c0_i32 = arith.constant 0 : i32
    %c0_i32_0 = arith.constant 0 : i32
    %c0_i32_1 = arith.constant 0 : i32
    return %c0_i32, %c0_i32_0 : i32, i32
  }
  func.func @transform_2(%arg0: i32) -> (i32, i32) {
    %c0_i32 = arith.constant 0 : i32
    %c0_i32_0 = arith.constant 0 : i32
    %c0_i32_1 = arith.constant 0 : i32
    return %c0_i32, %c0_i32_0 : i32, i32
  }
  func.func @transform_3(%arg0: i32) -> (i32, i32) {
    %c0_i32 = arith.constant 0 : i32
    %c0_i32_0 = arith.constant 0 : i32
    %c0_i32_1 = arith.constant 0 : i32
    return %c0_i32, %c0_i32_0 : i32, i32
  }
  func.func @transform_4(%arg0: i32) -> (i32, i32) {
    %c0_i32 = arith.constant 0 : i32
    %c0_i32_0 = arith.constant 0 : i32
    %c0_i32_1 = arith.constant 0 : i32
    return %c0_i32, %c0_i32_0 : i32, i32
  }
  func.func @transform_5(%arg0: i32) -> (i32, i32, i32) {
    %c0_i32 = arith.constant 0 : i32
    %c0_i32_0 = arith.constant 0 : i32
    %c0_i32_1 = arith.constant 0 : i32
    %c0_i32_2 = arith.constant 0 : i32
    return %c0_i32, %c0_i32_0, %c0_i32_1 : i32, i32, i32
  }
}

</mosaic_0001>

<llo_original>
// kernel: a2c_rollout.1
$region0: #{a2c_rollout.1}
  #allocation0 [shape = 'u32[]', space=smem, size = 0x4, offset = 0x4, fixed_abs, tag = 'smem constant byte address 0x4 - core index']
  #allocation1 [shape = 'u32[144,128]{1,0:T(1,128)}', space=vmem, size = 0x12000, scoped, tag = 'internal scratch']
  %s0 = inlined_call_operand.vmem [shape: f32[16,8,256], index: 0, kind: input, shape index: {}]
  %s1 = inlined_call_operand.vmem [shape: f32[128,256], index: 1, kind: input, shape index: {}]
  %s2 = inlined_call_operand.vmem [shape: f32[128,128], index: 2, kind: input, shape index: {}]
  %s3 = inlined_call_operand.vmem [shape: f32[1,128], index: 3, kind: input, shape index: {}]
  %s4 = inlined_call_operand.vmem [shape: f32[8,128], index: 4, kind: input, shape index: {}]
  %s5 = inlined_call_operand.vmem [shape: f32[16,8,128], index: 5, kind: output, shape index: {}]
  %s6 = sld [smem:[#allocation0]]
  $region30: #{a2c_rollout.1} parent=0
    _
  %s8 = ssub.s32 1, %s6
  %s9 = scalar_select 0, %s8, %s6
  // Predicated region
  $region2: #{a2c_rollout.1} parent=0 // pred_check
    _
  $region3: #{a2c_rollout.1} parent=0 // pred_check_branch
    %11 = sbr.rel (0) target = $region5
  $region4: #{a2c_rollout.1} parent=0 // pred_region
    _
  $region5: #{a2c_rollout.1} parent=0 // pred_fallthru
    _
  // Predicated region
  $region6: #{a2c_rollout.1} parent=0 // pred_check
    _
  $region7: #{a2c_rollout.1} parent=0 // pred_check_branch
    %13 = sbr.rel (0) target = $region9
  $region8: #{a2c_rollout.1} parent=0 // pred_region
    _
  $region9: #{a2c_rollout.1} parent=0 // pred_fallthru
    _
  // Predicated region
  $region10: #{a2c_rollout.1} parent=0 // pred_check
    _
  $region11: #{a2c_rollout.1} parent=0 // pred_check_branch
    %15 = sbr.rel (0) target = $region13
  $region12: #{a2c_rollout.1} parent=0 // pred_region
    _
  $region13: #{a2c_rollout.1} parent=0 // pred_fallthru
    _
  // Predicated region
  $region14: #{a2c_rollout.1} parent=0 // pred_check
    _
  $region15: #{a2c_rollout.1} parent=0 // pred_check_branch
    %17 = sbr.rel (0) target = $region17
  $region16: #{a2c_rollout.1} parent=0 // pred_region
    _
  $region17: #{a2c_rollout.1} parent=0 // pred_fallthru
    _
  // Predicated region
  $region18: #{a2c_rollout.1} parent=0 // pred_check
    _
  $region19: #{a2c_rollout.1} parent=0 // pred_check_branch
    %19 = sbr.rel (0) target = $region21
  $region20: #{a2c_rollout.1} parent=0 // pred_region
    _
  $region21: #{a2c_rollout.1} parent=0 // pred_fallthru
    _
  %v20 = vld [vmem:[%s1] sm:$0xff]
  %v21 = vld [vmem:[%s1 + $0x8] sm:$0xff]
  %v22 = vld [vmem:[%s1 + $0x10] sm:$0xff]
  %v23 = vld [vmem:[%s1 + $0x18] sm:$0xff]
  %v24 = vld [vmem:[%s1 + $0x20] sm:$0xff]
  %v25 = vld [vmem:[%s1 + $0x28] sm:$0xff]
  %v26 = vld [vmem:[%s1 + $0x30] sm:$0xff]
  %v27 = vld [vmem:[%s1 + $0x38] sm:$0xff]
  %v28 = vld [vmem:[%s1 + $0x40] sm:$0xff]
  %v29 = vld [vmem:[%s1 + $0x48] sm:$0xff]
  %v30 = vld [vmem:[%s1 + $0x50] sm:$0xff]
  %v31 = vld [vmem:[%s1 + $0x58] sm:$0xff]
  %v32 = vld [vmem:[%s1 + $0x60] sm:$0xff]
  %v33 = vld [vmem:[%s1 + $0x68] sm:$0xff]
  %v34 = vld [vmem:[%s1 + $0x70] sm:$0xff]
  %v35 = vld [vmem:[%s1 + $0x78] sm:$0xff]
  %v36 = vld [vmem:[%s1 + $0x80] sm:$0xff]
  %v37 = vld [vmem:[%s1 + $0x88] sm:$0xff]
  %v38 = vld [vmem:[%s1 + $0x90] sm:$0xff]
  %v39 = vld [vmem:[%s1 + $0x98] sm:$0xff]
  %v40 = vld [vmem:[%s1 + $0xa0] sm:$0xff]
  %v41 = vld [vmem:[%s1 + $0xa8] sm:$0xff]
  %v42 = vld [vmem:[%s1 + $0xb0] sm:$0xff]
  %v43 = vld [vmem:[%s1 + $0xb8] sm:$0xff]
  %v44 = vld [vmem:[%s1 + $0xc0] sm:$0xff]
  %v45 = vld [vmem:[%s1 + $0xc8] sm:$0xff]
  %v46 = vld [vmem:[%s1 + $0xd0] sm:$0xff]
  %v47 = vld [vmem:[%s1 + $0xd8] sm:$0xff]
  %v48 = vld [vmem:[%s1 + $0xe0] sm:$0xff]
  %v49 = vld [vmem:[%s1 + $0xe8] sm:$0xff]
  %v50 = vld [vmem:[%s1 + $0xf0] sm:$0xff]
  %v51 = vld [vmem:[%s1 + $0xf8] sm:$0xff]
  %v52 = vld [vmem:[%s2] sm:$0xff]
  %v53 = vld [vmem:[%s2 + $0x8] sm:$0xff]
  %v54 = vld [vmem:[%s2 + $0x10] sm:$0xff]
  %v55 = vld [vmem:[%s2 + $0x18] sm:$0xff]
  %v56 = vld [vmem:[%s2 + $0x20] sm:$0xff]
  %v57 = vld [vmem:[%s2 + $0x28] sm:$0xff]
  %v58 = vld [vmem:[%s2 + $0x30] sm:$0xff]
  %v59 = vld [vmem:[%s2 + $0x38] sm:$0xff]
  %v60 = vld [vmem:[%s2 + $0x40] sm:$0xff]
  %v61 = vld [vmem:[%s2 + $0x48] sm:$0xff]
  %v62 = vld [vmem:[%s2 + $0x50] sm:$0xff]
  %v63 = vld [vmem:[%s2 + $0x58] sm:$0xff]
  %v64 = vld [vmem:[%s2 + $0x60] sm:$0xff]
  %v65 = vld [vmem:[%s2 + $0x68] sm:$0xff]
  %v66 = vld [vmem:[%s2 + $0x70] sm:$0xff]
  %v67 = vld [vmem:[%s2 + $0x78] sm:$0xff]
  %v68 = vld [vmem:[%s3] sm:$0x1]
  %v69 = vld [vmem:[%s4] sm:$0xff]
  %v70 = vxor.u32 %v69, 2147483648
  %v71 = vmul.f32 %v70, 1.442695
  %v72 = vpow.pop %v71
  %v73 = vadd.f32 %v72, 1.0
  %v74 = vrcp.pop %v73
  %v75 = vmul.f32 1.0, %v74
  %v76 = vld [vmem:[%s0] sm:$0xff]
  %v77 = vld [vmem:[%s0 + $0x8] sm:$0xff]
  %78 = vmatprep.subr.mxu0 %v51
  %79 = vmatpush1.msra.mxu0 %v50
  %80 = vmatprep.subr.mxu0 %v49
  %81 = vmatpush1.msra.mxu0 %v48
  %82 = vmatprep.subr.mxu0 %v47
  %83 = vmatpush1.msra.mxu0 %v46
  %84 = vmatprep.subr.mxu0 %v45
  %85 = vmatpush1.msra.mxu0 %v44
  %86 = vmatprep.subr.mxu0 %v43
  %87 = vmatpush1.msra.mxu0 %v42
  %88 = vmatprep.subr.mxu0 %v41
  %89 = vmatpush1.msra.mxu0 %v40
  %90 = vmatprep.subr.mxu0 %v39
  %91 = vmatpush1.msra.mxu0 %v38
  %92 = vmatprep.subr.mxu0 %v37
  %93 = vmatpush1.msra.mxu0 %v36
  %94 = vmatprep.subr.mxu0 %v35
  %95 = vmatpush1.msra.mxu0 %v34
  %96 = vmatprep.subr.mxu0 %v33
  %97 = vmatpush1.msra.mxu0 %v32
  %98 = vmatprep.subr.mxu0 %v31
  %99 = vmatpush1.msra.mxu0 %v30
  %100 = vmatprep.subr.mxu0 %v29
  %101 = vmatpush1.msra.mxu0 %v28
  %102 = vmatprep.subr.mxu0 %v27
  %103 = vmatpush1.msra.mxu0 %v26
  %104 = vmatprep.subr.mxu0 %v25
  %105 = vmatpush1.msra.mxu0 %v24
  %106 = vmatprep.subr.mxu0 %v23
  %107 = vmatpush1.msra.mxu0 %v22
  %108 = vmatprep.subr.mxu0 %v21
  %109 = vmatpush1.msra.mxu0 %v20
  %110 = vmatprep.subr.mxu0 0.0
  %111 = vmatpush2.msra.mxu0 0.0
  %112 = vmatprep.subr.mxu0 0.0
  %113 = vmatpush2.msra.mxu0 0.0
  %114 = vmatprep.subr.mxu0 0.0
  %115 = vmatpush2.msra.mxu0 0.0
  %116 = vmatprep.subr.mxu0 0.0
  %117 = vmatpush2.msra.mxu0 0.0
  %118 = vmatprep.subr.mxu0 0.0
  %119 = vmatpush2.msra.mxu0 0.0
  %120 = vmatprep.subr.mxu0 0.0
  %121 = vmatpush2.msra.mxu0 0.0
  %122 = vmatprep.subr.mxu0 0.0
  %123 = vmatpush2.msra.mxu0 0.0
  %124 = vmatprep.subr.mxu0 0.0
  %125 = vmatpush2.msra.mxu0 0.0
  %126 = vmatprep.subr.mxu0 0.0
  %127 = vmatpush2.msra.mxu0 0.0
  %128 = vmatprep.subr.mxu0 0.0
  %129 = vmatpush2.msra.mxu0 0.0
  %130 = vmatprep.subr.mxu0 0.0
  %131 = vmatpush2.msra.mxu0 0.0
  %132 = vmatprep.subr.mxu0 0.0
  %133 = vmatpush2.msra.mxu0 0.0
  %134 = vmatprep.subr.mxu0 0.0
  %135 = vmatpush2.msra.mxu0 0.0
  %136 = vmatprep.subr.mxu0 0.0
  %137 = vmatpush2.msra.mxu0 0.0
  %138 = vmatprep.subr.mxu0 0.0
  %139 = vmatpush2.msra.mxu0 0.0
  %140 = vmatprep.subr.mxu0 0.0
  %141 = vmatpush2.msra.mxu0 0.0
  %142 = vmatprep.mubr.f32.mxu0 0.0
  %143 = vmatmul.mubr.f32.gmra.mxu0 %v75
  %v144 = vpop.f32.mrf.mxu0
  %v145 = vadd.f32 %v76, %v144
  %v146 = vpop.f32.mrf.mxu0
  %v147 = vadd.f32 %v77, %v146
  %148 = vdwg.mxu0
  %v149 = vxor.u32 %v147, 2147483648
  %v150 = vmul.f32 %v149, 1.442695
  %v151 = vpow.pop %v150
  %v152 = vadd.f32 %v151, 1.0
  %v153 = vrcp.pop %v152
  %v154 = vmul.f32 1.0, %v153
  %v155 = vmul.f32 %v154, -0.995
  %v156 = vadd.f32 %v155, 1.0
  %v157 = vsub.f32 1.0, %v156
  %v158 = vmul.f32 %v157, %v69
  %v159 = vadd.f32 %v158, %v145
  %v161 = vlaneseq
  %v162 = vshrl.u32 %v161, 7
  %v163 = vsub.s32 0, %v162
  %v164 = vrot.slane %v68, %v163
  %166 = vmatprep.subr.mxu0 0.0
  %167 = vmatpush1.msra.mxu0 %v67
  %168 = vmatprep.subr.mxu0 0.0
  %169 = vmatpush1.msra.mxu0 %v66
  %170 = vmatprep.subr.mxu0 0.0
  %171 = vmatpush1.msra.mxu0 %v65
  %172 = vmatprep.subr.mxu0 0.0
  %173 = vmatpush1.msra.mxu0 %v64
  %174 = vmatprep.subr.mxu0 0.0
  %175 = vmatpush1.msra.mxu0 %v63
  %176 = vmatprep.subr.mxu0 0.0
  %177 = vmatpush1.msra.mxu0 %v62
  %178 = vmatprep.subr.mxu0 0.0
  %179 = vmatpush1.msra.mxu0 %v61
  %180 = vmatprep.subr.mxu0 0.0
  %181 = vmatpush1.msra.mxu0 %v60
  %182 = vmatprep.subr.mxu0 0.0
  %183 = vmatpush1.msra.mxu0 %v59
  %184 = vmatprep.subr.mxu0 0.0
  %185 = vmatpush1.msra.mxu0 %v58
  %186 = vmatprep.subr.mxu0 0.0
  %187 = vmatpush1.msra.mxu0 %v57
  %188 = vmatprep.subr.mxu0 0.0
  %189 = vmatpush1.msra.mxu0 %v56
  %190 = vmatprep.subr.mxu0 0.0
  %191 = vmatpush1.msra.mxu0 %v55
  %192 = vmatprep.subr.mxu0 0.0
  %193 = vmatpush1.msra.mxu0 %v54
  %194 = vmatprep.subr.mxu0 0.0
  %195 = vmatpush1.msra.mxu0 %v53
  %196 = vmatprep.subr.mxu0 0.0
  %197 = vmatpush1.msra.mxu0 %v52
  %198 = vmatprep.subr.mxu0 0.0
  %199 = vmatpush2.msra.mxu0 0.0
  %200 = vmatprep.subr.mxu0 0.0
  %201 = vmatpush2.msra.mxu0 0.0
  %202 = vmatprep.subr.mxu0 0.0
  %203 = vmatpush2.msra.mxu0 0.0
  %204 = vmatprep.subr.mxu0 0.0
  %205 = vmatpush2.msra.mxu0 0.0
  %206 = vmatprep.subr.mxu0 0.0
  %207 = vmatpush2.msra.mxu0 0.0
  %208 = vmatprep.subr.mxu0 0.0
  %209 = vmatpush2.msra.mxu0 0.0
  %210 = vmatprep.subr.mxu0 0.0
  %211 = vmatpush2.msra.mxu0 0.0
  %212 = vmatprep.subr.mxu0 0.0
  %213 = vmatpush2.msra.mxu0 0.0
  %214 = vmatprep.subr.mxu0 0.0
  %215 = vmatpush2.msra.mxu0 0.0
  %216 = vmatprep.subr.mxu0 0.0
  %217 = vmatpush2.msra.mxu0 0.0
  %218 = vmatprep.subr.mxu0 0.0
  %219 = vmatpush2.msra.mxu0 0.0
  %220 = vmatprep.subr.mxu0 0.0
  %221 = vmatpush2.msra.mxu0 0.0
  %222 = vmatprep.subr.mxu0 0.0
  %223 = vmatpush2.msra.mxu0 0.0
  %224 = vmatprep.subr.mxu0 0.0
  %225 = vmatpush2.msra.mxu0 0.0
  %226 = vmatprep.subr.mxu0 0.0
  %227 = vmatpush2.msra.mxu0 0.0
  %228 = vmatprep.subr.mxu0 0.0
  %229 = vmatpush2.msra.mxu0 0.0
  %230 = vmatprep.mubr.f32.mxu0 0.0
  %231 = vmatmul.mubr.f32.gmra.mxu0 %v159
  %v232 = vpop.f32.mrf.mxu0
  %v233 = vadd.f32 %v164, %v232
  %v234 = vpop.f32.mrf.mxu0
  %235 = vdwg.mxu0
  %236 = vst [vmem:[%s5] sm:$0xff] %v233
  %v237 = vxor.u32 %v159, 2147483648
  %v238 = vmul.f32 %v237, 1.442695
  %v239 = vpow.pop %v238
  %v240 = vadd.f32 %v239, 1.0
  %v241 = vrcp.pop %v240
  %v242 = vmul.f32 1.0, %v241
  %s243 = scalar_lea.vmem %s0, 16
  %v244 = vld [vmem:[%s243] sm:$0xff]
  %v245 = vld [vmem:[%s243 + $0x8] sm:$0xff]
  %246 = vmatprep.subr.mxu0 %v51
  %247 = vmatpush1.msra.mxu0 %v50
  %248 = vmatprep.subr.mxu0 %v49
  %249 = vmatpush1.msra.mxu0 %v48
  %250 = vmatprep.subr.mxu0 %v47
  %251 = vmatpush1.msra.mxu0 %v46
  %252 = vmatprep.subr.mxu0 %v45
  %253 = vmatpush1.msra.mxu0 %v44
  %254 = vmatprep.subr.mxu0 %v43
  %255 = vmatpush1.msra.mxu0 %v42
  %256 = vmatprep.subr.mxu0 %v41
  %257 = vmatpush1.msra.mxu0 %v40
  %258 = vmatprep.subr.mxu0 %v39
  %259 = vmatpush1.msra.mxu0 %v38
  %260 = vmatprep.subr.mxu0 %v37
  %261 = vmatpush1.msra.mxu0 %v36
  %262 = vmatprep.subr.mxu0 %v35
  %263 = vmatpush1.msra.mxu0 %v34
  %264 = vmatprep.subr.mxu0 %v33
  %265 = vmatpush1.msra.mxu0 %v32
  %266 = vmatprep.subr.mxu0 %v31
  %267 = vmatpush1.msra.mxu0 %v30
  %268 = vmatprep.subr.mxu0 %v29
  %269 = vmatpush1.msra.mxu0 %v28
  %270 = vmatprep.subr.mxu0 %v27
  %271 = vmatpush1.msra.mxu0 %v26
  %272 = vmatprep.subr.mxu0 %v25
  %273 = vmatpush1.msra.mxu0 %v24
  %274 = vmatprep.subr.mxu0 %v23
  %275 = vmatpush1.msra.mxu0 %v22
  %276 = vmatprep.subr.mxu0 %v21
  %277 = vmatpush1.msra.mxu0 %v20
  %278 = vmatprep.subr.mxu0 0.0
  %279 = vmatpush2.msra.mxu0 0.0
  %280 = vmatprep.subr.mxu0 0.0
  %281 = vmatpush2.msra.mxu0 0.0
  %282 = vmatprep.subr.mxu0 0.0
  %283 = vmatpush2.msra.mxu0 0.0
  %284 = vmatprep.subr.mxu0 0.0
  %285 = vmatpush2.msra.mxu0 0.0
  %286 = vmatprep.subr.mxu0 0.0
  %287 = vmatpush2.msra.mxu0 0.0
  %288 = vmatprep.subr.mxu0 0.0
  %289 = vmatpush2.msra.mxu0 0.0
  %290 = vmatprep.subr.mxu0 0.0
  %291 = vmatpush2.msra.mxu0 0.0
  %292 = vmatprep.subr.mxu0 0.0
  %293 = vmatpush2.msra.mxu0 0.0
  %294 = vmatprep.subr.mxu0 0.0
  %295 = vmatpush2.msra.mxu0 0.0
  %296 = vmatprep.subr.mxu0 0.0
  %297 = vmatpush2.msra.mxu0 0.0
  %298 = vmatprep.subr.mxu0 0.0
  %299 = vmatpush2.msra.mxu0 0.0
  %300 = vmatprep.subr.mxu0 0.0
  %301 = vmatpush2.msra.mxu0 0.0
  %302 = vmatprep.subr.mxu0 0.0
  %303 = vmatpush2.msra.mxu0 0.0
  %304 = vmatprep.subr.mxu0 0.0
  %305 = vmatpush2.msra.mxu0 0.0
  %306 = vmatprep.subr.mxu0 0.0
  %307 = vmatpush2.msra.mxu0 0.0
  %308 = vmatprep.subr.mxu0 0.0
  %309 = vmatpush2.msra.mxu0 0.0
  %310 = vmatprep.mubr.f32.mxu0 0.0
  %311 = vmatmul.mubr.f32.gmra.mxu0 %v242
  %v312 = vpop.f32.mrf.mxu0
  %v313 = vadd.f32 %v244, %v312
  %v314 = vpop.f32.mrf.mxu0
  %v315 = vadd.f32 %v245, %v314
  %316 = vdwg.mxu0
  %v317 = vxor.u32 %v315, 2147483648
  %v318 = vmul.f32 %v317, 1.442695
  %v319 = vpow.pop %v318
  %v320 = vadd.f32 %v319, 1.0
  %v321 = vrcp.pop %v320
  %v322 = vmul.f32 1.0, %v321
  %v323 = vmul.f32 %v322, -0.995
  %v324 = vadd.f32 %v323, 1.0
  %v325 = vsub.f32 1.0, %v324
  %v326 = vmul.f32 %v325, %v159
  %v327 = vadd.f32 %v326, %v313
  %328 = vmatprep.subr.mxu0 0.0
  %329 = vmatpush1.msra.mxu0 %v67
  %330 = vmatprep.subr.mxu0 0.0
  %331 = vmatpush1.msra.mxu0 %v66
  %332 = vmatprep.subr.mxu0 0.0
  %333 = vmatpush1.msra.mxu0 %v65
  %334 = vmatprep.subr.mxu0 0.0
  %335 = vmatpush1.msra.mxu0 %v64
  %336 = vmatprep.subr.mxu0 0.0
  %337 = vmatpush1.msra.mxu0 %v63
  %338 = vmatprep.subr.mxu0 0.0
  %339 = vmatpush1.msra.mxu0 %v62
  %340 = vmatprep.subr.mxu0 0.0
  %341 = vmatpush1.msra.mxu0 %v61
  %342 = vmatprep.subr.mxu0 0.0
  %343 = vmatpush1.msra.mxu0 %v60
  %344 = vmatprep.subr.mxu0 0.0
  %345 = vmatpush1.msra.mxu0 %v59
  %346 = vmatprep.subr.mxu0 0.0
  %347 = vmatpush1.msra.mxu0 %v58
  %348 = vmatprep.subr.mxu0 0.0
  %349 = vmatpush1.msra.mxu0 %v57
  %350 = vmatprep.subr.mxu0 0.0
  %351 = vmatpush1.msra.mxu0 %v56
  %352 = vmatprep.subr.mxu0 0.0
  %353 = vmatpush1.msra.mxu0 %v55
  %354 = vmatprep.subr.mxu0 0.0
  %355 = vmatpush1.msra.mxu0 %v54
  %356 = vmatprep.subr.mxu0 0.0
  %357 = vmatpush1.msra.mxu0 %v53
  %358 = vmatprep.subr.mxu0 0.0
  %359 = vmatpush1.msra.mxu0 %v52
  %360 = vmatprep.subr.mxu0 0.0
  %361 = vmatpush2.msra.mxu0 0.0
  %362 = vmatprep.subr.mxu0 0.0
  %363 = vmatpush2.msra.mxu0 0.0
  %364 = vmatprep.subr.mxu0 0.0
  %365 = vmatpush2.msra.mxu0 0.0
  %366 = vmatprep.subr.mxu0 0.0
  %367 = vmatpush2.msra.mxu0 0.0
  %368 = vmatprep.subr.mxu0 0.0
  %369 = vmatpush2.msra.mxu0 0.0
  %370 = vmatprep.subr.mxu0 0.0
  %371 = vmatpush2.msra.mxu0 0.0
  %372 = vmatprep.subr.mxu0 0.0
  %373 = vmatpush2.msra.mxu0 0.0
  %374 = vmatprep.subr.mxu0 0.0
  %375 = vmatpush2.msra.mxu0 0.0
  %376 = vmatprep.subr.mxu0 0.0
  %377 = vmatpush2.msra.mxu0 0.0
  %378 = vmatprep.subr.mxu0 0.0
  %379 = vmatpush2.msra.mxu0 0.0
  %380 = vmatprep.subr.mxu0 0.0
  %381 = vmatpush2.msra.mxu0 0.0
  %382 = vmatprep.subr.mxu0 0.0
  %383 = vmatpush2.msra.mxu0 0.0
  %384 = vmatprep.subr.mxu0 0.0
  %385 = vmatpush2.msra.mxu0 0.0
  %386 = vmatprep.subr.mxu0 0.0
  %387 = vmatpush2.msra.mxu0 0.0
  %388 = vmatprep.subr.mxu0 0.0
  %389 = vmatpush2.msra.mxu0 0.0
  %390 = vmatprep.subr.mxu0 0.0
  %391 = vmatpush2.msra.mxu0 0.0
  %392 = vmatprep.mubr.f32.mxu0 0.0
  %393 = vmatmul.mubr.f32.gmra.mxu0 %v327
  %v394 = vpop.f32.mrf.mxu0
  %v395 = vadd.f32 %v164, %v394
  %v396 = vpop.f32.mrf.mxu0
  %397 = vdwg.mxu0
  %s398 = scalar_lea.vmem %s5, 8
  %399 = vst [vmem:[%s398] sm:$0xff] %v395
  %v400 = vxor.u32 %v327, 2147483648
  %v401 = vmul.f32 %v400, 1.442695
  %v402 = vpow.pop %v401
  %v403 = vadd.f32 %v402, 1.0
  %v404 = vrcp.pop %v403
  %v405 = vmul.f32 1.0, %v404
  %s406 = scalar_lea.vmem %s0, 32
  %v407 = vld [vmem:[%s406] sm:$0xff]
  %v408 = vld [vmem:[%s406 + $0x8] sm:$0xff]
  %409 = vmatprep.subr.mxu0 %v51
  %410 = vmatpush1.msra.mxu0 %v50
  %411 = vmatprep.subr.mxu0 %v49
  %412 = vmatpush1.msra.mxu0 %v48
  %413 = vmatprep.subr.mxu0 %v47
  %414 = vmatpush1.msra.mxu0 %v46
  %415 = vmatprep.subr.mxu0 %v45
  %416 = vmatpush1.msra.mxu0 %v44
  %417 = vmatprep.subr.mxu0 %v43
  %418 = vmatpush1.msra.mxu0 %v42
  %419 = vmatprep.subr.mxu0 %v41
  %420 = vmatpush1.msra.mxu0 %v40
  %421 = vmatprep.subr.mxu0 %v39
  %422 = vmatpush1.msra.mxu0 %v38
  %423 = vmatprep.subr.mxu0 %v37
  %424 = vmatpush1.msra.mxu0 %v36
  %425 = vmatprep.subr.mxu0 %v35
  %426 = vmatpush1.msra.mxu0 %v34
  %427 = vmatprep.subr.mxu0 %v33
  %428 = vmatpush1.msra.mxu0 %v32
  %429 = vmatprep.subr.mxu0 %v31
  %430 = vmatpush1.msra.mxu0 %v30
  %431 = vmatprep.subr.mxu0 %v29
  %432 = vmatpush1.msra.mxu0 %v28
  %433 = vmatprep.subr.mxu0 %v27
  %434 = vmatpush1.msra.mxu0 %v26
  %435 = vmatprep.subr.mxu0 %v25
  %436 = vmatpush1.msra.mxu0 %v24
  %437 = vmatprep.subr.mxu0 %v23
  %438 = vmatpush1.msra.mxu0 %v22
  %439 = vmatprep.subr.mxu0 %v21
  %440 = vmatpush1.msra.mxu0 %v20
  %441 = vmatprep.subr.mxu0 0.0
  %442 = vmatpush2.msra.mxu0 0.0
  %443 = vmatprep.subr.mxu0 0.0
  %444 = vmatpush2.msra.mxu0 0.0
  %445 = vmatprep.subr.mxu0 0.0
  %446 = vmatpush2.msra.mxu0 0.0
  %447 = vmatprep.subr.mxu0 0.0
  %448 = vmatpush2.msra.mxu0 0.0
  %449 = vmatprep.subr.mxu0 0.0
  %450 = vmatpush2.msra.mxu0 0.0
  %451 = vmatprep.subr.mxu0 0.0
  %452 = vmatpush2.msra.mxu0 0.0
  %453 = vmatprep.subr.mxu0 0.0
  %454 = vmatpush2.msra.mxu0 0.0
  %455 = vmatprep.subr.mxu0 0.0
  %456 = vmatpush2.msra.mxu0 0.0
  %457 = vmatprep.subr.mxu0 0.0
  %458 = vmatpush2.msra.mxu0 0.0
  %459 = vmatprep.subr.mxu0 0.0
  %460 = vmatpush2.msra.mxu0 0.0
  %461 = vmatprep.subr.mxu0 0.0
  %462 = vmatpush2.msra.mxu0 0.0
  %463 = vmatprep.subr.mxu0 0.0
  %464 = vmatpush2.msra.mxu0 0.0
  %465 = vmatprep.subr.mxu0 0.0
  %466 = vmatpush2.msra.mxu0 0.0
  %467 = vmatprep.subr.mxu0 0.0
  %468 = vmatpush2.msra.mxu0 0.0
  %469 = vmatprep.subr.mxu0 0.0
  %470 = vmatpush2.msra.mxu0 0.0
  %471 = vmatprep.subr.mxu0 0.0
  %472 = vmatpush2.msra.mxu0 0.0
  %473 = vmatprep.mubr.f32.mxu0 0.0
  %474 = vmatmul.mubr.f32.gmra.mxu0 %v405
  %v475 = vpop.f32.mrf.mxu0
  %v476 = vadd.f32 %v407, %v475
  %v477 = vpop.f32.mrf.mxu0
  %v478 = vadd.f32 %v408, %v477
  %479 = vdwg.mxu0
  %v480 = vxor.u32 %v478, 2147483648
  %v481 = vmul.f32 %v480, 1.442695
  %v482 = vpow.pop %v481
  %v483 = vadd.f32 %v482, 1.0
  %v484 = vrcp.pop %v483
  %v485 = vmul.f32 1.0, %v484
  %v486 = vmul.f32 %v485, -0.995
  %v487 = vadd.f32 %v486, 1.0
  %v488 = vsub.f32 1.0, %v487
  %v489 = vmul.f32 %v488, %v327
  %v490 = vadd.f32 %v489, %v476
  %491 = vmatprep.subr.mxu0 0.0
  %492 = vmatpush1.msra.mxu0 %v67
  %493 = vmatprep.subr.mxu0 0.0
  %494 = vmatpush1.msra.mxu0 %v66
  %495 = vmatprep.subr.mxu0 0.0
  %496 = vmatpush1.msra.mxu0 %v65
  %497 = vmatprep.subr.mxu0 0.0
  %498 = vmatpush1.msra.mxu0 %v64
  %499 = vmatprep.subr.mxu0 0.0
  %500 = vmatpush1.msra.mxu0 %v63
  %501 = vmatprep.subr.mxu0 0.0
  %502 = vmatpush1.msra.mxu0 %v62
  %503 = vmatprep.subr.mxu0 0.0
  %504 = vmatpush1.msra.mxu0 %v61
  %505 = vmatprep.subr.mxu0 0.0
  %506 = vmatpush1.msra.mxu0 %v60
  %507 = vmatprep.subr.mxu0 0.0
  %508 = vmatpush1.msra.mxu0 %v59
  %509 = vmatprep.subr.mxu0 0.0
  %510 = vmatpush1.msra.mxu0 %v58
  %511 = vmatprep.subr.mxu0 0.0
  %512 = vmatpush1.msra.mxu0 %v57
  %513 = vmatprep.subr.mxu0 0.0
  %514 = vmatpush1.msra.mxu0 %v56
  %515 = vmatprep.subr.mxu0 0.0
  %516 = vmatpush1.msra.mxu0 %v55
  %517 = vmatprep.subr.mxu0 0.0
  %518 = vmatpush1.msra.mxu0 %v54
  %519 = vmatprep.subr.mxu0 0.0
  %520 = vmatpush1.msra.mxu0 %v53
  %521 = vmatprep.subr.mxu0 0.0
  %522 = vmatpush1.msra.mxu0 %v52
  %523 = vmatprep.subr.mxu0 0.0
  %524 = vmatpush2.msra.mxu0 0.0
  %525 = vmatprep.subr.mxu0 0.0
  %526 = vmatpush2.msra.mxu0 0.0
  %527 = vmatprep.subr.mxu0 0.0
  %528 = vmatpush2.msra.mxu0 0.0
  %529 = vmatprep.subr.mxu0 0.0
  %530 = vmatpush2.msra.mxu0 0.0
  %531 = vmatprep.subr.mxu0 0.0
  %532 = vmatpush2.msra.mxu0 0.0
  %533 = vmatprep.subr.mxu0 0.0
  %534 = vmatpush2.msra.mxu0 0.0
  %535 = vmatprep.subr.mxu0 0.0
  %536 = vmatpush2.msra.mxu0 0.0
  %537 = vmatprep.subr.mxu0 0.0
  %538 = vmatpush2.msra.mxu0 0.0
  %539 = vmatprep.subr.mxu0 0.0
  %540 = vmatpush2.msra.mxu0 0.0
  %541 = vmatprep.subr.mxu0 0.0
  %542 = vmatpush2.msra.mxu0 0.0
  %543 = vmatprep.subr.mxu0 0.0
  %544 = vmatpush2.msra.mxu0 0.0
  %545 = vmatprep.subr.mxu0 0.0
  %546 = vmatpush2.msra.mxu0 0.0
  %547 = vmatprep.subr.mxu0 0.0
  %548 = vmatpush2.msra.mxu0 0.0
  %549 = vmatprep.subr.mxu0 0.0
  %550 = vmatpush2.msra.mxu0 0.0
  %551 = vmatprep.subr.mxu0 0.0
  %552 = vmatpush2.msra.mxu0 0.0
  %553 = vmatprep.subr.mxu0 0.0
  %554 = vmatpush2.msra.mxu0 0.0
  %555 = vmatprep.mubr.f32.mxu0 0.0
  %556 = vmatmul.mubr.f32.gmra.mxu0 %v490
  %v557 = vpop.f32.mrf.mxu0
  %v558 = vadd.f32 %v164, %v557
  %v559 = vpop.f32.mrf.mxu0
  %560 = vdwg.mxu0
  %s561 = scalar_lea.vmem %s5, 16
  %562 = vst [vmem:[%s561] sm:$0xff] %v558
  %v563 = vxor.u32 %v490, 2147483648
  %v564 = vmul.f32 %v563, 1.442695
  %v565 = vpow.pop %v564
  %v566 = vadd.f32 %v565, 1.0
  %v567 = vrcp.pop %v566
  %v568 = vmul.f32 1.0, %v567
  %s569 = scalar_lea.vmem %s0, 48
  %v570 = vld [vmem:[%s569] sm:$0xff]
  %v571 = vld [vmem:[%s569 + $0x8] sm:$0xff]
  %572 = vmatprep.subr.mxu0 %v51
  %573 = vmatpush1.msra.mxu0 %v50
  %574 = vmatprep.subr.mxu0 %v49
  %575 = vmatpush1.msra.mxu0 %v48
  %576 = vmatprep.subr.mxu0 %v47
  %577 = vmatpush1.msra.mxu0 %v46
  %578 = vmatprep.subr.mxu0 %v45
  %579 = vmatpush1.msra.mxu0 %v44
  %580 = vmatprep.subr.mxu0 %v43
  %581 = vmatpush1.msra.mxu0 %v42
  %582 = vmatprep.subr.mxu0 %v41
  %583 = vmatpush1.msra.mxu0 %v40
  %584 = vmatprep.subr.mxu0 %v39
  %585 = vmatpush1.msra.mxu0 %v38
  %586 = vmatprep.subr.mxu0 %v37
  %587 = vmatpush1.msra.mxu0 %v36
  %588 = vmatprep.subr.mxu0 %v35
  %589 = vmatpush1.msra.mxu0 %v34
  %590 = vmatprep.subr.mxu0 %v33
  %591 = vmatpush1.msra.mxu0 %v32
  %592 = vmatprep.subr.mxu0 %v31
  %593 = vmatpush1.msra.mxu0 %v30
  %594 = vmatprep.subr.mxu0 %v29
  %595 = vmatpush1.msra.mxu0 %v28
  %596 = vmatprep.subr.mxu0 %v27
  %597 = vmatpush1.msra.mxu0 %v26
  %598 = vmatprep.subr.mxu0 %v25
  %599 = vmatpush1.msra.mxu0 %v24
  %600 = vmatprep.subr.mxu0 %v23
  %601 = vmatpush1.msra.mxu0 %v22
  %602 = vmatprep.subr.mxu0 %v21
  %603 = vmatpush1.msra.mxu0 %v20
  %604 = vmatprep.subr.mxu0 0.0
  %605 = vmatpush2.msra.mxu0 0.0
  %606 = vmatprep.subr.mxu0 0.0
  %607 = vmatpush2.msra.mxu0 0.0
  %608 = vmatprep.subr.mxu0 0.0
  %609 = vmatpush2.msra.mxu0 0.0
  %610 = vmatprep.subr.mxu0 0.0
  %611 = vmatpush2.msra.mxu0 0.0
  %612 = vmatprep.subr.mxu0 0.0
  %613 = vmatpush2.msra.mxu0 0.0
  %614 = vmatprep.subr.mxu0 0.0
  %615 = vmatpush2.msra.mxu0 0.0
  %616 = vmatprep.subr.mxu0 0.0
  %617 = vmatpush2.msra.mxu0 0.0
  %618 = vmatprep.subr.mxu0 0.0
  %619 = vmatpush2.msra.mxu0 0.0
  %620 = vmatprep.subr.mxu0 0.0
  %621 = vmatpush2.msra.mxu0 0.0
  %622 = vmatprep.subr.mxu0 0.0
  %623 = vmatpush2.msra.mxu0 0.0
  %624 = vmatprep.subr.mxu0 0.0
  %625 = vmatpush2.msra.mxu0 0.0
  %626 = vmatprep.subr.mxu0 0.0
  %627 = vmatpush2.msra.mxu0 0.0
  %628 = vmatprep.subr.mxu0 0.0
  %629 = vmatpush2.msra.mxu0 0.0
  %630 = vmatprep.subr.mxu0 0.0
  %631 = vmatpush2.msra.mxu0 0.0
  %632 = vmatprep.subr.mxu0 0.0
  %633 = vmatpush2.msra.mxu0 0.0
  %634 = vmatprep.subr.mxu0 0.0
  %635 = vmatpush2.msra.mxu0 0.0
  %636 = vmatprep.mubr.f32.mxu0 0.0
  %637 = vmatmul.mubr.f32.gmra.mxu0 %v568
  %v638 = vpop.f32.mrf.mxu0
  %v639 = vadd.f32 %v570, %v638
  %v640 = vpop.f32.mrf.mxu0
  %v641 = vadd.f32 %v571, %v640
  %642 = vdwg.mxu0
  %v643 = vxor.u32 %v641, 2147483648
  %v644 = vmul.f32 %v643, 1.442695
  %v645 = vpow.pop %v644
  %v646 = vadd.f32 %v645, 1.0
  %v647 = vrcp.pop %v646
  %v648 = vmul.f32 1.0, %v647
  %v649 = vmul.f32 %v648, -0.995
  %v650 = vadd.f32 %v649, 1.0
  %v651 = vsub.f32 1.0, %v650
  %v652 = vmul.f32 %v651, %v490
  %v653 = vadd.f32 %v652, %v639
  %654 = vmatprep.subr.mxu0 0.0
  %655 = vmatpush1.msra.mxu0 %v67
  %656 = vmatprep.subr.mxu0 0.0
  %657 = vmatpush1.msra.mxu0 %v66
  %658 = vmatprep.subr.mxu0 0.0
  %659 = vmatpush1.msra.mxu0 %v65
  %660 = vmatprep.subr.mxu0 0.0
  %661 = vmatpush1.msra.mxu0 %v64
  %662 = vmatprep.subr.mxu0 0.0
  %663 = vmatpush1.msra.mxu0 %v63
  %664 = vmatprep.subr.mxu0 0.0
  %665 = vmatpush1.msra.mxu0 %v62
  %666 = vmatprep.subr.mxu0 0.0
  %667 = vmatpush1.msra.mxu0 %v61
  %668 = vmatprep.subr.mxu0 0.0
  %669 = vmatpush1.msra.mxu0 %v60
  %670 = vmatprep.subr.mxu0 0.0
  %671 = vmatpush1.msra.mxu0 %v59
  %672 = vmatprep.subr.mxu0 0.0
  %673 = vmatpush1.msra.mxu0 %v58
  %674 = vmatprep.subr.mxu0 0.0
  %675 = vmatpush1.msra.mxu0 %v57
  %676 = vmatprep.subr.mxu0 0.0
  %677 = vmatpush1.msra.mxu0 %v56
  %678 = vmatprep.subr.mxu0 0.0
  %679 = vmatpush1.msra.mxu0 %v55
  %680 = vmatprep.subr.mxu0 0.0
  %681 = vmatpush1.msra.mxu0 %v54
  %682 = vmatprep.subr.mxu0 0.0
  %683 = vmatpush1.msra.mxu0 %v53
  %684 = vmatprep.subr.mxu0 0.0
  %685 = vmatpush1.msra.mxu0 %v52
  %686 = vmatprep.subr.mxu0 0.0
  %687 = vmatpush2.msra.mxu0 0.0
  %688 = vmatprep.subr.mxu0 0.0
  %689 = vmatpush2.msra.mxu0 0.0
  %690 = vmatprep.subr.mxu0 0.0
  %691 = vmatpush2.msra.mxu0 0.0
  %692 = vmatprep.subr.mxu0 0.0
  %693 = vmatpush2.msra.mxu0 0.0
  %694 = vmatprep.subr.mxu0 0.0
  %695 = vmatpush2.msra.mxu0 0.0
  %696 = vmatprep.subr.mxu0 0.0
  %697 = vmatpush2.msra.mxu0 0.0
  %698 = vmatprep.subr.mxu0 0.0
  %699 = vmatpush2.msra.mxu0 0.0
  %700 = vmatprep.subr.mxu0 0.0
  %701 = vmatpush2.msra.mxu0 0.0
  %702 = vmatprep.subr.mxu0 0.0
  %703 = vmatpush2.msra.mxu0 0.0
  %704 = vmatprep.subr.mxu0 0.0
  %705 = vmatpush2.msra.mxu0 0.0
  %706 = vmatprep.subr.mxu0 0.0
  %707 = vmatpush2.msra.mxu0 0.0
  %708 = vmatprep.subr.mxu0 0.0
  %709 = vmatpush2.msra.mxu0 0.0
  %710 = vmatprep.subr.mxu0 0.0
  %711 = vmatpush2.msra.mxu0 0.0
  %712 = vmatprep.subr.mxu0 0.0
  %713 = vmatpush2.msra.mxu0 0.0
  %714 = vmatprep.subr.mxu0 0.0
  %715 = vmatpush2.msra.mxu0 0.0
  %716 = vmatprep.subr.mxu0 0.0
  %717 = vmatpush2.msra.mxu0 0.0
  %718 = vmatprep.mubr.f32.mxu0 0.0
  %719 = vmatmul.mubr.f32.gmra.mxu0 %v653
  %v720 = vpop.f32.mrf.mxu0
  %v721 = vadd.f32 %v164, %v720
  %v722 = vpop.f32.mrf.mxu0
  %723 = vdwg.mxu0
  %s724 = scalar_lea.vmem %s5, 24
  %725 = vst [vmem:[%s724] sm:$0xff] %v721
  %v726 = vxor.u32 %v653, 2147483648
  %v727 = vmul.f32 %v726, 1.442695
  %v728 = vpow.pop %v727
  %v729 = vadd.f32 %v728, 1.0
  %v730 = vrcp.pop %v729
  %v731 = vmul.f32 1.0, %v730
  %s732 = scalar_lea.vmem %s0, 64
  %v733 = vld [vmem:[%s732] sm:$0xff]
  %v734 = vld [vmem:[%s732 + $0x8] sm:$0xff]
  %735 = vmatprep.subr.mxu0 %v51
  %736 = vmatpush1.msra.mxu0 %v50
  %737 = vmatprep.subr.mxu0 %v49
  %738 = vmatpush1.msra.mxu0 %v48
  %739 = vmatprep.subr.mxu0 %v47
  %740 = vmatpush1.msra.mxu0 %v46
  %741 = vmatprep.subr.mxu0 %v45
  %742 = vmatpush1.msra.mxu0 %v44
  %743 = vmatprep.subr.mxu0 %v43
  %744 = vmatpush1.msra.mxu0 %v42
  %745 = vmatprep.subr.mxu0 %v41
  %746 = vmatpush1.msra.mxu0 %v40
  %747 = vmatprep.subr.mxu0 %v39
  %748 = vmatpush1.msra.mxu0 %v38
  %749 = vmatprep.subr.mxu0 %v37
  %750 = vmatpush1.msra.mxu0 %v36
  %751 = vmatprep.subr.mxu0 %v35
  %752 = vmatpush1.msra.mxu0 %v34
  %753 = vmatprep.subr.mxu0 %v33
  %754 = vmatpush1.msra.mxu0 %v32
  %755 = vmatprep.subr.mxu0 %v31
  %756 = vmatpush1.msra.mxu0 %v30
  %757 = vmatprep.subr.mxu0 %v29
  %758 = vmatpush1.msra.mxu0 %v28
  %759 = vmatprep.subr.mxu0 %v27
  %760 = vmatpush1.msra.mxu0 %v26
  %761 = vmatprep.subr.mxu0 %v25
  %762 = vmatpush1.msra.mxu0 %v24
  %763 = vmatprep.subr.mxu0 %v23
  %764 = vmatpush1.msra.mxu0 %v22
  %765 = vmatprep.subr.mxu0 %v21
  %766 = vmatpush1.msra.mxu0 %v20
  %767 = vmatprep.subr.mxu0 0.0
  %768 = vmatpush2.msra.mxu0 0.0
  %769 = vmatprep.subr.mxu0 0.0
  %770 = vmatpush2.msra.mxu0 0.0
  %771 = vmatprep.subr.mxu0 0.0
  %772 = vmatpush2.msra.mxu0 0.0
  %773 = vmatprep.subr.mxu0 0.0
  %774 = vmatpush2.msra.mxu0 0.0
  %775 = vmatprep.subr.mxu0 0.0
  %776 = vmatpush2.msra.mxu0 0.0
  %777 = vmatprep.subr.mxu0 0.0
  %778 = vmatpush2.msra.mxu0 0.0
  %779 = vmatprep.subr.mxu0 0.0
  %780 = vmatpush2.msra.mxu0 0.0
  %781 = vmatprep.subr.mxu0 0.0
  %782 = vmatpush2.msra.mxu0 0.0
  %783 = vmatprep.subr.mxu0 0.0
  %784 = vmatpush2.msra.mxu0 0.0
  %785 = vmatprep.subr.mxu0 0.0
  %786 = vmatpush2.msra.mxu0 0.0
  %787 = vmatprep.subr.mxu0 0.0
  %788 = vmatpush2.msra.mxu0 0.0
  %789 = vmatprep.subr.mxu0 0.0
  %790 = vmatpush2.msra.mxu0 0.0
  %791 = vmatprep.subr.mxu0 0.0
  %792 = vmatpush2.msra.mxu0 0.0
  %793 = vmatprep.subr.mxu0 0.0
  %794 = vmatpush2.msra.mxu0 0.0
  %795 = vmatprep.subr.mxu0 0.0
  %796 = vmatpush2.msra.mxu0 0.0
  %797 = vmatprep.subr.mxu0 0.0
  %798 = vmatpush2.msra.mxu0 0.0
  %799 = vmatprep.mubr.f32.mxu0 0.0
  %800 = vmatmul.mubr.f32.gmra.mxu0 %v731
  %v801 = vpop.f32.mrf.mxu0
  %v802 = vadd.f32 %v733, %v801
  %v803 = vpop.f32.mrf.mxu0
  %v804 = vadd.f32 %v734, %v803
  %805 = vdwg.mxu0
  %v806 = vxor.u32 %v804, 2147483648
  %v807 = vmul.f32 %v806, 1.442695
  %v808 = vpow.pop %v807
  %v809 = vadd.f32 %v808, 1.0
  %v810 = vrcp.pop %v809
  %v811 = vmul.f32 1.0, %v810
  %v812 = vmul.f32 %v811, -0.995
  %v813 = vadd.f32 %v812, 1.0
  %v814 = vsub.f32 1.0, %v813
  %v815 = vmul.f32 %v814, %v653
  %v816 = vadd.f32 %v815, %v802
  %817 = vmatprep.subr.mxu0 0.0
  %818 = vmatpush1.msra.mxu0 %v67
  %819 = vmatprep.subr.mxu0 0.0
  %820 = vmatpush1.msra.mxu0 %v66
  %821 = vmatprep.subr.mxu0 0.0
  %822 = vmatpush1.msra.mxu0 %v65
  %823 = vmatprep.subr.mxu0 0.0
  %824 = vmatpush1.msra.mxu0 %v64
  %825 = vmatprep.subr.mxu0 0.0
  %826 = vmatpush1.msra.mxu0 %v63
  %827 = vmatprep.subr.mxu0 0.0
  %828 = vmatpush1.msra.mxu0 %v62
  %829 = vmatprep.subr.mxu0 0.0
  %830 = vmatpush1.msra.mxu0 %v61
  %831 = vmatprep.subr.mxu0 0.0
  %832 = vmatpush1.msra.mxu0 %v60
  %833 = vmatprep.subr.mxu0 0.0
  %834 = vmatpush1.msra.mxu0 %v59
  %835 = vmatprep.subr.mxu0 0.0
  %836 = vmatpush1.msra.mxu0 %v58
  %837 = vmatprep.subr.mxu0 0.0
  %838 = vmatpush1.msra.mxu0 %v57
  %839 = vmatprep.subr.mxu0 0.0
  %840 = vmatpush1.msra.mxu0 %v56
  %841 = vmatprep.subr.mxu0 0.0
  %842 = vmatpush1.msra.mxu0 %v55
  %843 = vmatprep.subr.mxu0 0.0
  %844 = vmatpush1.msra.mxu0 %v54
  %845 = vmatprep.subr.mxu0 0.0
  %846 = vmatpush1.msra.mxu0 %v53
  %847 = vmatprep.subr.mxu0 0.0
  %848 = vmatpush1.msra.mxu0 %v52
  %849 = vmatprep.subr.mxu0 0.0
  %850 = vmatpush2.msra.mxu0 0.0
  %851 = vmatprep.subr.mxu0 0.0
  %852 = vmatpush2.msra.mxu0 0.0
  %853 = vmatprep.subr.mxu0 0.0
  %854 = vmatpush2.msra.mxu0 0.0
  %855 = vmatprep.subr.mxu0 0.0
  %856 = vmatpush2.msra.mxu0 0.0
  %857 = vmatprep.subr.mxu0 0.0
  %858 = vmatpush2.msra.mxu0 0.0
  %859 = vmatprep.subr.mxu0 0.0
  %860 = vmatpush2.msra.mxu0 0.0
  %861 = vmatprep.subr.mxu0 0.0
  %862 = vmatpush2.msra.mxu0 0.0
  %863 = vmatprep.subr.mxu0 0.0
  %864 = vmatpush2.msra.mxu0 0.0
  %865 = vmatprep.subr.mxu0 0.0
  %866 = vmatpush2.msra.mxu0 0.0
  %867 = vmatprep.subr.mxu0 0.0
  %868 = vmatpush2.msra.mxu0 0.0
  %869 = vmatprep.subr.mxu0 0.0
  %870 = vmatpush2.msra.mxu0 0.0
  %871 = vmatprep.subr.mxu0 0.0
  %872 = vmatpush2.msra.mxu0 0.0
  %873 = vmatprep.subr.mxu0 0.0
  %874 = vmatpush2.msra.mxu0 0.0
  %875 = vmatprep.subr.mxu0 0.0
  %876 = vmatpush2.msra.mxu0 0.0
  %877 = vmatprep.subr.mxu0 0.0
  %878 = vmatpush2.msra.mxu0 0.0
  %879 = vmatprep.subr.mxu0 0.0
  %880 = vmatpush2.msra.mxu0 0.0
  %881 = vmatprep.mubr.f32.mxu0 0.0
  %882 = vmatmul.mubr.f32.gmra.mxu0 %v816
  %v883 = vpop.f32.mrf.mxu0
  %v884 = vadd.f32 %v164, %v883
  %v885 = vpop.f32.mrf.mxu0
  %886 = vdwg.mxu0
  %s887 = scalar_lea.vmem %s5, 32
  %888 = vst [vmem:[%s887] sm:$0xff] %v884
  %v889 = vxor.u32 %v816, 2147483648
  %v890 = vmul.f32 %v889, 1.442695
  %v891 = vpow.pop %v890
  %v892 = vadd.f32 %v891, 1.0
  %v893 = vrcp.pop %v892
  %v894 = vmul.f32 1.0, %v893
  %s895 = scalar_lea.vmem %s0, 80
  %v896 = vld [vmem:[%s895] sm:$0xff]
  %v897 = vld [vmem:[%s895 + $0x8] sm:$0xff]
  %898 = vmatprep.subr.mxu0 %v51
  %899 = vmatpush1.msra.mxu0 %v50
  %900 = vmatprep.subr.mxu0 %v49
  %901 = vmatpush1.msra.mxu0 %v48
  %902 = vmatprep.subr.mxu0 %v47
  %903 = vmatpush1.msra.mxu0 %v46
  %904 = vmatprep.subr.mxu0 %v45
  %905 = vmatpush1.msra.mxu0 %v44
  %906 = vmatprep.subr.mxu0 %v43
  %907 = vmatpush1.msra.mxu0 %v42
  %908 = vmatprep.subr.mxu0 %v41
  %909 = vmatpush1.msra.mxu0 %v40
  %910 = vmatprep.subr.mxu0 %v39
  %911 = vmatpush1.msra.mxu0 %v38
  %912 = vmatprep.subr.mxu0 %v37
  %913 = vmatpush1.msra.mxu0 %v36
  %914 = vmatprep.subr.mxu0 %v35
  %915 = vmatpush1.msra.mxu0 %v34
  %916 = vmatprep.subr.mxu0 %v33
  %917 = vmatpush1.msra.mxu0 %v32
  %918 = vmatprep.subr.mxu0 %v31
  %919 = vmatpush1.msra.mxu0 %v30
  %920 = vmatprep.subr.mxu0 %v29
  %921 = vmatpush1.msra.mxu0 %v28
  %922 = vmatprep.subr.mxu0 %v27
  %923 = vmatpush1.msra.mxu0 %v26
  %924 = vmatprep.subr.mxu0 %v25
  %925 = vmatpush1.msra.mxu0 %v24
  %926 = vmatprep.subr.mxu0 %v23
  %927 = vmatpush1.msra.mxu0 %v22
  %928 = vmatprep.subr.mxu0 %v21
  %929 = vmatpush1.msra.mxu0 %v20
  %930 = vmatprep.subr.mxu0 0.0
  %931 = vmatpush2.msra.mxu0 0.0
  %932 = vmatprep.subr.mxu0 0.0
  %933 = vmatpush2.msra.mxu0 0.0
  %934 = vmatprep.subr.mxu0 0.0
  %935 = vmatpush2.msra.mxu0 0.0
  %936 = vmatprep.subr.mxu0 0.0
  %937 = vmatpush2.msra.mxu0 0.0
  %938 = vmatprep.subr.mxu0 0.0
  %939 = vmatpush2.msra.mxu0 0.0
  %940 = vmatprep.subr.mxu0 0.0
  %941 = vmatpush2.msra.mxu0 0.0
  %942 = vmatprep.subr.mxu0 0.0
  %943 = vmatpush2.msra.mxu0 0.0
  %944 = vmatprep.subr.mxu0 0.0
  %945 = vmatpush2.msra.mxu0 0.0
  %946 = vmatprep.subr.mxu0 0.0
  %947 = vmatpush2.msra.mxu0 0.0
  %948 = vmatprep.subr.mxu0 0.0
  %949 = vmatpush2.msra.mxu0 0.0
  %950 = vmatprep.subr.mxu0 0.0
  %951 = vmatpush2.msra.mxu0 0.0
  %952 = vmatprep.subr.mxu0 0.0
  %953 = vmatpush2.msra.mxu0 0.0
  %954 = vmatprep.subr.mxu0 0.0
  %955 = vmatpush2.msra.mxu0 0.0
  %956 = vmatprep.subr.mxu0 0.0
  %957 = vmatpush2.msra.mxu0 0.0
  %958 = vmatprep.subr.mxu0 0.0
  %959 = vmatpush2.msra.mxu0 0.0
  %960 = vmatprep.subr.mxu0 0.0
  %961 = vmatpush2.msra.mxu0 0.0
  %962 = vmatprep.mubr.f32.mxu0 0.0
  %963 = vmatmul.mubr.f32.gmra.mxu0 %v894
  %v964 = vpop.f32.mrf.mxu0
  %v965 = vadd.f32 %v896, %v964
  %v966 = vpop.f32.mrf.mxu0
  %v967 = vadd.f32 %v897, %v966
  %968 = vdwg.mxu0
  %v969 = vxor.u32 %v967, 2147483648
  %v970 = vmul.f32 %v969, 1.442695
  %v971 = vpow.pop %v970
  %v972 = vadd.f32 %v971, 1.0
  %v973 = vrcp.pop %v972
  %v974 = vmul.f32 1.0, %v973
  %v975 = vmul.f32 %v974, -0.995
  %v976 = vadd.f32 %v975, 1.0
  %v977 = vsub.f32 1.0, %v976
  %v978 = vmul.f32 %v977, %v816
  %v979 = vadd.f32 %v978, %v965
  %980 = vmatprep.subr.mxu0 0.0
  %981 = vmatpush1.msra.mxu0 %v67
  %982 = vmatprep.subr.mxu0 0.0
  %983 = vmatpush1.msra.mxu0 %v66
  %984 = vmatprep.subr.mxu0 0.0
  %985 = vmatpush1.msra.mxu0 %v65
  %986 = vmatprep.subr.mxu0 0.0
  %987 = vmatpush1.msra.mxu0 %v64
  %988 = vmatprep.subr.mxu0 0.0
  %989 = vmatpush1.msra.mxu0 %v63
  %990 = vmatprep.subr.mxu0 0.0
  %991 = vmatpush1.msra.mxu0 %v62
  %992 = vmatprep.subr.mxu0 0.0
  %993 = vmatpush1.msra.mxu0 %v61
  %994 = vmatprep.subr.mxu0 0.0
  %995 = vmatpush1.msra.mxu0 %v60
  %996 = vmatprep.subr.mxu0 0.0
  %997 = vmatpush1.msra.mxu0 %v59
  %998 = vmatprep.subr.mxu0 0.0
  %999 = vmatpush1.msra.mxu0 %v58
  %1000 = vmatprep.subr.mxu0 0.0
  %1001 = vmatpush1.msra.mxu0 %v57
  %1002 = vmatprep.subr.mxu0 0.0
  %1003 = vmatpush1.msra.mxu0 %v56
  %1004 = vmatprep.subr.mxu0 0.0
  %1005 = vmatpush1.msra.mxu0 %v55
  %1006 = vmatprep.subr.mxu0 0.0
  %1007 = vmatpush1.msra.mxu0 %v54
  %1008 = vmatprep.subr.mxu0 0.0
  %1009 = vmatpush1.msra.mxu0 %v53
  %1010 = vmatprep.subr.mxu0 0.0
  %1011 = vmatpush1.msra.mxu0 %v52
  %1012 = vmatprep.subr.mxu0 0.0
  %1013 = vmatpush2.msra.mxu0 0.0
  %1014 = vmatprep.subr.mxu0 0.0
  %1015 = vmatpush2.msra.mxu0 0.0
  %1016 = vmatprep.subr.mxu0 0.0
  %1017 = vmatpush2.msra.mxu0 0.0
  %1018 = vmatprep.subr.mxu0 0.0
  %1019 = vmatpush2.msra.mxu0 0.0
  %1020 = vmatprep.subr.mxu0 0.0
  %1021 = vmatpush2.msra.mxu0 0.0
  %1022 = vmatprep.subr.mxu0 0.0
  %1023 = vmatpush2.msra.mxu0 0.0
  %1024 = vmatprep.subr.mxu0 0.0
  %1025 = vmatpush2.msra.mxu0 0.0
  %1026 = vmatprep.subr.mxu0 0.0
  %1027 = vmatpush2.msra.mxu0 0.0
  %1028 = vmatprep.subr.mxu0 0.0
  %1029 = vmatpush2.msra.mxu0 0.0
  %1030 = vmatprep.subr.mxu0 0.0
  %1031 = vmatpush2.msra.mxu0 0.0
  %1032 = vmatprep.subr.mxu0 0.0
  %1033 = vmatpush2.msra.mxu0 0.0
  %1034 = vmatprep.subr.mxu0 0.0
  %1035 = vmatpush2.msra.mxu0 0.0
  %1036 = vmatprep.subr.mxu0 0.0
  %1037 = vmatpush2.msra.mxu0 0.0
  %1038 = vmatprep.subr.mxu0 0.0
  %1039 = vmatpush2.msra.mxu0 0.0
  %1040 = vmatprep.subr.mxu0 0.0
  %1041 = vmatpush2.msra.mxu0 0.0
  %1042 = vmatprep.subr.mxu0 0.0
  %1043 = vmatpush2.msra.mxu0 0.0
  %1044 = vmatprep.mubr.f32.mxu0 0.0
  %1045 = vmatmul.mubr.f32.gmra.mxu0 %v979
  %v1046 = vpop.f32.mrf.mxu0
  %v1047 = vadd.f32 %v164, %v1046
  %v1048 = vpop.f32.mrf.mxu0
  %1049 = vdwg.mxu0
  %s1050 = scalar_lea.vmem %s5, 40
  %1051 = vst [vmem:[%s1050] sm:$0xff] %v1047
  %v1052 = vxor.u32 %v979, 2147483648
  %v1053 = vmul.f32 %v1052, 1.442695
  %v1054 = vpow.pop %v1053
  %v1055 = vadd.f32 %v1054, 1.0
  %v1056 = vrcp.pop %v1055
  %v1057 = vmul.f32 1.0, %v1056
  %s1058 = scalar_lea.vmem %s0, 96
  %v1059 = vld [vmem:[%s1058] sm:$0xff]
  %v1060 = vld [vmem:[%s1058 + $0x8] sm:$0xff]
  %1061 = vmatprep.subr.mxu0 %v51
  %1062 = vmatpush1.msra.mxu0 %v50
  %1063 = vmatprep.subr.mxu0 %v49
  %1064 = vmatpush1.msra.mxu0 %v48
  %1065 = vmatprep.subr.mxu0 %v47
  %1066 = vmatpush1.msra.mxu0 %v46
  %1067 = vmatprep.subr.mxu0 %v45
  %1068 = vmatpush1.msra.mxu0 %v44
  %1069 = vmatprep.subr.mxu0 %v43
  %1070 = vmatpush1.msra.mxu0 %v42
  %1071 = vmatprep.subr.mxu0 %v41
  %1072 = vmatpush1.msra.mxu0 %v40
  %1073 = vmatprep.subr.mxu0 %v39
  %1074 = vmatpush1.msra.mxu0 %v38
  %1075 = vmatprep.subr.mxu0 %v37
  %1076 = vmatpush1.msra.mxu0 %v36
  %1077 = vmatprep.subr.mxu0 %v35
  %1078 = vmatpush1.msra.mxu0 %v34
  %1079 = vmatprep.subr.mxu0 %v33
  %1080 = vmatpush1.msra.mxu0 %v32
  %1081 = vmatprep.subr.mxu0 %v31
  %1082 = vmatpush1.msra.mxu0 %v30
  %1083 = vmatprep.subr.mxu0 %v29
  %1084 = vmatpush1.msra.mxu0 %v28
  %1085 = vmatprep.subr.mxu0 %v27
  %1086 = vmatpush1.msra.mxu0 %v26
  %1087 = vmatprep.subr.mxu0 %v25
  %1088 = vmatpush1.msra.mxu0 %v24
  %1089 = vmatprep.subr.mxu0 %v23
  %1090 = vmatpush1.msra.mxu0 %v22
  %1091 = vmatprep.subr.mxu0 %v21
  %1092 = vmatpush1.msra.mxu0 %v20
  %1093 = vmatprep.subr.mxu0 0.0
  %1094 = vmatpush2.msra.mxu0 0.0
  %1095 = vmatprep.subr.mxu0 0.0
  %1096 = vmatpush2.msra.mxu0 0.0
  %1097 = vmatprep.subr.mxu0 0.0
  %1098 = vmatpush2.msra.mxu0 0.0
  %1099 = vmatprep.subr.mxu0 0.0
  %1100 = vmatpush2.msra.mxu0 0.0
  %1101 = vmatprep.subr.mxu0 0.0
  %1102 = vmatpush2.msra.mxu0 0.0
  %1103 = vmatprep.subr.mxu0 0.0
  %1104 = vmatpush2.msra.mxu0 0.0
  %1105 = vmatprep.subr.mxu0 0.0
  %1106 = vmatpush2.msra.mxu0 0.0
  %1107 = vmatprep.subr.mxu0 0.0
  %1108 = vmatpush2.msra.mxu0 0.0
  %1109 = vmatprep.subr.mxu0 0.0
  %1110 = vmatpush2.msra.mxu0 0.0
  %1111 = vmatprep.subr.mxu0 0.0
  %1112 = vmatpush2.msra.mxu0 0.0
  %1113 = vmatprep.subr.mxu0 0.0
  %1114 = vmatpush2.msra.mxu0 0.0
  %1115 = vmatprep.subr.mxu0 0.0
  %1116 = vmatpush2.msra.mxu0 0.0
  %1117 = vmatprep.subr.mxu0 0.0
  %1118 = vmatpush2.msra.mxu0 0.0
  %1119 = vmatprep.subr.mxu0 0.0
  %1120 = vmatpush2.msra.mxu0 0.0
  %1121 = vmatprep.subr.mxu0 0.0
  %1122 = vmatpush2.msra.mxu0 0.0
  %1123 = vmatprep.subr.mxu0 0.0
  %1124 = vmatpush2.msra.mxu0 0.0
  %1125 = vmatprep.mubr.f32.mxu0 0.0
  %1126 = vmatmul.mubr.f32.gmra.mxu0 %v1057
  %v1127 = vpop.f32.mrf.mxu0
  %v1128 = vadd.f32 %v1059, %v1127
  %v1129 = vpop.f32.mrf.mxu0
  %v1130 = vadd.f32 %v1060, %v1129
  %1131 = vdwg.mxu0
  %v1132 = vxor.u32 %v1130, 2147483648
  %v1133 = vmul.f32 %v1132, 1.442695
  %v1134 = vpow.pop %v1133
  %v1135 = vadd.f32 %v1134, 1.0
  %v1136 = vrcp.pop %v1135
  %v1137 = vmul.f32 1.0, %v1136
  %v1138 = vmul.f32 %v1137, -0.995
  %v1139 = vadd.f32 %v1138, 1.0
  %v1140 = vsub.f32 1.0, %v1139
  %v1141 = vmul.f32 %v1140, %v979
  %v1142 = vadd.f32 %v1141, %v1128
  %1143 = vmatprep.subr.mxu0 0.0
  %1144 = vmatpush1.msra.mxu0 %v67
  %1145 = vmatprep.subr.mxu0 0.0
  %1146 = vmatpush1.msra.mxu0 %v66
  %1147 = vmatprep.subr.mxu0 0.0
  %1148 = vmatpush1.msra.mxu0 %v65
  %1149 = vmatprep.subr.mxu0 0.0
  %1150 = vmatpush1.msra.mxu0 %v64
  %1151 = vmatprep.subr.mxu0 0.0
  %1152 = vmatpush1.msra.mxu0 %v63
  %1153 = vmatprep.subr.mxu0 0.0
  %1154 = vmatpush1.msra.mxu0 %v62
  %1155 = vmatprep.subr.mxu0 0.0
  %1156 = vmatpush1.msra.mxu0 %v61
  %1157 = vmatprep.subr.mxu0 0.0
  %1158 = vmatpush1.msra.mxu0 %v60
  %1159 = vmatprep.subr.mxu0 0.0
  %1160 = vmatpush1.msra.mxu0 %v59
  %1161 = vmatprep.subr.mxu0 0.0
  %1162 = vmatpush1.msra.mxu0 %v58
  %1163 = vmatprep.subr.mxu0 0.0
  %1164 = vmatpush1.msra.mxu0 %v57
  %1165 = vmatprep.subr.mxu0 0.0
  %1166 = vmatpush1.msra.mxu0 %v56
  %1167 = vmatprep.subr.mxu0 0.0
  %1168 = vmatpush1.msra.mxu0 %v55
  %1169 = vmatprep.subr.mxu0 0.0
  %1170 = vmatpush1.msra.mxu0 %v54
  %1171 = vmatprep.subr.mxu0 0.0
  %1172 = vmatpush1.msra.mxu0 %v53
  %1173 = vmatprep.subr.mxu0 0.0
  %1174 = vmatpush1.msra.mxu0 %v52
  %1175 = vmatprep.subr.mxu0 0.0
  %1176 = vmatpush2.msra.mxu0 0.0
  %1177 = vmatprep.subr.mxu0 0.0
  %1178 = vmatpush2.msra.mxu0 0.0
  %1179 = vmatprep.subr.mxu0 0.0
  %1180 = vmatpush2.msra.mxu0 0.0
  %1181 = vmatprep.subr.mxu0 0.0
  %1182 = vmatpush2.msra.mxu0 0.0
  %1183 = vmatprep.subr.mxu0 0.0
  %1184 = vmatpush2.msra.mxu0 0.0
  %1185 = vmatprep.subr.mxu0 0.0
  %1186 = vmatpush2.msra.mxu0 0.0
  %1187 = vmatprep.subr.mxu0 0.0
  %1188 = vmatpush2.msra.mxu0 0.0
  %1189 = vmatprep.subr.mxu0 0.0
  %1190 = vmatpush2.msra.mxu0 0.0
  %1191 = vmatprep.subr.mxu0 0.0
  %1192 = vmatpush2.msra.mxu0 0.0
  %1193 = vmatprep.subr.mxu0 0.0
  %1194 = vmatpush2.msra.mxu0 0.0
  %1195 = vmatprep.subr.mxu0 0.0
  %1196 = vmatpush2.msra.mxu0 0.0
  %1197 = vmatprep.subr.mxu0 0.0
  %1198 = vmatpush2.msra.mxu0 0.0
  %1199 = vmatprep.subr.mxu0 0.0
  %1200 = vmatpush2.msra.mxu0 0.0
  %1201 = vmatprep.subr.mxu0 0.0
  %1202 = vmatpush2.msra.mxu0 0.0
  %1203 = vmatprep.subr.mxu0 0.0
  %1204 = vmatpush2.msra.mxu0 0.0
  %1205 = vmatprep.subr.mxu0 0.0
  %1206 = vmatpush2.msra.mxu0 0.0
  %1207 = vmatprep.mubr.f32.mxu0 0.0
  %1208 = vmatmul.mubr.f32.gmra.mxu0 %v1142
  %v1209 = vpop.f32.mrf.mxu0
  %v1210 = vadd.f32 %v164, %v1209
  %v1211 = vpop.f32.mrf.mxu0
  %1212 = vdwg.mxu0
  %s1213 = scalar_lea.vmem %s5, 48
  %1214 = vst [vmem:[%s1213] sm:$0xff] %v1210
  %v1215 = vxor.u32 %v1142, 2147483648
  %v1216 = vmul.f32 %v1215, 1.442695
  %v1217 = vpow.pop %v1216
  %v1218 = vadd.f32 %v1217, 1.0
  %v1219 = vrcp.pop %v1218
  %v1220 = vmul.f32 1.0, %v1219
  %s1221 = scalar_lea.vmem %s0, 112
  %v1222 = vld [vmem:[%s1221] sm:$0xff]
  %v1223 = vld [vmem:[%s1221 + $0x8] sm:$0xff]
  %1224 = vmatprep.subr.mxu0 %v51
  %1225 = vmatpush1.msra.mxu0 %v50
  %1226 = vmatprep.subr.mxu0 %v49
  %1227 = vmatpush1.msra.mxu0 %v48
  %1228 = vmatprep.subr.mxu0 %v47
  %1229 = vmatpush1.msra.mxu0 %v46
  %1230 = vmatprep.subr.mxu0 %v45
  %1231 = vmatpush1.msra.mxu0 %v44
  %1232 = vmatprep.subr.mxu0 %v43
  %1233 = vmatpush1.msra.mxu0 %v42
  %1234 = vmatprep.subr.mxu0 %v41
  %1235 = vmatpush1.msra.mxu0 %v40
  %1236 = vmatprep.subr.mxu0 %v39
  %1237 = vmatpush1.msra.mxu0 %v38
  %1238 = vmatprep.subr.mxu0 %v37
  %1239 = vmatpush1.msra.mxu0 %v36
  %1240 = vmatprep.subr.mxu0 %v35
  %1241 = vmatpush1.msra.mxu0 %v34
  %1242 = vmatprep.subr.mxu0 %v33
  %1243 = vmatpush1.msra.mxu0 %v32
  %1244 = vmatprep.subr.mxu0 %v31
  %1245 = vmatpush1.msra.mxu0 %v30
  %1246 = vmatprep.subr.mxu0 %v29
  %1247 = vmatpush1.msra.mxu0 %v28
  %1248 = vmatprep.subr.mxu0 %v27
  %1249 = vmatpush1.msra.mxu0 %v26
  %1250 = vmatprep.subr.mxu0 %v25
  %1251 = vmatpush1.msra.mxu0 %v24
  %1252 = vmatprep.subr.mxu0 %v23
  %1253 = vmatpush1.msra.mxu0 %v22
  %1254 = vmatprep.subr.mxu0 %v21
  %1255 = vmatpush1.msra.mxu0 %v20
  %1256 = vmatprep.subr.mxu0 0.0
  %1257 = vmatpush2.msra.mxu0 0.0
  %1258 = vmatprep.subr.mxu0 0.0
  %1259 = vmatpush2.msra.mxu0 0.0
  %1260 = vmatprep.subr.mxu0 0.0
  %1261 = vmatpush2.msra.mxu0 0.0
  %1262 = vmatprep.subr.mxu0 0.0
  %1263 = vmatpush2.msra.mxu0 0.0
  %1264 = vmatprep.subr.mxu0 0.0
  %1265 = vmatpush2.msra.mxu0 0.0
  %1266 = vmatprep.subr.mxu0 0.0
  %1267 = vmatpush2.msra.mxu0 0.0
  %1268 = vmatprep.subr.mxu0 0.0
  %1269 = vmatpush2.msra.mxu0 0.0
  %1270 = vmatprep.subr.mxu0 0.0
  %1271 = vmatpush2.msra.mxu0 0.0
  %1272 = vmatprep.subr.mxu0 0.0
  %1273 = vmatpush2.msra.mxu0 0.0
  %1274 = vmatprep.subr.mxu0 0.0
  %1275 = vmatpush2.msra.mxu0 0.0
  %1276 = vmatprep.subr.mxu0 0.0
  %1277 = vmatpush2.msra.mxu0 0.0
  %1278 = vmatprep.subr.mxu0 0.0
  %1279 = vmatpush2.msra.mxu0 0.0
  %1280 = vmatprep.subr.mxu0 0.0
  %1281 = vmatpush2.msra.mxu0 0.0
  %1282 = vmatprep.subr.mxu0 0.0
  %1283 = vmatpush2.msra.mxu0 0.0
  %1284 = vmatprep.subr.mxu0 0.0
  %1285 = vmatpush2.msra.mxu0 0.0
  %1286 = vmatprep.subr.mxu0 0.0
  %1287 = vmatpush2.msra.mxu0 0.0
  %1288 = vmatprep.mubr.f32.mxu0 0.0
  %1289 = vmatmul.mubr.f32.gmra.mxu0 %v1220
  %v1290 = vpop.f32.mrf.mxu0
  %v1291 = vadd.f32 %v1222, %v1290
  %v1292 = vpop.f32.mrf.mxu0
  %v1293 = vadd.f32 %v1223, %v1292
  %1294 = vdwg.mxu0
  %v1295 = vxor.u32 %v1293, 2147483648
  %v1296 = vmul.f32 %v1295, 1.442695
  %v1297 = vpow.pop %v1296
  %v1298 = vadd.f32 %v1297, 1.0
  %v1299 = vrcp.pop %v1298
  %v1300 = vmul.f32 1.0, %v1299
  %v1301 = vmul.f32 %v1300, -0.995
  %v1302 = vadd.f32 %v1301, 1.0
  %v1303 = vsub.f32 1.0, %v1302
  %v1304 = vmul.f32 %v1303, %v1142
  %v1305 = vadd.f32 %v1304, %v1291
  %1306 = vmatprep.subr.mxu0 0.0
  %1307 = vmatpush1.msra.mxu0 %v67
  %1308 = vmatprep.subr.mxu0 0.0
  %1309 = vmatpush1.msra.mxu0 %v66
  %1310 = vmatprep.subr.mxu0 0.0
  %1311 = vmatpush1.msra.mxu0 %v65
  %1312 = vmatprep.subr.mxu0 0.0
  %1313 = vmatpush1.msra.mxu0 %v64
  %1314 = vmatprep.subr.mxu0 0.0
  %1315 = vmatpush1.msra.mxu0 %v63
  %1316 = vmatprep.subr.mxu0 0.0
  %1317 = vmatpush1.msra.mxu0 %v62
  %1318 = vmatprep.subr.mxu0 0.0
  %1319 = vmatpush1.msra.mxu0 %v61
  %1320 = vmatprep.subr.mxu0 0.0
  %1321 = vmatpush1.msra.mxu0 %v60
  %1322 = vmatprep.subr.mxu0 0.0
  %1323 = vmatpush1.msra.mxu0 %v59
  %1324 = vmatprep.subr.mxu0 0.0
  %1325 = vmatpush1.msra.mxu0 %v58
  %1326 = vmatprep.subr.mxu0 0.0
  %1327 = vmatpush1.msra.mxu0 %v57
  %1328 = vmatprep.subr.mxu0 0.0
  %1329 = vmatpush1.msra.mxu0 %v56
  %1330 = vmatprep.subr.mxu0 0.0
  %1331 = vmatpush1.msra.mxu0 %v55
  %1332 = vmatprep.subr.mxu0 0.0
  %1333 = vmatpush1.msra.mxu0 %v54
  %1334 = vmatprep.subr.mxu0 0.0
  %1335 = vmatpush1.msra.mxu0 %v53
  %1336 = vmatprep.subr.mxu0 0.0
  %1337 = vmatpush1.msra.mxu0 %v52
  %1338 = vmatprep.subr.mxu0 0.0
  %1339 = vmatpush2.msra.mxu0 0.0
  %1340 = vmatprep.subr.mxu0 0.0
  %1341 = vmatpush2.msra.mxu0 0.0
  %1342 = vmatprep.subr.mxu0 0.0
  %1343 = vmatpush2.msra.mxu0 0.0
  %1344 = vmatprep.subr.mxu0 0.0
  %1345 = vmatpush2.msra.mxu0 0.0
  %1346 = vmatprep.subr.mxu0 0.0
  %1347 = vmatpush2.msra.mxu0 0.0
  %1348 = vmatprep.subr.mxu0 0.0
  %1349 = vmatpush2.msra.mxu0 0.0
  %1350 = vmatprep.subr.mxu0 0.0
  %1351 = vmatpush2.msra.mxu0 0.0
  %1352 = vmatprep.subr.mxu0 0.0
  %1353 = vmatpush2.msra.mxu0 0.0
  %1354 = vmatprep.subr.mxu0 0.0
  %1355 = vmatpush2.msra.mxu0 0.0
  %1356 = vmatprep.subr.mxu0 0.0
  %1357 = vmatpush2.msra.mxu0 0.0
  %1358 = vmatprep.subr.mxu0 0.0
  %1359 = vmatpush2.msra.mxu0 0.0
  %1360 = vmatprep.subr.mxu0 0.0
  %1361 = vmatpush2.msra.mxu0 0.0
  %1362 = vmatprep.subr.mxu0 0.0
  %1363 = vmatpush2.msra.mxu0 0.0
  %1364 = vmatprep.subr.mxu0 0.0
  %1365 = vmatpush2.msra.mxu0 0.0
  %1366 = vmatprep.subr.mxu0 0.0
  %1367 = vmatpush2.msra.mxu0 0.0
  %1368 = vmatprep.subr.mxu0 0.0
  %1369 = vmatpush2.msra.mxu0 0.0
  %1370 = vmatprep.mubr.f32.mxu0 0.0
  %1371 = vmatmul.mubr.f32.gmra.mxu0 %v1305
  %v1372 = vpop.f32.mrf.mxu0
  %v1373 = vadd.f32 %v164, %v1372
  %v1374 = vpop.f32.mrf.mxu0
  %1375 = vdwg.mxu0
  %s1376 = scalar_lea.vmem %s5, 56
  %1377 = vst [vmem:[%s1376] sm:$0xff] %v1373
  %v1378 = vxor.u32 %v1305, 2147483648
  %v1379 = vmul.f32 %v1378, 1.442695
  %v1380 = vpow.pop %v1379
  %v1381 = vadd.f32 %v1380, 1.0
  %v1382 = vrcp.pop %v1381
  %v1383 = vmul.f32 1.0, %v1382
  %s1384 = scalar_lea.vmem %s0, 128
  %v1385 = vld [vmem:[%s1384] sm:$0xff]
  %v1386 = vld [vmem:[%s1384 + $0x8] sm:$0xff]
  %1387 = vmatprep.subr.mxu0 %v51
  %1388 = vmatpush1.msra.mxu0 %v50
  %1389 = vmatprep.subr.mxu0 %v49
  %1390 = vmatpush1.msra.mxu0 %v48
  %1391 = vmatprep.subr.mxu0 %v47
  %1392 = vmatpush1.msra.mxu0 %v46
  %1393 = vmatprep.subr.mxu0 %v45
  %1394 = vmatpush1.msra.mxu0 %v44
  %1395 = vmatprep.subr.mxu0 %v43
  %1396 = vmatpush1.msra.mxu0 %v42
  %1397 = vmatprep.subr.mxu0 %v41
  %1398 = vmatpush1.msra.mxu0 %v40
  %1399 = vmatprep.subr.mxu0 %v39
  %1400 = vmatpush1.msra.mxu0 %v38
  %1401 = vmatprep.subr.mxu0 %v37
  %1402 = vmatpush1.msra.mxu0 %v36
  %1403 = vmatprep.subr.mxu0 %v35
  %1404 = vmatpush1.msra.mxu0 %v34
  %1405 = vmatprep.subr.mxu0 %v33
  %1406 = vmatpush1.msra.mxu0 %v32
  %1407 = vmatprep.subr.mxu0 %v31
  %1408 = vmatpush1.msra.mxu0 %v30
  %1409 = vmatprep.subr.mxu0 %v29
  %1410 = vmatpush1.msra.mxu0 %v28
  %1411 = vmatprep.subr.mxu0 %v27
  %1412 = vmatpush1.msra.mxu0 %v26
  %1413 = vmatprep.subr.mxu0 %v25
  %1414 = vmatpush1.msra.mxu0 %v24
  %1415 = vmatprep.subr.mxu0 %v23
  %1416 = vmatpush1.msra.mxu0 %v22
  %1417 = vmatprep.subr.mxu0 %v21
  %1418 = vmatpush1.msra.mxu0 %v20
  %1419 = vmatprep.subr.mxu0 0.0
  %1420 = vmatpush2.msra.mxu0 0.0
  %1421 = vmatprep.subr.mxu0 0.0
  %1422 = vmatpush2.msra.mxu0 0.0
  %1423 = vmatprep.subr.mxu0 0.0
  %1424 = vmatpush2.msra.mxu0 0.0
  %1425 = vmatprep.subr.mxu0 0.0
  %1426 = vmatpush2.msra.mxu0 0.0
  %1427 = vmatprep.subr.mxu0 0.0
  %1428 = vmatpush2.msra.mxu0 0.0
  %1429 = vmatprep.subr.mxu0 0.0
  %1430 = vmatpush2.msra.mxu0 0.0
  %1431 = vmatprep.subr.mxu0 0.0
  %1432 = vmatpush2.msra.mxu0 0.0
  %1433 = vmatprep.subr.mxu0 0.0
  %1434 = vmatpush2.msra.mxu0 0.0
  %1435 = vmatprep.subr.mxu0 0.0
  %1436 = vmatpush2.msra.mxu0 0.0
  %1437 = vmatprep.subr.mxu0 0.0
  %1438 = vmatpush2.msra.mxu0 0.0
  %1439 = vmatprep.subr.mxu0 0.0
  %1440 = vmatpush2.msra.mxu0 0.0
  %1441 = vmatprep.subr.mxu0 0.0
  %1442 = vmatpush2.msra.mxu0 0.0
  %1443 = vmatprep.subr.mxu0 0.0
  %1444 = vmatpush2.msra.mxu0 0.0
  %1445 = vmatprep.subr.mxu0 0.0
  %1446 = vmatpush2.msra.mxu0 0.0
  %1447 = vmatprep.subr.mxu0 0.0
  %1448 = vmatpush2.msra.mxu0 0.0
  %1449 = vmatprep.subr.mxu0 0.0
  %1450 = vmatpush2.msra.mxu0 0.0
  %1451 = vmatprep.mubr.f32.mxu0 0.0
  %1452 = vmatmul.mubr.f32.gmra.mxu0 %v1383
  %v1453 = vpop.f32.mrf.mxu0
  %v1454 = vadd.f32 %v1385, %v1453
  %v1455 = vpop.f32.mrf.mxu0
  %v1456 = vadd.f32 %v1386, %v1455
  %1457 = vdwg.mxu0
  %v1458 = vxor.u32 %v1456, 2147483648
  %v1459 = vmul.f32 %v1458, 1.442695
  %v1460 = vpow.pop %v1459
  %v1461 = vadd.f32 %v1460, 1.0
  %v1462 = vrcp.pop %v1461
  %v1463 = vmul.f32 1.0, %v1462
  %v1464 = vmul.f32 %v1463, -0.995
  %v1465 = vadd.f32 %v1464, 1.0
  %v1466 = vsub.f32 1.0, %v1465
  %v1467 = vmul.f32 %v1466, %v1305
  %v1468 = vadd.f32 %v1467, %v1454
  %1469 = vmatprep.subr.mxu0 0.0
  %1470 = vmatpush1.msra.mxu0 %v67
  %1471 = vmatprep.subr.mxu0 0.0
  %1472 = vmatpush1.msra.mxu0 %v66
  %1473 = vmatprep.subr.mxu0 0.0
  %1474 = vmatpush1.msra.mxu0 %v65
  %1475 = vmatprep.subr.mxu0 0.0
  %1476 = vmatpush1.msra.mxu0 %v64
  %1477 = vmatprep.subr.mxu0 0.0
  %1478 = vmatpush1.msra.mxu0 %v63
  %1479 = vmatprep.subr.mxu0 0.0
  %1480 = vmatpush1.msra.mxu0 %v62
  %1481 = vmatprep.subr.mxu0 0.0
  %1482 = vmatpush1.msra.mxu0 %v61
  %1483 = vmatprep.subr.mxu0 0.0
  %1484 = vmatpush1.msra.mxu0 %v60
  %1485 = vmatprep.subr.mxu0 0.0
  %1486 = vmatpush1.msra.mxu0 %v59
  %1487 = vmatprep.subr.mxu0 0.0
  %1488 = vmatpush1.msra.mxu0 %v58
  %1489 = vmatprep.subr.mxu0 0.0
  %1490 = vmatpush1.msra.mxu0 %v57
  %1491 = vmatprep.subr.mxu0 0.0
  %1492 = vmatpush1.msra.mxu0 %v56
  %1493 = vmatprep.subr.mxu0 0.0
  %1494 = vmatpush1.msra.mxu0 %v55
  %1495 = vmatprep.subr.mxu0 0.0
  %1496 = vmatpush1.msra.mxu0 %v54
  %1497 = vmatprep.subr.mxu0 0.0
  %1498 = vmatpush1.msra.mxu0 %v53
  %1499 = vmatprep.subr.mxu0 0.0
  %1500 = vmatpush1.msra.mxu0 %v52
  %1501 = vmatprep.subr.mxu0 0.0
  %1502 = vmatpush2.msra.mxu0 0.0
  %1503 = vmatprep.subr.mxu0 0.0
  %1504 = vmatpush2.msra.mxu0 0.0
  %1505 = vmatprep.subr.mxu0 0.0
  %1506 = vmatpush2.msra.mxu0 0.0
  %1507 = vmatprep.subr.mxu0 0.0
  %1508 = vmatpush2.msra.mxu0 0.0
  %1509 = vmatprep.subr.mxu0 0.0
  %1510 = vmatpush2.msra.mxu0 0.0
  %1511 = vmatprep.subr.mxu0 0.0
  %1512 = vmatpush2.msra.mxu0 0.0
  %1513 = vmatprep.subr.mxu0 0.0
  %1514 = vmatpush2.msra.mxu0 0.0
  %1515 = vmatprep.subr.mxu0 0.0
  %1516 = vmatpush2.msra.mxu0 0.0
  %1517 = vmatprep.subr.mxu0 0.0
  %1518 = vmatpush2.msra.mxu0 0.0
  %1519 = vmatprep.subr.mxu0 0.0
  %1520 = vmatpush2.msra.mxu0 0.0
  %1521 = vmatprep.subr.mxu0 0.0
  %1522 = vmatpush2.msra.mxu0 0.0
  %1523 = vmatprep.subr.mxu0 0.0
  %1524 = vmatpush2.msra.mxu0 0.0
  %1525 = vmatprep.subr.mxu0 0.0
  %1526 = vmatpush2.msra.mxu0 0.0
  %1527 = vmatprep.subr.mxu0 0.0
  %1528 = vmatpush2.msra.mxu0 0.0
  %1529 = vmatprep.subr.mxu0 0.0
  %1530 = vmatpush2.msra.mxu0 0.0
  %1531 = vmatprep.subr.mxu0 0.0
  %1532 = vmatpush2.msra.mxu0 0.0
  %1533 = vmatprep.mubr.f32.mxu0 0.0
  %1534 = vmatmul.mubr.f32.gmra.mxu0 %v1468
  %v1535 = vpop.f32.mrf.mxu0
  %v1536 = vadd.f32 %v164, %v1535
  %v1537 = vpop.f32.mrf.mxu0
  %1538 = vdwg.mxu0
  %s1539 = scalar_lea.vmem %s5, 64
  %1540 = vst [vmem:[%s1539] sm:$0xff] %v1536
  %v1541 = vxor.u32 %v1468, 2147483648
  %v1542 = vmul.f32 %v1541, 1.442695
  %v1543 = vpow.pop %v1542
  %v1544 = vadd.f32 %v1543, 1.0
  %v1545 = vrcp.pop %v1544
  %v1546 = vmul.f32 1.0, %v1545
  %s1547 = scalar_lea.vmem %s0, 144
  %v1548 = vld [vmem:[%s1547] sm:$0xff]
  %v1549 = vld [vmem:[%s1547 + $0x8] sm:$0xff]
  %1550 = vmatprep.subr.mxu0 %v51
  %1551 = vmatpush1.msra.mxu0 %v50
  %1552 = vmatprep.subr.mxu0 %v49
  %1553 = vmatpush1.msra.mxu0 %v48
  %1554 = vmatprep.subr.mxu0 %v47
  %1555 = vmatpush1.msra.mxu0 %v46
  %1556 = vmatprep.subr.mxu0 %v45
  %1557 = vmatpush1.msra.mxu0 %v44
  %1558 = vmatprep.subr.mxu0 %v43
  %1559 = vmatpush1.msra.mxu0 %v42
  %1560 = vmatprep.subr.mxu0 %v41
  %1561 = vmatpush1.msra.mxu0 %v40
  %1562 = vmatprep.subr.mxu0 %v39
  %1563 = vmatpush1.msra.mxu0 %v38
  %1564 = vmatprep.subr.mxu0 %v37
  %1565 = vmatpush1.msra.mxu0 %v36
  %1566 = vmatprep.subr.mxu0 %v35
  %1567 = vmatpush1.msra.mxu0 %v34
  %1568 = vmatprep.subr.mxu0 %v33
  %1569 = vmatpush1.msra.mxu0 %v32
  %1570 = vmatprep.subr.mxu0 %v31
  %1571 = vmatpush1.msra.mxu0 %v30
  %1572 = vmatprep.subr.mxu0 %v29
  %1573 = vmatpush1.msra.mxu0 %v28
  %1574 = vmatprep.subr.mxu0 %v27
  %1575 = vmatpush1.msra.mxu0 %v26
  %1576 = vmatprep.subr.mxu0 %v25
  %1577 = vmatpush1.msra.mxu0 %v24
  %1578 = vmatprep.subr.mxu0 %v23
  %1579 = vmatpush1.msra.mxu0 %v22
  %1580 = vmatprep.subr.mxu0 %v21
  %1581 = vmatpush1.msra.mxu0 %v20
  %1582 = vmatprep.subr.mxu0 0.0
  %1583 = vmatpush2.msra.mxu0 0.0
  %1584 = vmatprep.subr.mxu0 0.0
  %1585 = vmatpush2.msra.mxu0 0.0
  %1586 = vmatprep.subr.mxu0 0.0
  %1587 = vmatpush2.msra.mxu0 0.0
  %1588 = vmatprep.subr.mxu0 0.0
  %1589 = vmatpush2.msra.mxu0 0.0
  %1590 = vmatprep.subr.mxu0 0.0
  %1591 = vmatpush2.msra.mxu0 0.0
  %1592 = vmatprep.subr.mxu0 0.0
  %1593 = vmatpush2.msra.mxu0 0.0
  %1594 = vmatprep.subr.mxu0 0.0
  %1595 = vmatpush2.msra.mxu0 0.0
  %1596 = vmatprep.subr.mxu0 0.0
  %1597 = vmatpush2.msra.mxu0 0.0
  %1598 = vmatprep.subr.mxu0 0.0
  %1599 = vmatpush2.msra.mxu0 0.0
  %1600 = vmatprep.subr.mxu0 0.0
  %1601 = vmatpush2.msra.mxu0 0.0
  %1602 = vmatprep.subr.mxu0 0.0
  %1603 = vmatpush2.msra.mxu0 0.0
  %1604 = vmatprep.subr.mxu0 0.0
  %1605 = vmatpush2.msra.mxu0 0.0
  %1606 = vmatprep.subr.mxu0 0.0
  %1607 = vmatpush2.msra.mxu0 0.0
  %1608 = vmatprep.subr.mxu0 0.0
  %1609 = vmatpush2.msra.mxu0 0.0
  %1610 = vmatprep.subr.mxu0 0.0
  %1611 = vmatpush2.msra.mxu0 0.0
  %1612 = vmatprep.subr.mxu0 0.0
  %1613 = vmatpush2.msra.mxu0 0.0
  %1614 = vmatprep.mubr.f32.mxu0 0.0
  %1615 = vmatmul.mubr.f32.gmra.mxu0 %v1546
  %v1616 = vpop.f32.mrf.mxu0
  %v1617 = vadd.f32 %v1548, %v1616
  %v1618 = vpop.f32.mrf.mxu0
  %v1619 = vadd.f32 %v1549, %v1618
  %1620 = vdwg.mxu0
  %v1621 = vxor.u32 %v1619, 2147483648
  %v1622 = vmul.f32 %v1621, 1.442695
  %v1623 = vpow.pop %v1622
  %v1624 = vadd.f32 %v1623, 1.0
  %v1625 = vrcp.pop %v1624
  %v1626 = vmul.f32 1.0, %v1625
  %v1627 = vmul.f32 %v1626, -0.995
  %v1628 = vadd.f32 %v1627, 1.0
  %v1629 = vsub.f32 1.0, %v1628
  %v1630 = vmul.f32 %v1629, %v1468
  %v1631 = vadd.f32 %v1630, %v1617
  %1632 = vmatprep.subr.mxu0 0.0
  %1633 = vmatpush1.msra.mxu0 %v67
  %1634 = vmatprep.subr.mxu0 0.0
  %1635 = vmatpush1.msra.mxu0 %v66
  %1636 = vmatprep.subr.mxu0 0.0
  %1637 = vmatpush1.msra.mxu0 %v65
  %1638 = vmatprep.subr.mxu0 0.0
  %1639 = vmatpush1.msra.mxu0 %v64
  %1640 = vmatprep.subr.mxu0 0.0
  %1641 = vmatpush1.msra.mxu0 %v63
  %1642 = vmatprep.subr.mxu0 0.0
  %1643 = vmatpush1.msra.mxu0 %v62
  %1644 = vmatprep.subr.mxu0 0.0
  %1645 = vmatpush1.msra.mxu0 %v61
  %1646 = vmatprep.subr.mxu0 0.0
  %1647 = vmatpush1.msra.mxu0 %v60
  %1648 = vmatprep.subr.mxu0 0.0
  %1649 = vmatpush1.msra.mxu0 %v59
  %1650 = vmatprep.subr.mxu0 0.0
  %1651 = vmatpush1.msra.mxu0 %v58
  %1652 = vmatprep.subr.mxu0 0.0
  %1653 = vmatpush1.msra.mxu0 %v57
  %1654 = vmatprep.subr.mxu0 0.0
  %1655 = vmatpush1.msra.mxu0 %v56
  %1656 = vmatprep.subr.mxu0 0.0
  %1657 = vmatpush1.msra.mxu0 %v55
  %1658 = vmatprep.subr.mxu0 0.0
  %1659 = vmatpush1.msra.mxu0 %v54
  %1660 = vmatprep.subr.mxu0 0.0
  %1661 = vmatpush1.msra.mxu0 %v53
  %1662 = vmatprep.subr.mxu0 0.0
  %1663 = vmatpush1.msra.mxu0 %v52
  %1664 = vmatprep.subr.mxu0 0.0
  %1665 = vmatpush2.msra.mxu0 0.0
  %1666 = vmatprep.subr.mxu0 0.0
  %1667 = vmatpush2.msra.mxu0 0.0
  %1668 = vmatprep.subr.mxu0 0.0
  %1669 = vmatpush2.msra.mxu0 0.0
  %1670 = vmatprep.subr.mxu0 0.0
  %1671 = vmatpush2.msra.mxu0 0.0
  %1672 = vmatprep.subr.mxu0 0.0
  %1673 = vmatpush2.msra.mxu0 0.0
  %1674 = vmatprep.subr.mxu0 0.0
  %1675 = vmatpush2.msra.mxu0 0.0
  %1676 = vmatprep.subr.mxu0 0.0
  %1677 = vmatpush2.msra.mxu0 0.0
  %1678 = vmatprep.subr.mxu0 0.0
  %1679 = vmatpush2.msra.mxu0 0.0
  %1680 = vmatprep.subr.mxu0 0.0
  %1681 = vmatpush2.msra.mxu0 0.0
  %1682 = vmatprep.subr.mxu0 0.0
  %1683 = vmatpush2.msra.mxu0 0.0
  %1684 = vmatprep.subr.mxu0 0.0
  %1685 = vmatpush2.msra.mxu0 0.0
  %1686 = vmatprep.subr.mxu0 0.0
  %1687 = vmatpush2.msra.mxu0 0.0
  %1688 = vmatprep.subr.mxu0 0.0
  %1689 = vmatpush2.msra.mxu0 0.0
  %1690 = vmatprep.subr.mxu0 0.0
  %1691 = vmatpush2.msra.mxu0 0.0
  %1692 = vmatprep.subr.mxu0 0.0
  %1693 = vmatpush2.msra.mxu0 0.0
  %1694 = vmatprep.subr.mxu0 0.0
  %1695 = vmatpush2.msra.mxu0 0.0
  %1696 = vmatprep.mubr.f32.mxu0 0.0
  %1697 = vmatmul.mubr.f32.gmra.mxu0 %v1631
  %v1698 = vpop.f32.mrf.mxu0
  %v1699 = vadd.f32 %v164, %v1698
  %v1700 = vpop.f32.mrf.mxu0
  %1701 = vdwg.mxu0
  %s1702 = scalar_lea.vmem %s5, 72
  %1703 = vst [vmem:[%s1702] sm:$0xff] %v1699
  %v1704 = vxor.u32 %v1631, 2147483648
  %v1705 = vmul.f32 %v1704, 1.442695
  %v1706 = vpow.pop %v1705
  %v1707 = vadd.f32 %v1706, 1.0
  %v1708 = vrcp.pop %v1707
  %v1709 = vmul.f32 1.0, %v1708
  %s1710 = scalar_lea.vmem %s0, 160
  %v1711 = vld [vmem:[%s1710] sm:$0xff]
  %v1712 = vld [vmem:[%s1710 + $0x8] sm:$0xff]
  %1713 = vmatprep.subr.mxu0 %v51
  %1714 = vmatpush1.msra.mxu0 %v50
  %1715 = vmatprep.subr.mxu0 %v49
  %1716 = vmatpush1.msra.mxu0 %v48
  %1717 = vmatprep.subr.mxu0 %v47
  %1718 = vmatpush1.msra.mxu0 %v46
  %1719 = vmatprep.subr.mxu0 %v45
  %1720 = vmatpush1.msra.mxu0 %v44
  %1721 = vmatprep.subr.mxu0 %v43
  %1722 = vmatpush1.msra.mxu0 %v42
  %1723 = vmatprep.subr.mxu0 %v41
  %1724 = vmatpush1.msra.mxu0 %v40
  %1725 = vmatprep.subr.mxu0 %v39
  %1726 = vmatpush1.msra.mxu0 %v38
  %1727 = vmatprep.subr.mxu0 %v37
  %1728 = vmatpush1.msra.mxu0 %v36
  %1729 = vmatprep.subr.mxu0 %v35
  %1730 = vmatpush1.msra.mxu0 %v34
  %1731 = vmatprep.subr.mxu0 %v33
  %1732 = vmatpush1.msra.mxu0 %v32
  %1733 = vmatprep.subr.mxu0 %v31
  %1734 = vmatpush1.msra.mxu0 %v30
  %1735 = vmatprep.subr.mxu0 %v29
  %1736 = vmatpush1.msra.mxu0 %v28
  %1737 = vmatprep.subr.mxu0 %v27
  %1738 = vmatpush1.msra.mxu0 %v26
  %1739 = vmatprep.subr.mxu0 %v25
  %1740 = vmatpush1.msra.mxu0 %v24
  %1741 = vmatprep.subr.mxu0 %v23
  %1742 = vmatpush1.msra.mxu0 %v22
  %1743 = vmatprep.subr.mxu0 %v21
  %1744 = vmatpush1.msra.mxu0 %v20
  %1745 = vmatprep.subr.mxu0 0.0
  %1746 = vmatpush2.msra.mxu0 0.0
  %1747 = vmatprep.subr.mxu0 0.0
  %1748 = vmatpush2.msra.mxu0 0.0
  %1749 = vmatprep.subr.mxu0 0.0
  %1750 = vmatpush2.msra.mxu0 0.0
  %1751 = vmatprep.subr.mxu0 0.0
  %1752 = vmatpush2.msra.mxu0 0.0
  %1753 = vmatprep.subr.mxu0 0.0
  %1754 = vmatpush2.msra.mxu0 0.0
  %1755 = vmatprep.subr.mxu0 0.0
  %1756 = vmatpush2.msra.mxu0 0.0
  %1757 = vmatprep.subr.mxu0 0.0
  %1758 = vmatpush2.msra.mxu0 0.0
  %1759 = vmatprep.subr.mxu0 0.0
  %1760 = vmatpush2.msra.mxu0 0.0
  %1761 = vmatprep.subr.mxu0 0.0
  %1762 = vmatpush2.msra.mxu0 0.0
  %1763 = vmatprep.subr.mxu0 0.0
  %1764 = vmatpush2.msra.mxu0 0.0
  %1765 = vmatprep.subr.mxu0 0.0
  %1766 = vmatpush2.msra.mxu0 0.0
  %1767 = vmatprep.subr.mxu0 0.0
  %1768 = vmatpush2.msra.mxu0 0.0
  %1769 = vmatprep.subr.mxu0 0.0
  %1770 = vmatpush2.msra.mxu0 0.0
  %1771 = vmatprep.subr.mxu0 0.0
  %1772 = vmatpush2.msra.mxu0 0.0
  %1773 = vmatprep.subr.mxu0 0.0
  %1774 = vmatpush2.msra.mxu0 0.0
  %1775 = vmatprep.subr.mxu0 0.0
  %1776 = vmatpush2.msra.mxu0 0.0
  %1777 = vmatprep.mubr.f32.mxu0 0.0
  %1778 = vmatmul.mubr.f32.gmra.mxu0 %v1709
  %v1779 = vpop.f32.mrf.mxu0
  %v1780 = vadd.f32 %v1711, %v1779
  %v1781 = vpop.f32.mrf.mxu0
  %v1782 = vadd.f32 %v1712, %v1781
  %1783 = vdwg.mxu0
  %v1784 = vxor.u32 %v1782, 2147483648
  %v1785 = vmul.f32 %v1784, 1.442695
  %v1786 = vpow.pop %v1785
  %v1787 = vadd.f32 %v1786, 1.0
  %v1788 = vrcp.pop %v1787
  %v1789 = vmul.f32 1.0, %v1788
  %v1790 = vmul.f32 %v1789, -0.995
  %v1791 = vadd.f32 %v1790, 1.0
  %v1792 = vsub.f32 1.0, %v1791
  %v1793 = vmul.f32 %v1792, %v1631
  %v1794 = vadd.f32 %v1793, %v1780
  %1795 = vmatprep.subr.mxu0 0.0
  %1796 = vmatpush1.msra.mxu0 %v67
  %1797 = vmatprep.subr.mxu0 0.0
  %1798 = vmatpush1.msra.mxu0 %v66
  %1799 = vmatprep.subr.mxu0 0.0
  %1800 = vmatpush1.msra.mxu0 %v65
  %1801 = vmatprep.subr.mxu0 0.0
  %1802 = vmatpush1.msra.mxu0 %v64
  %1803 = vmatprep.subr.mxu0 0.0
  %1804 = vmatpush1.msra.mxu0 %v63
  %1805 = vmatprep.subr.mxu0 0.0
  %1806 = vmatpush1.msra.mxu0 %v62
  %1807 = vmatprep.subr.mxu0 0.0
  %1808 = vmatpush1.msra.mxu0 %v61
  %1809 = vmatprep.subr.mxu0 0.0
  %1810 = vmatpush1.msra.mxu0 %v60
  %1811 = vmatprep.subr.mxu0 0.0
  %1812 = vmatpush1.msra.mxu0 %v59
  %1813 = vmatprep.subr.mxu0 0.0
  %1814 = vmatpush1.msra.mxu0 %v58
  %1815 = vmatprep.subr.mxu0 0.0
  %1816 = vmatpush1.msra.mxu0 %v57
  %1817 = vmatprep.subr.mxu0 0.0
  %1818 = vmatpush1.msra.mxu0 %v56
  %1819 = vmatprep.subr.mxu0 0.0
  %1820 = vmatpush1.msra.mxu0 %v55
  %1821 = vmatprep.subr.mxu0 0.0
  %1822 = vmatpush1.msra.mxu0 %v54
  %1823 = vmatprep.subr.mxu0 0.0
  %1824 = vmatpush1.msra.mxu0 %v53
  %1825 = vmatprep.subr.mxu0 0.0
  %1826 = vmatpush1.msra.mxu0 %v52
  %1827 = vmatprep.subr.mxu0 0.0
  %1828 = vmatpush2.msra.mxu0 0.0
  %1829 = vmatprep.subr.mxu0 0.0
  %1830 = vmatpush2.msra.mxu0 0.0
  %1831 = vmatprep.subr.mxu0 0.0
  %1832 = vmatpush2.msra.mxu0 0.0
  %1833 = vmatprep.subr.mxu0 0.0
  %1834 = vmatpush2.msra.mxu0 0.0
  %1835 = vmatprep.subr.mxu0 0.0
  %1836 = vmatpush2.msra.mxu0 0.0
  %1837 = vmatprep.subr.mxu0 0.0
  %1838 = vmatpush2.msra.mxu0 0.0
  %1839 = vmatprep.subr.mxu0 0.0
  %1840 = vmatpush2.msra.mxu0 0.0
  %1841 = vmatprep.subr.mxu0 0.0
  %1842 = vmatpush2.msra.mxu0 0.0
  %1843 = vmatprep.subr.mxu0 0.0
  %1844 = vmatpush2.msra.mxu0 0.0
  %1845 = vmatprep.subr.mxu0 0.0
  %1846 = vmatpush2.msra.mxu0 0.0
  %1847 = vmatprep.subr.mxu0 0.0
  %1848 = vmatpush2.msra.mxu0 0.0
  %1849 = vmatprep.subr.mxu0 0.0
  %1850 = vmatpush2.msra.mxu0 0.0
  %1851 = vmatprep.subr.mxu0 0.0
  %1852 = vmatpush2.msra.mxu0 0.0
  %1853 = vmatprep.subr.mxu0 0.0
  %1854 = vmatpush2.msra.mxu0 0.0
  %1855 = vmatprep.subr.mxu0 0.0
  %1856 = vmatpush2.msra.mxu0 0.0
  %1857 = vmatprep.subr.mxu0 0.0
  %1858 = vmatpush2.msra.mxu0 0.0
  %1859 = vmatprep.mubr.f32.mxu0 0.0
  %1860 = vmatmul.mubr.f32.gmra.mxu0 %v1794
  %v1861 = vpop.f32.mrf.mxu0
  %v1862 = vadd.f32 %v164, %v1861
  %v1863 = vpop.f32.mrf.mxu0
  %1864 = vdwg.mxu0
  %s1865 = scalar_lea.vmem %s5, 80
  %1866 = vst [vmem:[%s1865] sm:$0xff] %v1862
  %v1867 = vxor.u32 %v1794, 2147483648
  %v1868 = vmul.f32 %v1867, 1.442695
  %v1869 = vpow.pop %v1868
  %v1870 = vadd.f32 %v1869, 1.0
  %v1871 = vrcp.pop %v1870
  %v1872 = vmul.f32 1.0, %v1871
  %s1873 = scalar_lea.vmem %s0, 176
  %v1874 = vld [vmem:[%s1873] sm:$0xff]
  %v1875 = vld [vmem:[%s1873 + $0x8] sm:$0xff]
  %1876 = vmatprep.subr.mxu0 %v51
  %1877 = vmatpush1.msra.mxu0 %v50
  %1878 = vmatprep.subr.mxu0 %v49
  %1879 = vmatpush1.msra.mxu0 %v48
  %1880 = vmatprep.subr.mxu0 %v47
  %1881 = vmatpush1.msra.mxu0 %v46
  %1882 = vmatprep.subr.mxu0 %v45
  %1883 = vmatpush1.msra.mxu0 %v44
  %1884 = vmatprep.subr.mxu0 %v43
  %1885 = vmatpush1.msra.mxu0 %v42
  %1886 = vmatprep.subr.mxu0 %v41
  %1887 = vmatpush1.msra.mxu0 %v40
  %1888 = vmatprep.subr.mxu0 %v39
  %1889 = vmatpush1.msra.mxu0 %v38
  %1890 = vmatprep.subr.mxu0 %v37
  %1891 = vmatpush1.msra.mxu0 %v36
  %1892 = vmatprep.subr.mxu0 %v35
  %1893 = vmatpush1.msra.mxu0 %v34
  %1894 = vmatprep.subr.mxu0 %v33
  %1895 = vmatpush1.msra.mxu0 %v32
  %1896 = vmatprep.subr.mxu0 %v31
  %1897 = vmatpush1.msra.mxu0 %v30
  %1898 = vmatprep.subr.mxu0 %v29
  %1899 = vmatpush1.msra.mxu0 %v28
  %1900 = vmatprep.subr.mxu0 %v27
  %1901 = vmatpush1.msra.mxu0 %v26
  %1902 = vmatprep.subr.mxu0 %v25
  %1903 = vmatpush1.msra.mxu0 %v24
  %1904 = vmatprep.subr.mxu0 %v23
  %1905 = vmatpush1.msra.mxu0 %v22
  %1906 = vmatprep.subr.mxu0 %v21
  %1907 = vmatpush1.msra.mxu0 %v20
  %1908 = vmatprep.subr.mxu0 0.0
  %1909 = vmatpush2.msra.mxu0 0.0
  %1910 = vmatprep.subr.mxu0 0.0
  %1911 = vmatpush2.msra.mxu0 0.0
  %1912 = vmatprep.subr.mxu0 0.0
  %1913 = vmatpush2.msra.mxu0 0.0
  %1914 = vmatprep.subr.mxu0 0.0
  %1915 = vmatpush2.msra.mxu0 0.0
  %1916 = vmatprep.subr.mxu0 0.0
  %1917 = vmatpush2.msra.mxu0 0.0
  %1918 = vmatprep.subr.mxu0 0.0
  %1919 = vmatpush2.msra.mxu0 0.0
  %1920 = vmatprep.subr.mxu0 0.0
  %1921 = vmatpush2.msra.mxu0 0.0
  %1922 = vmatprep.subr.mxu0 0.0
  %1923 = vmatpush2.msra.mxu0 0.0
  %1924 = vmatprep.subr.mxu0 0.0
  %1925 = vmatpush2.msra.mxu0 0.0
  %1926 = vmatprep.subr.mxu0 0.0
  %1927 = vmatpush2.msra.mxu0 0.0
  %1928 = vmatprep.subr.mxu0 0.0
  %1929 = vmatpush2.msra.mxu0 0.0
  %1930 = vmatprep.subr.mxu0 0.0
  %1931 = vmatpush2.msra.mxu0 0.0
  %1932 = vmatprep.subr.mxu0 0.0
  %1933 = vmatpush2.msra.mxu0 0.0
  %1934 = vmatprep.subr.mxu0 0.0
  %1935 = vmatpush2.msra.mxu0 0.0
  %1936 = vmatprep.subr.mxu0 0.0
  %1937 = vmatpush2.msra.mxu0 0.0
  %1938 = vmatprep.subr.mxu0 0.0
  %1939 = vmatpush2.msra.mxu0 0.0
  %1940 = vmatprep.mubr.f32.mxu0 0.0
  %1941 = vmatmul.mubr.f32.gmra.mxu0 %v1872
  %v1942 = vpop.f32.mrf.mxu0
  %v1943 = vadd.f32 %v1874, %v1942
  %v1944 = vpop.f32.mrf.mxu0
  %v1945 = vadd.f32 %v1875, %v1944
  %1946 = vdwg.mxu0
  %v1947 = vxor.u32 %v1945, 2147483648
  %v1948 = vmul.f32 %v1947, 1.442695
  %v1949 = vpow.pop %v1948
  %v1950 = vadd.f32 %v1949, 1.0
  %v1951 = vrcp.pop %v1950
  %v1952 = vmul.f32 1.0, %v1951
  %v1953 = vmul.f32 %v1952, -0.995
  %v1954 = vadd.f32 %v1953, 1.0
  %v1955 = vsub.f32 1.0, %v1954
  %v1956 = vmul.f32 %v1955, %v1794
  %v1957 = vadd.f32 %v1956, %v1943
  %1958 = vmatprep.subr.mxu0 0.0
  %1959 = vmatpush1.msra.mxu0 %v67
  %1960 = vmatprep.subr.mxu0 0.0
  %1961 = vmatpush1.msra.mxu0 %v66
  %1962 = vmatprep.subr.mxu0 0.0
  %1963 = vmatpush1.msra.mxu0 %v65
  %1964 = vmatprep.subr.mxu0 0.0
  %1965 = vmatpush1.msra.mxu0 %v64
  %1966 = vmatprep.subr.mxu0 0.0
  %1967 = vmatpush1.msra.mxu0 %v63
  %1968 = vmatprep.subr.mxu0 0.0
  %1969 = vmatpush1.msra.mxu0 %v62
  %1970 = vmatprep.subr.mxu0 0.0
  %1971 = vmatpush1.msra.mxu0 %v61
  %1972 = vmatprep.subr.mxu0 0.0
  %1973 = vmatpush1.msra.mxu0 %v60
  %1974 = vmatprep.subr.mxu0 0.0
  %1975 = vmatpush1.msra.mxu0 %v59
  %1976 = vmatprep.subr.mxu0 0.0
  %1977 = vmatpush1.msra.mxu0 %v58
  %1978 = vmatprep.subr.mxu0 0.0
  %1979 = vmatpush1.msra.mxu0 %v57
  %1980 = vmatprep.subr.mxu0 0.0
  %1981 = vmatpush1.msra.mxu0 %v56
  %1982 = vmatprep.subr.mxu0 0.0
  %1983 = vmatpush1.msra.mxu0 %v55
  %1984 = vmatprep.subr.mxu0 0.0
  %1985 = vmatpush1.msra.mxu0 %v54
  %1986 = vmatprep.subr.mxu0 0.0
  %1987 = vmatpush1.msra.mxu0 %v53
  %1988 = vmatprep.subr.mxu0 0.0
  %1989 = vmatpush1.msra.mxu0 %v52
  %1990 = vmatprep.subr.mxu0 0.0
  %1991 = vmatpush2.msra.mxu0 0.0
  %1992 = vmatprep.subr.mxu0 0.0
  %1993 = vmatpush2.msra.mxu0 0.0
  %1994 = vmatprep.subr.mxu0 0.0
  %1995 = vmatpush2.msra.mxu0 0.0
  %1996 = vmatprep.subr.mxu0 0.0
  %1997 = vmatpush2.msra.mxu0 0.0
  %1998 = vmatprep.subr.mxu0 0.0
  %1999 = vmatpush2.msra.mxu0 0.0
  %2000 = vmatprep.subr.mxu0 0.0
  %2001 = vmatpush2.msra.mxu0 0.0
  %2002 = vmatprep.subr.mxu0 0.0
  %2003 = vmatpush2.msra.mxu0 0.0
  %2004 = vmatprep.subr.mxu0 0.0
  %2005 = vmatpush2.msra.mxu0 0.0
  %2006 = vmatprep.subr.mxu0 0.0
  %2007 = vmatpush2.msra.mxu0 0.0
  %2008 = vmatprep.subr.mxu0 0.0
  %2009 = vmatpush2.msra.mxu0 0.0
  %2010 = vmatprep.subr.mxu0 0.0
  %2011 = vmatpush2.msra.mxu0 0.0
  %2012 = vmatprep.subr.mxu0 0.0
  %2013 = vmatpush2.msra.mxu0 0.0
  %2014 = vmatprep.subr.mxu0 0.0
  %2015 = vmatpush2.msra.mxu0 0.0
  %2016 = vmatprep.subr.mxu0 0.0
  %2017 = vmatpush2.msra.mxu0 0.0
  %2018 = vmatprep.subr.mxu0 0.0
  %2019 = vmatpush2.msra.mxu0 0.0
  %2020 = vmatprep.subr.mxu0 0.0
  %2021 = vmatpush2.msra.mxu0 0.0
  %2022 = vmatprep.mubr.f32.mxu0 0.0
  %2023 = vmatmul.mubr.f32.gmra.mxu0 %v1957
  %v2024 = vpop.f32.mrf.mxu0
  %v2025 = vadd.f32 %v164, %v2024
  %v2026 = vpop.f32.mrf.mxu0
  %2027 = vdwg.mxu0
  %s2028 = scalar_lea.vmem %s5, 88
  %2029 = vst [vmem:[%s2028] sm:$0xff] %v2025
  %v2030 = vxor.u32 %v1957, 2147483648
  %v2031 = vmul.f32 %v2030, 1.442695
  %v2032 = vpow.pop %v2031
  %v2033 = vadd.f32 %v2032, 1.0
  %v2034 = vrcp.pop %v2033
  %v2035 = vmul.f32 1.0, %v2034
  %s2036 = scalar_lea.vmem %s0, 192
  %v2037 = vld [vmem:[%s2036] sm:$0xff]
  %v2038 = vld [vmem:[%s2036 + $0x8] sm:$0xff]
  %2039 = vmatprep.subr.mxu0 %v51
  %2040 = vmatpush1.msra.mxu0 %v50
  %2041 = vmatprep.subr.mxu0 %v49
  %2042 = vmatpush1.msra.mxu0 %v48
  %2043 = vmatprep.subr.mxu0 %v47
  %2044 = vmatpush1.msra.mxu0 %v46
  %2045 = vmatprep.subr.mxu0 %v45
  %2046 = vmatpush1.msra.mxu0 %v44
  %2047 = vmatprep.subr.mxu0 %v43
  %2048 = vmatpush1.msra.mxu0 %v42
  %2049 = vmatprep.subr.mxu0 %v41
  %2050 = vmatpush1.msra.mxu0 %v40
  %2051 = vmatprep.subr.mxu0 %v39
  %2052 = vmatpush1.msra.mxu0 %v38
  %2053 = vmatprep.subr.mxu0 %v37
  %2054 = vmatpush1.msra.mxu0 %v36
  %2055 = vmatprep.subr.mxu0 %v35
  %2056 = vmatpush1.msra.mxu0 %v34
  %2057 = vmatprep.subr.mxu0 %v33
  %2058 = vmatpush1.msra.mxu0 %v32
  %2059 = vmatprep.subr.mxu0 %v31
  %2060 = vmatpush1.msra.mxu0 %v30
  %2061 = vmatprep.subr.mxu0 %v29
  %2062 = vmatpush1.msra.mxu0 %v28
  %2063 = vmatprep.subr.mxu0 %v27
  %2064 = vmatpush1.msra.mxu0 %v26
  %2065 = vmatprep.subr.mxu0 %v25
  %2066 = vmatpush1.msra.mxu0 %v24
  %2067 = vmatprep.subr.mxu0 %v23
  %2068 = vmatpush1.msra.mxu0 %v22
  %2069 = vmatprep.subr.mxu0 %v21
  %2070 = vmatpush1.msra.mxu0 %v20
  %2071 = vmatprep.subr.mxu0 0.0
  %2072 = vmatpush2.msra.mxu0 0.0
  %2073 = vmatprep.subr.mxu0 0.0
  %2074 = vmatpush2.msra.mxu0 0.0
  %2075 = vmatprep.subr.mxu0 0.0
  %2076 = vmatpush2.msra.mxu0 0.0
  %2077 = vmatprep.subr.mxu0 0.0
  %2078 = vmatpush2.msra.mxu0 0.0
  %2079 = vmatprep.subr.mxu0 0.0
  %2080 = vmatpush2.msra.mxu0 0.0
  %2081 = vmatprep.subr.mxu0 0.0
  %2082 = vmatpush2.msra.mxu0 0.0
  %2083 = vmatprep.subr.mxu0 0.0
  %2084 = vmatpush2.msra.mxu0 0.0
  %2085 = vmatprep.subr.mxu0 0.0
  %2086 = vmatpush2.msra.mxu0 0.0
  %2087 = vmatprep.subr.mxu0 0.0
  %2088 = vmatpush2.msra.mxu0 0.0
  %2089 = vmatprep.subr.mxu0 0.0
  %2090 = vmatpush2.msra.mxu0 0.0
  %2091 = vmatprep.subr.mxu0 0.0
  %2092 = vmatpush2.msra.mxu0 0.0
  %2093 = vmatprep.subr.mxu0 0.0
  %2094 = vmatpush2.msra.mxu0 0.0
  %2095 = vmatprep.subr.mxu0 0.0
  %2096 = vmatpush2.msra.mxu0 0.0
  %2097 = vmatprep.subr.mxu0 0.0
  %2098 = vmatpush2.msra.mxu0 0.0
  %2099 = vmatprep.subr.mxu0 0.0
  %2100 = vmatpush2.msra.mxu0 0.0
  %2101 = vmatprep.subr.mxu0 0.0
  %2102 = vmatpush2.msra.mxu0 0.0
  %2103 = vmatprep.mubr.f32.mxu0 0.0
  %2104 = vmatmul.mubr.f32.gmra.mxu0 %v2035
  %v2105 = vpop.f32.mrf.mxu0
  %v2106 = vadd.f32 %v2037, %v2105
  %v2107 = vpop.f32.mrf.mxu0
  %v2108 = vadd.f32 %v2038, %v2107
  %2109 = vdwg.mxu0
  %v2110 = vxor.u32 %v2108, 2147483648
  %v2111 = vmul.f32 %v2110, 1.442695
  %v2112 = vpow.pop %v2111
  %v2113 = vadd.f32 %v2112, 1.0
  %v2114 = vrcp.pop %v2113
  %v2115 = vmul.f32 1.0, %v2114
  %v2116 = vmul.f32 %v2115, -0.995
  %v2117 = vadd.f32 %v2116, 1.0
  %v2118 = vsub.f32 1.0, %v2117
  %v2119 = vmul.f32 %v2118, %v1957
  %v2120 = vadd.f32 %v2119, %v2106
  %2121 = vmatprep.subr.mxu0 0.0
  %2122 = vmatpush1.msra.mxu0 %v67
  %2123 = vmatprep.subr.mxu0 0.0
  %2124 = vmatpush1.msra.mxu0 %v66
  %2125 = vmatprep.subr.mxu0 0.0
  %2126 = vmatpush1.msra.mxu0 %v65
  %2127 = vmatprep.subr.mxu0 0.0
  %2128 = vmatpush1.msra.mxu0 %v64
  %2129 = vmatprep.subr.mxu0 0.0
  %2130 = vmatpush1.msra.mxu0 %v63
  %2131 = vmatprep.subr.mxu0 0.0
  %2132 = vmatpush1.msra.mxu0 %v62
  %2133 = vmatprep.subr.mxu0 0.0
  %2134 = vmatpush1.msra.mxu0 %v61
  %2135 = vmatprep.subr.mxu0 0.0
  %2136 = vmatpush1.msra.mxu0 %v60
  %2137 = vmatprep.subr.mxu0 0.0
  %2138 = vmatpush1.msra.mxu0 %v59
  %2139 = vmatprep.subr.mxu0 0.0
  %2140 = vmatpush1.msra.mxu0 %v58
  %2141 = vmatprep.subr.mxu0 0.0
  %2142 = vmatpush1.msra.mxu0 %v57
  %2143 = vmatprep.subr.mxu0 0.0
  %2144 = vmatpush1.msra.mxu0 %v56
  %2145 = vmatprep.subr.mxu0 0.0
  %2146 = vmatpush1.msra.mxu0 %v55
  %2147 = vmatprep.subr.mxu0 0.0
  %2148 = vmatpush1.msra.mxu0 %v54
  %2149 = vmatprep.subr.mxu0 0.0
  %2150 = vmatpush1.msra.mxu0 %v53
  %2151 = vmatprep.subr.mxu0 0.0
  %2152 = vmatpush1.msra.mxu0 %v52
  %2153 = vmatprep.subr.mxu0 0.0
  %2154 = vmatpush2.msra.mxu0 0.0
  %2155 = vmatprep.subr.mxu0 0.0
  %2156 = vmatpush2.msra.mxu0 0.0
  %2157 = vmatprep.subr.mxu0 0.0
  %2158 = vmatpush2.msra.mxu0 0.0
  %2159 = vmatprep.subr.mxu0 0.0
  %2160 = vmatpush2.msra.mxu0 0.0
  %2161 = vmatprep.subr.mxu0 0.0
  %2162 = vmatpush2.msra.mxu0 0.0
  %2163 = vmatprep.subr.mxu0 0.0
  %2164 = vmatpush2.msra.mxu0 0.0
  %2165 = vmatprep.subr.mxu0 0.0
  %2166 = vmatpush2.msra.mxu0 0.0
  %2167 = vmatprep.subr.mxu0 0.0
  %2168 = vmatpush2.msra.mxu0 0.0
  %2169 = vmatprep.subr.mxu0 0.0
  %2170 = vmatpush2.msra.mxu0 0.0
  %2171 = vmatprep.subr.mxu0 0.0
  %2172 = vmatpush2.msra.mxu0 0.0
  %2173 = vmatprep.subr.mxu0 0.0
  %2174 = vmatpush2.msra.mxu0 0.0
  %2175 = vmatprep.subr.mxu0 0.0
  %2176 = vmatpush2.msra.mxu0 0.0
  %2177 = vmatprep.subr.mxu0 0.0
  %2178 = vmatpush2.msra.mxu0 0.0
  %2179 = vmatprep.subr.mxu0 0.0
  %2180 = vmatpush2.msra.mxu0 0.0
  %2181 = vmatprep.subr.mxu0 0.0
  %2182 = vmatpush2.msra.mxu0 0.0
  %2183 = vmatprep.subr.mxu0 0.0
  %2184 = vmatpush2.msra.mxu0 0.0
  %2185 = vmatprep.mubr.f32.mxu0 0.0
  %2186 = vmatmul.mubr.f32.gmra.mxu0 %v2120
  %v2187 = vpop.f32.mrf.mxu0
  %v2188 = vadd.f32 %v164, %v2187
  %v2189 = vpop.f32.mrf.mxu0
  %2190 = vdwg.mxu0
  %s2191 = scalar_lea.vmem %s5, 96
  %2192 = vst [vmem:[%s2191] sm:$0xff] %v2188
  %v2193 = vxor.u32 %v2120, 2147483648
  %v2194 = vmul.f32 %v2193, 1.442695
  %v2195 = vpow.pop %v2194
  %v2196 = vadd.f32 %v2195, 1.0
  %v2197 = vrcp.pop %v2196
  %v2198 = vmul.f32 1.0, %v2197
  %s2199 = scalar_lea.vmem %s0, 208
  %v2200 = vld [vmem:[%s2199] sm:$0xff]
  %v2201 = vld [vmem:[%s2199 + $0x8] sm:$0xff]
  %2202 = vmatprep.subr.mxu0 %v51
  %2203 = vmatpush1.msra.mxu0 %v50
  %2204 = vmatprep.subr.mxu0 %v49
  %2205 = vmatpush1.msra.mxu0 %v48
  %2206 = vmatprep.subr.mxu0 %v47
  %2207 = vmatpush1.msra.mxu0 %v46
  %2208 = vmatprep.subr.mxu0 %v45
  %2209 = vmatpush1.msra.mxu0 %v44
  %2210 = vmatprep.subr.mxu0 %v43
  %2211 = vmatpush1.msra.mxu0 %v42
  %2212 = vmatprep.subr.mxu0 %v41
  %2213 = vmatpush1.msra.mxu0 %v40
  %2214 = vmatprep.subr.mxu0 %v39
  %2215 = vmatpush1.msra.mxu0 %v38
  %2216 = vmatprep.subr.mxu0 %v37
  %2217 = vmatpush1.msra.mxu0 %v36
  %2218 = vmatprep.subr.mxu0 %v35
  %2219 = vmatpush1.msra.mxu0 %v34
  %2220 = vmatprep.subr.mxu0 %v33
  %2221 = vmatpush1.msra.mxu0 %v32
  %2222 = vmatprep.subr.mxu0 %v31
  %2223 = vmatpush1.msra.mxu0 %v30
  %2224 = vmatprep.subr.mxu0 %v29
  %2225 = vmatpush1.msra.mxu0 %v28
  %2226 = vmatprep.subr.mxu0 %v27
  %2227 = vmatpush1.msra.mxu0 %v26
  %2228 = vmatprep.subr.mxu0 %v25
  %2229 = vmatpush1.msra.mxu0 %v24
  %2230 = vmatprep.subr.mxu0 %v23
  %2231 = vmatpush1.msra.mxu0 %v22
  %2232 = vmatprep.subr.mxu0 %v21
  %2233 = vmatpush1.msra.mxu0 %v20
  %2234 = vmatprep.subr.mxu0 0.0
  %2235 = vmatpush2.msra.mxu0 0.0
  %2236 = vmatprep.subr.mxu0 0.0
  %2237 = vmatpush2.msra.mxu0 0.0
  %2238 = vmatprep.subr.mxu0 0.0
  %2239 = vmatpush2.msra.mxu0 0.0
  %2240 = vmatprep.subr.mxu0 0.0
  %2241 = vmatpush2.msra.mxu0 0.0
  %2242 = vmatprep.subr.mxu0 0.0
  %2243 = vmatpush2.msra.mxu0 0.0
  %2244 = vmatprep.subr.mxu0 0.0
  %2245 = vmatpush2.msra.mxu0 0.0
  %2246 = vmatprep.subr.mxu0 0.0
  %2247 = vmatpush2.msra.mxu0 0.0
  %2248 = vmatprep.subr.mxu0 0.0
  %2249 = vmatpush2.msra.mxu0 0.0
  %2250 = vmatprep.subr.mxu0 0.0
  %2251 = vmatpush2.msra.mxu0 0.0
  %2252 = vmatprep.subr.mxu0 0.0
  %2253 = vmatpush2.msra.mxu0 0.0
  %2254 = vmatprep.subr.mxu0 0.0
  %2255 = vmatpush2.msra.mxu0 0.0
  %2256 = vmatprep.subr.mxu0 0.0
  %2257 = vmatpush2.msra.mxu0 0.0
  %2258 = vmatprep.subr.mxu0 0.0
  %2259 = vmatpush2.msra.mxu0 0.0
  %2260 = vmatprep.subr.mxu0 0.0
  %2261 = vmatpush2.msra.mxu0 0.0
  %2262 = vmatprep.subr.mxu0 0.0
  %2263 = vmatpush2.msra.mxu0 0.0
  %2264 = vmatprep.subr.mxu0 0.0
  %2265 = vmatpush2.msra.mxu0 0.0
  %2266 = vmatprep.mubr.f32.mxu0 0.0
  %2267 = vmatmul.mubr.f32.gmra.mxu0 %v2198
  %v2268 = vpop.f32.mrf.mxu0
  %v2269 = vadd.f32 %v2200, %v2268
  %v2270 = vpop.f32.mrf.mxu0
  %v2271 = vadd.f32 %v2201, %v2270
  %2272 = vdwg.mxu0
  %v2273 = vxor.u32 %v2271, 2147483648
  %v2274 = vmul.f32 %v2273, 1.442695
  %v2275 = vpow.pop %v2274
  %v2276 = vadd.f32 %v2275, 1.0
  %v2277 = vrcp.pop %v2276
  %v2278 = vmul.f32 1.0, %v2277
  %v2279 = vmul.f32 %v2278, -0.995
  %v2280 = vadd.f32 %v2279, 1.0
  %v2281 = vsub.f32 1.0, %v2280
  %v2282 = vmul.f32 %v2281, %v2120
  %v2283 = vadd.f32 %v2282, %v2269
  %2284 = vmatprep.subr.mxu0 0.0
  %2285 = vmatpush1.msra.mxu0 %v67
  %2286 = vmatprep.subr.mxu0 0.0
  %2287 = vmatpush1.msra.mxu0 %v66
  %2288 = vmatprep.subr.mxu0 0.0
  %2289 = vmatpush1.msra.mxu0 %v65
  %2290 = vmatprep.subr.mxu0 0.0
  %2291 = vmatpush1.msra.mxu0 %v64
  %2292 = vmatprep.subr.mxu0 0.0
  %2293 = vmatpush1.msra.mxu0 %v63
  %2294 = vmatprep.subr.mxu0 0.0
  %2295 = vmatpush1.msra.mxu0 %v62
  %2296 = vmatprep.subr.mxu0 0.0
  %2297 = vmatpush1.msra.mxu0 %v61
  %2298 = vmatprep.subr.mxu0 0.0
  %2299 = vmatpush1.msra.mxu0 %v60
  %2300 = vmatprep.subr.mxu0 0.0
  %2301 = vmatpush1.msra.mxu0 %v59
  %2302 = vmatprep.subr.mxu0 0.0
  %2303 = vmatpush1.msra.mxu0 %v58
  %2304 = vmatprep.subr.mxu0 0.0
  %2305 = vmatpush1.msra.mxu0 %v57
  %2306 = vmatprep.subr.mxu0 0.0
  %2307 = vmatpush1.msra.mxu0 %v56
  %2308 = vmatprep.subr.mxu0 0.0
  %2309 = vmatpush1.msra.mxu0 %v55
  %2310 = vmatprep.subr.mxu0 0.0
  %2311 = vmatpush1.msra.mxu0 %v54
  %2312 = vmatprep.subr.mxu0 0.0
  %2313 = vmatpush1.msra.mxu0 %v53
  %2314 = vmatprep.subr.mxu0 0.0
  %2315 = vmatpush1.msra.mxu0 %v52
  %2316 = vmatprep.subr.mxu0 0.0
  %2317 = vmatpush2.msra.mxu0 0.0
  %2318 = vmatprep.subr.mxu0 0.0
  %2319 = vmatpush2.msra.mxu0 0.0
  %2320 = vmatprep.subr.mxu0 0.0
  %2321 = vmatpush2.msra.mxu0 0.0
  %2322 = vmatprep.subr.mxu0 0.0
  %2323 = vmatpush2.msra.mxu0 0.0
  %2324 = vmatprep.subr.mxu0 0.0
  %2325 = vmatpush2.msra.mxu0 0.0
  %2326 = vmatprep.subr.mxu0 0.0
  %2327 = vmatpush2.msra.mxu0 0.0
  %2328 = vmatprep.subr.mxu0 0.0
  %2329 = vmatpush2.msra.mxu0 0.0
  %2330 = vmatprep.subr.mxu0 0.0
  %2331 = vmatpush2.msra.mxu0 0.0
  %2332 = vmatprep.subr.mxu0 0.0
  %2333 = vmatpush2.msra.mxu0 0.0
  %2334 = vmatprep.subr.mxu0 0.0
  %2335 = vmatpush2.msra.mxu0 0.0
  %2336 = vmatprep.subr.mxu0 0.0
  %2337 = vmatpush2.msra.mxu0 0.0
  %2338 = vmatprep.subr.mxu0 0.0
  %2339 = vmatpush2.msra.mxu0 0.0
  %2340 = vmatprep.subr.mxu0 0.0
  %2341 = vmatpush2.msra.mxu0 0.0
  %2342 = vmatprep.subr.mxu0 0.0
  %2343 = vmatpush2.msra.mxu0 0.0
  %2344 = vmatprep.subr.mxu0 0.0
  %2345 = vmatpush2.msra.mxu0 0.0
  %2346 = vmatprep.subr.mxu0 0.0
  %2347 = vmatpush2.msra.mxu0 0.0
  %2348 = vmatprep.mubr.f32.mxu0 0.0
  %2349 = vmatmul.mubr.f32.gmra.mxu0 %v2283
  %v2350 = vpop.f32.mrf.mxu0
  %v2351 = vadd.f32 %v164, %v2350
  %v2352 = vpop.f32.mrf.mxu0
  %2353 = vdwg.mxu0
  %s2354 = scalar_lea.vmem %s5, 104
  %2355 = vst [vmem:[%s2354] sm:$0xff] %v2351
  %v2356 = vxor.u32 %v2283, 2147483648
  %v2357 = vmul.f32 %v2356, 1.442695
  %v2358 = vpow.pop %v2357
  %v2359 = vadd.f32 %v2358, 1.0
  %v2360 = vrcp.pop %v2359
  %v2361 = vmul.f32 1.0, %v2360
  %s2362 = scalar_lea.vmem %s0, 224
  %v2363 = vld [vmem:[%s2362] sm:$0xff]
  %v2364 = vld [vmem:[%s2362 + $0x8] sm:$0xff]
  %2365 = vmatprep.subr.mxu0 %v51
  %2366 = vmatpush1.msra.mxu0 %v50
  %2367 = vmatprep.subr.mxu0 %v49
  %2368 = vmatpush1.msra.mxu0 %v48
  %2369 = vmatprep.subr.mxu0 %v47
  %2370 = vmatpush1.msra.mxu0 %v46
  %2371 = vmatprep.subr.mxu0 %v45
  %2372 = vmatpush1.msra.mxu0 %v44
  %2373 = vmatprep.subr.mxu0 %v43
  %2374 = vmatpush1.msra.mxu0 %v42
  %2375 = vmatprep.subr.mxu0 %v41
  %2376 = vmatpush1.msra.mxu0 %v40
  %2377 = vmatprep.subr.mxu0 %v39
  %2378 = vmatpush1.msra.mxu0 %v38
  %2379 = vmatprep.subr.mxu0 %v37
  %2380 = vmatpush1.msra.mxu0 %v36
  %2381 = vmatprep.subr.mxu0 %v35
  %2382 = vmatpush1.msra.mxu0 %v34
  %2383 = vmatprep.subr.mxu0 %v33
  %2384 = vmatpush1.msra.mxu0 %v32
  %2385 = vmatprep.subr.mxu0 %v31
  %2386 = vmatpush1.msra.mxu0 %v30
  %2387 = vmatprep.subr.mxu0 %v29
  %2388 = vmatpush1.msra.mxu0 %v28
  %2389 = vmatprep.subr.mxu0 %v27
  %2390 = vmatpush1.msra.mxu0 %v26
  %2391 = vmatprep.subr.mxu0 %v25
  %2392 = vmatpush1.msra.mxu0 %v24
  %2393 = vmatprep.subr.mxu0 %v23
  %2394 = vmatpush1.msra.mxu0 %v22
  %2395 = vmatprep.subr.mxu0 %v21
  %2396 = vmatpush1.msra.mxu0 %v20
  %2397 = vmatprep.subr.mxu0 0.0
  %2398 = vmatpush2.msra.mxu0 0.0
  %2399 = vmatprep.subr.mxu0 0.0
  %2400 = vmatpush2.msra.mxu0 0.0
  %2401 = vmatprep.subr.mxu0 0.0
  %2402 = vmatpush2.msra.mxu0 0.0
  %2403 = vmatprep.subr.mxu0 0.0
  %2404 = vmatpush2.msra.mxu0 0.0
  %2405 = vmatprep.subr.mxu0 0.0
  %2406 = vmatpush2.msra.mxu0 0.0
  %2407 = vmatprep.subr.mxu0 0.0
  %2408 = vmatpush2.msra.mxu0 0.0
  %2409 = vmatprep.subr.mxu0 0.0
  %2410 = vmatpush2.msra.mxu0 0.0
  %2411 = vmatprep.subr.mxu0 0.0
  %2412 = vmatpush2.msra.mxu0 0.0
  %2413 = vmatprep.subr.mxu0 0.0
  %2414 = vmatpush2.msra.mxu0 0.0
  %2415 = vmatprep.subr.mxu0 0.0
  %2416 = vmatpush2.msra.mxu0 0.0
  %2417 = vmatprep.subr.mxu0 0.0
  %2418 = vmatpush2.msra.mxu0 0.0
  %2419 = vmatprep.subr.mxu0 0.0
  %2420 = vmatpush2.msra.mxu0 0.0
  %2421 = vmatprep.subr.mxu0 0.0
  %2422 = vmatpush2.msra.mxu0 0.0
  %2423 = vmatprep.subr.mxu0 0.0
  %2424 = vmatpush2.msra.mxu0 0.0
  %2425 = vmatprep.subr.mxu0 0.0
  %2426 = vmatpush2.msra.mxu0 0.0
  %2427 = vmatprep.subr.mxu0 0.0
  %2428 = vmatpush2.msra.mxu0 0.0
  %2429 = vmatprep.mubr.f32.mxu0 0.0
  %2430 = vmatmul.mubr.f32.gmra.mxu0 %v2361
  %v2431 = vpop.f32.mrf.mxu0
  %v2432 = vadd.f32 %v2363, %v2431
  %v2433 = vpop.f32.mrf.mxu0
  %v2434 = vadd.f32 %v2364, %v2433
  %2435 = vdwg.mxu0
  %v2436 = vxor.u32 %v2434, 2147483648
  %v2437 = vmul.f32 %v2436, 1.442695
  %v2438 = vpow.pop %v2437
  %v2439 = vadd.f32 %v2438, 1.0
  %v2440 = vrcp.pop %v2439
  %v2441 = vmul.f32 1.0, %v2440
  %v2442 = vmul.f32 %v2441, -0.995
  %v2443 = vadd.f32 %v2442, 1.0
  %v2444 = vsub.f32 1.0, %v2443
  %v2445 = vmul.f32 %v2444, %v2283
  %v2446 = vadd.f32 %v2445, %v2432
  %2447 = vmatprep.subr.mxu0 0.0
  %2448 = vmatpush1.msra.mxu0 %v67
  %2449 = vmatprep.subr.mxu0 0.0
  %2450 = vmatpush1.msra.mxu0 %v66
  %2451 = vmatprep.subr.mxu0 0.0
  %2452 = vmatpush1.msra.mxu0 %v65
  %2453 = vmatprep.subr.mxu0 0.0
  %2454 = vmatpush1.msra.mxu0 %v64
  %2455 = vmatprep.subr.mxu0 0.0
  %2456 = vmatpush1.msra.mxu0 %v63
  %2457 = vmatprep.subr.mxu0 0.0
  %2458 = vmatpush1.msra.mxu0 %v62
  %2459 = vmatprep.subr.mxu0 0.0
  %2460 = vmatpush1.msra.mxu0 %v61
  %2461 = vmatprep.subr.mxu0 0.0
  %2462 = vmatpush1.msra.mxu0 %v60
  %2463 = vmatprep.subr.mxu0 0.0
  %2464 = vmatpush1.msra.mxu0 %v59
  %2465 = vmatprep.subr.mxu0 0.0
  %2466 = vmatpush1.msra.mxu0 %v58
  %2467 = vmatprep.subr.mxu0 0.0
  %2468 = vmatpush1.msra.mxu0 %v57
  %2469 = vmatprep.subr.mxu0 0.0
  %2470 = vmatpush1.msra.mxu0 %v56
  %2471 = vmatprep.subr.mxu0 0.0
  %2472 = vmatpush1.msra.mxu0 %v55
  %2473 = vmatprep.subr.mxu0 0.0
  %2474 = vmatpush1.msra.mxu0 %v54
  %2475 = vmatprep.subr.mxu0 0.0
  %2476 = vmatpush1.msra.mxu0 %v53
  %2477 = vmatprep.subr.mxu0 0.0
  %2478 = vmatpush1.msra.mxu0 %v52
  %2479 = vmatprep.subr.mxu0 0.0
  %2480 = vmatpush2.msra.mxu0 0.0
  %2481 = vmatprep.subr.mxu0 0.0
  %2482 = vmatpush2.msra.mxu0 0.0
  %2483 = vmatprep.subr.mxu0 0.0
  %2484 = vmatpush2.msra.mxu0 0.0
  %2485 = vmatprep.subr.mxu0 0.0
  %2486 = vmatpush2.msra.mxu0 0.0
  %2487 = vmatprep.subr.mxu0 0.0
  %2488 = vmatpush2.msra.mxu0 0.0
  %2489 = vmatprep.subr.mxu0 0.0
  %2490 = vmatpush2.msra.mxu0 0.0
  %2491 = vmatprep.subr.mxu0 0.0
  %2492 = vmatpush2.msra.mxu0 0.0
  %2493 = vmatprep.subr.mxu0 0.0
  %2494 = vmatpush2.msra.mxu0 0.0
  %2495 = vmatprep.subr.mxu0 0.0
  %2496 = vmatpush2.msra.mxu0 0.0
  %2497 = vmatprep.subr.mxu0 0.0
  %2498 = vmatpush2.msra.mxu0 0.0
  %2499 = vmatprep.subr.mxu0 0.0
  %2500 = vmatpush2.msra.mxu0 0.0
  %2501 = vmatprep.subr.mxu0 0.0
  %2502 = vmatpush2.msra.mxu0 0.0
  %2503 = vmatprep.subr.mxu0 0.0
  %2504 = vmatpush2.msra.mxu0 0.0
  %2505 = vmatprep.subr.mxu0 0.0
  %2506 = vmatpush2.msra.mxu0 0.0
  %2507 = vmatprep.subr.mxu0 0.0
  %2508 = vmatpush2.msra.mxu0 0.0
  %2509 = vmatprep.subr.mxu0 0.0
  %2510 = vmatpush2.msra.mxu0 0.0
  %2511 = vmatprep.mubr.f32.mxu0 0.0
  %2512 = vmatmul.mubr.f32.gmra.mxu0 %v2446
  %v2513 = vpop.f32.mrf.mxu0
  %v2514 = vadd.f32 %v164, %v2513
  %v2515 = vpop.f32.mrf.mxu0
  %2516 = vdwg.mxu0
  %s2517 = scalar_lea.vmem %s5, 112
  %2518 = vst [vmem:[%s2517] sm:$0xff] %v2514
  %v2519 = vxor.u32 %v2446, 2147483648
  %v2520 = vmul.f32 %v2519, 1.442695
  %v2521 = vpow.pop %v2520
  %v2522 = vadd.f32 %v2521, 1.0
  %v2523 = vrcp.pop %v2522
  %v2524 = vmul.f32 1.0, %v2523
  %s2525 = scalar_lea.vmem %s0, 240
  %v2526 = vld [vmem:[%s2525] sm:$0xff]
  %v2527 = vld [vmem:[%s2525 + $0x8] sm:$0xff]
  %2528 = vmatprep.subr.mxu0 %v51
  %2529 = vmatpush1.msra.mxu0 %v50
  %2530 = vmatprep.subr.mxu0 %v49
  %2531 = vmatpush1.msra.mxu0 %v48
  %2532 = vmatprep.subr.mxu0 %v47
  %2533 = vmatpush1.msra.mxu0 %v46
  %2534 = vmatprep.subr.mxu0 %v45
  %2535 = vmatpush1.msra.mxu0 %v44
  %2536 = vmatprep.subr.mxu0 %v43
  %2537 = vmatpush1.msra.mxu0 %v42
  %2538 = vmatprep.subr.mxu0 %v41
  %2539 = vmatpush1.msra.mxu0 %v40
  %2540 = vmatprep.subr.mxu0 %v39
  %2541 = vmatpush1.msra.mxu0 %v38
  %2542 = vmatprep.subr.mxu0 %v37
  %2543 = vmatpush1.msra.mxu0 %v36
  %2544 = vmatprep.subr.mxu0 %v35
  %2545 = vmatpush1.msra.mxu0 %v34
  %2546 = vmatprep.subr.mxu0 %v33
  %2547 = vmatpush1.msra.mxu0 %v32
  %2548 = vmatprep.subr.mxu0 %v31
  %2549 = vmatpush1.msra.mxu0 %v30
  %2550 = vmatprep.subr.mxu0 %v29
  %2551 = vmatpush1.msra.mxu0 %v28
  %2552 = vmatprep.subr.mxu0 %v27
  %2553 = vmatpush1.msra.mxu0 %v26
  %2554 = vmatprep.subr.mxu0 %v25
  %2555 = vmatpush1.msra.mxu0 %v24
  %2556 = vmatprep.subr.mxu0 %v23
  %2557 = vmatpush1.msra.mxu0 %v22
  %2558 = vmatprep.subr.mxu0 %v21
  %2559 = vmatpush1.msra.mxu0 %v20
  %2560 = vmatprep.subr.mxu0 0.0
  %2561 = vmatpush2.msra.mxu0 0.0
  %2562 = vmatprep.subr.mxu0 0.0
  %2563 = vmatpush2.msra.mxu0 0.0
  %2564 = vmatprep.subr.mxu0 0.0
  %2565 = vmatpush2.msra.mxu0 0.0
  %2566 = vmatprep.subr.mxu0 0.0
  %2567 = vmatpush2.msra.mxu0 0.0
  %2568 = vmatprep.subr.mxu0 0.0
  %2569 = vmatpush2.msra.mxu0 0.0
  %2570 = vmatprep.subr.mxu0 0.0
  %2571 = vmatpush2.msra.mxu0 0.0
  %2572 = vmatprep.subr.mxu0 0.0
  %2573 = vmatpush2.msra.mxu0 0.0
  %2574 = vmatprep.subr.mxu0 0.0
  %2575 = vmatpush2.msra.mxu0 0.0
  %2576 = vmatprep.subr.mxu0 0.0
  %2577 = vmatpush2.msra.mxu0 0.0
  %2578 = vmatprep.subr.mxu0 0.0
  %2579 = vmatpush2.msra.mxu0 0.0
  %2580 = vmatprep.subr.mxu0 0.0
  %2581 = vmatpush2.msra.mxu0 0.0
  %2582 = vmatprep.subr.mxu0 0.0
  %2583 = vmatpush2.msra.mxu0 0.0
  %2584 = vmatprep.subr.mxu0 0.0
  %2585 = vmatpush2.msra.mxu0 0.0
  %2586 = vmatprep.subr.mxu0 0.0
  %2587 = vmatpush2.msra.mxu0 0.0
  %2588 = vmatprep.subr.mxu0 0.0
  %2589 = vmatpush2.msra.mxu0 0.0
  %2590 = vmatprep.subr.mxu0 0.0
  %2591 = vmatpush2.msra.mxu0 0.0
  %2592 = vmatprep.mubr.f32.mxu0 0.0
  %2593 = vmatmul.mubr.f32.gmra.mxu0 %v2524
  %v2594 = vpop.f32.mrf.mxu0
  %v2595 = vadd.f32 %v2526, %v2594
  %v2596 = vpop.f32.mrf.mxu0
  %v2597 = vadd.f32 %v2527, %v2596
  %2598 = vdwg.mxu0
  %v2599 = vxor.u32 %v2597, 2147483648
  %v2600 = vmul.f32 %v2599, 1.442695
  %v2601 = vpow.pop %v2600
  %v2602 = vadd.f32 %v2601, 1.0
  %v2603 = vrcp.pop %v2602
  %v2604 = vmul.f32 1.0, %v2603
  %v2605 = vmul.f32 %v2604, -0.995
  %v2606 = vadd.f32 %v2605, 1.0
  %v2607 = vsub.f32 1.0, %v2606
  %v2608 = vmul.f32 %v2607, %v2446
  %v2609 = vadd.f32 %v2608, %v2595
  %2610 = vmatprep.subr.mxu0 0.0
  %2611 = vmatpush1.msra.mxu0 %v67
  %2612 = vmatprep.subr.mxu0 0.0
  %2613 = vmatpush1.msra.mxu0 %v66
  %2614 = vmatprep.subr.mxu0 0.0
  %2615 = vmatpush1.msra.mxu0 %v65
  %2616 = vmatprep.subr.mxu0 0.0
  %2617 = vmatpush1.msra.mxu0 %v64
  %2618 = vmatprep.subr.mxu0 0.0
  %2619 = vmatpush1.msra.mxu0 %v63
  %2620 = vmatprep.subr.mxu0 0.0
  %2621 = vmatpush1.msra.mxu0 %v62
  %2622 = vmatprep.subr.mxu0 0.0
  %2623 = vmatpush1.msra.mxu0 %v61
  %2624 = vmatprep.subr.mxu0 0.0
  %2625 = vmatpush1.msra.mxu0 %v60
  %2626 = vmatprep.subr.mxu0 0.0
  %2627 = vmatpush1.msra.mxu0 %v59
  %2628 = vmatprep.subr.mxu0 0.0
  %2629 = vmatpush1.msra.mxu0 %v58
  %2630 = vmatprep.subr.mxu0 0.0
  %2631 = vmatpush1.msra.mxu0 %v57
  %2632 = vmatprep.subr.mxu0 0.0
  %2633 = vmatpush1.msra.mxu0 %v56
  %2634 = vmatprep.subr.mxu0 0.0
  %2635 = vmatpush1.msra.mxu0 %v55
  %2636 = vmatprep.subr.mxu0 0.0
  %2637 = vmatpush1.msra.mxu0 %v54
  %2638 = vmatprep.subr.mxu0 0.0
  %2639 = vmatpush1.msra.mxu0 %v53
  %2640 = vmatprep.subr.mxu0 0.0
  %2641 = vmatpush1.msra.mxu0 %v52
  %2642 = vmatprep.subr.mxu0 0.0
  %2643 = vmatpush2.msra.mxu0 0.0
  %2644 = vmatprep.subr.mxu0 0.0
  %2645 = vmatpush2.msra.mxu0 0.0
  %2646 = vmatprep.subr.mxu0 0.0
  %2647 = vmatpush2.msra.mxu0 0.0
  %2648 = vmatprep.subr.mxu0 0.0
  %2649 = vmatpush2.msra.mxu0 0.0
  %2650 = vmatprep.subr.mxu0 0.0
  %2651 = vmatpush2.msra.mxu0 0.0
  %2652 = vmatprep.subr.mxu0 0.0
  %2653 = vmatpush2.msra.mxu0 0.0
  %2654 = vmatprep.subr.mxu0 0.0
  %2655 = vmatpush2.msra.mxu0 0.0
  %2656 = vmatprep.subr.mxu0 0.0
  %2657 = vmatpush2.msra.mxu0 0.0
  %2658 = vmatprep.subr.mxu0 0.0
  %2659 = vmatpush2.msra.mxu0 0.0
  %2660 = vmatprep.subr.mxu0 0.0
  %2661 = vmatpush2.msra.mxu0 0.0
  %2662 = vmatprep.subr.mxu0 0.0
  %2663 = vmatpush2.msra.mxu0 0.0
  %2664 = vmatprep.subr.mxu0 0.0
  %2665 = vmatpush2.msra.mxu0 0.0
  %2666 = vmatprep.subr.mxu0 0.0
  %2667 = vmatpush2.msra.mxu0 0.0
  %2668 = vmatprep.subr.mxu0 0.0
  %2669 = vmatpush2.msra.mxu0 0.0
  %2670 = vmatprep.subr.mxu0 0.0
  %2671 = vmatpush2.msra.mxu0 0.0
  %2672 = vmatprep.subr.mxu0 0.0
  %2673 = vmatpush2.msra.mxu0 0.0
  %2674 = vmatprep.mubr.f32.mxu0 0.0
  %2675 = vmatmul.mubr.f32.gmra.mxu0 %v2609
  %v2676 = vpop.f32.mrf.mxu0
  %v2677 = vadd.f32 %v164, %v2676
  %v2678 = vpop.f32.mrf.mxu0
  %2679 = vdwg.mxu0
  %s2680 = scalar_lea.vmem %s5, 120
  %2681 = vst [vmem:[%s2680] sm:$0xff] %v2677
  // Predicated region
  $region22: #{a2c_rollout.1} parent=0 // pred_check
    _
  $region23: #{a2c_rollout.1} parent=0 // pred_check_branch
    %2683 = sbr.rel (0) target = $region25
  $region24: #{a2c_rollout.1} parent=0 // pred_region
    _
  $region25: #{a2c_rollout.1} parent=0 // pred_fallthru
    _
  // Predicated region
  $region26: #{a2c_rollout.1} parent=0 // pred_check
    _
  $region27: #{a2c_rollout.1} parent=0 // pred_check_branch
    %2685 = sbr.rel (0) target = $region29
  $region28: #{a2c_rollout.1} parent=0 // pred_region
    _
  $region29: #{a2c_rollout.1} parent=0 // pred_fallthru
    _

</llo_original>
